<compile_context>
chip_gen: v5e
topology: v5e:2x2
jax: 0.10.0
libtpu: 0.0.40
codegen_flags: <defaults>
</compile_context>

<pallas_src>
import jax
import jax.numpy as jnp
from jax import lax
from jax.experimental import pallas as pl
from jax.experimental.pallas import tpu as pltpu

INPUT_SIZE = 6
HIDDEN_SIZE = 64
OUTPUT_SIZE = 2
NUM_LAYERS = 3


# ---------------------------------------------------------------------------
# Fused kernel
# ---------------------------------------------------------------------------
def _make_fused_kernel(T, Bp, H, unroll):
    H2, H6, H8 = 2 * H, 6 * H, 8 * H
    f32 = jnp.float32

    def sigmoid(x):
        # Exact identity sigmoid(x) = 0.5*(tanh(x/2)+1): one EUP op + cheap VPU ops,
        # avoids any full-precision vector divide.
        return 0.5 * jnp.tanh(0.5 * x) + 0.5

    def cell(gates, c_prev):
        # gate cols: [i_f,i_r | f_f,f_r | o_f,o_r | g_f,g_r]; each slab = one vreg.
        s = sigmoid(gates[:, :H6])
        i = s[:, 0:H2]
        f = s[:, H2:2 * H2]
        o = s[:, 2 * H2:3 * H2]
        g = jnp.tanh(gates[:, H6:])
        c = f * c_prev + i * g
        h = o * jnp.tanh(c)
        return h, c

    def kernel(x_ref,
               wih0, whh0, b0,
               wih1, whh1, b1,
               wih2, whh2, b2,
               fcw, fcb,
               out_ref,
               xproj, sout):
        zeros2 = jnp.zeros((Bp, H2), f32)

        # Constant column mask selecting the forward-direction gate columns
        # (i_f, f_f, o_f, g_f positions). Built once, hoisted out of all loops.
        col = lax.broadcasted_iota(jnp.int32, (Bp, H8), 1)
        fwd_mask = (col % H2) < H

        def gather_xp(t):
            # Forward gates use the projection at time t, reverse gates at time T-1-t.
            rf = pl.multiple_of(t * Bp, Bp)
            rr = pl.multiple_of((T - 1 - t) * Bp, Bp)
            xp = jnp.where(fwd_mask, xproj[pl.ds(rf, Bp), :], xproj[pl.ds(rr, Bp), :])
            return xp, rf, rr

        def bidir_layer(whh_ref, store):
            whh = whh_ref[...]

            def emit(rf, rr, h_cat):
                sout[pl.ds(rf, Bp), 0:H] = h_cat[:, 0:H]      # fwd output at time t
                sout[pl.ds(rr, Bp), H:H2] = h_cat[:, H:H2]    # rev output at time T-1-t

            # t = 0: both states are zero -> skip the recurrence matmul entirely.
            xp0, rf0, rr0 = gather_xp(0)
            h0, c0 = cell(xp0, zeros2)
            if store:
                emit(rf0, rr0, h0)

            def step(t, carry):
                h, c = carry
                xp, rf, rr = gather_xp(t)
                g = xp + jnp.dot(h, whh, preferred_element_type=f32)
                h, c = cell(g, c)
                if store:
                    emit(rf, rr, h)
                return h, c

            h_last, _ = lax.fori_loop(1, T, step, (h0, c0), unroll=unroll)
            # h_last[:, 0:H]  = forward output at time T-1
            # h0[:,    H:H2]  = reverse output at time T-1 (its first scan step)
            return h_last, h0

        # ---- layer 0: one (T*Bp, D_in) @ (D_in, 8H) projection ----
        xproj[...] = jnp.dot(x_ref[...], wih0[...], preferred_element_type=f32) + b0[...]
        bidir_layer(whh0, store=True)

        # ---- layer 1: one (T*Bp, 2H) @ (2H, 8H) projection from lane-dense sout ----
        xproj[...] = jnp.dot(sout[...], wih1[...], preferred_element_type=f32) + b1[...]
        # sout may now be overwritten: layer-0 outputs are fully consumed into xproj.
        bidir_layer(whh1, store=True)

        # ---- layer 2 (final): only h_fwd(T-1) and h_rev(T-1) feed the FC head ----
        xproj[...] = jnp.dot(sout[...], wih2[...], preferred_element_type=f32) + b2[...]
        h_last, h_first = bidir_layer(whh2, store=False)

        # ---- fused FC head: out = [h_fwd(T-1), h_rev(T-1)] @ fc_w^T + fc_b ----
        h_cat = jnp.concatenate([h_last[:, 0:H], h_first[:, H:H2]], axis=1)  # (Bp, 2H)
        out = jnp.dot(h_cat, fcw[...], preferred_element_type=f32) + fcb[...]
        out_ref[...] = out.astype(out_ref.dtype)

    return kernel


# ---------------------------------------------------------------------------
# Parameters (PyTorch-style init) and host-side packing into the fused layout
# ---------------------------------------------------------------------------
def init_params(key):
    H = HIDDEN_SIZE
    params = {"lstm": []}
    k = 1.0 / (H ** 0.5)
    for layer in range(NUM_LAYERS):
        d_in = INPUT_SIZE if layer == 0 else 2 * H
        dirs = []
        for _ in range(2):  # forward, reverse
            key, k1, k2, k3, k4 = jax.random.split(key, 5)
            dirs.append({
                "w_ih": jax.random.uniform(k1, (4 * H, d_in), jnp.float32, -k, k),
                "w_hh": jax.random.uniform(k2, (4 * H, H), jnp.float32, -k, k),
                "b_ih": jax.random.uniform(k3, (4 * H,), jnp.float32, -k, k),
                "b_hh": jax.random.uniform(k4, (4 * H,), jnp.float32, -k, k),
            })
        params["lstm"].append(dirs)
    fc_in = 2 * H
    kf = 1.0 / (fc_in ** 0.5)
    key, k1, k2 = jax.random.split(key, 3)
    params["fc_w"] = jax.random.uniform(k1, (OUTPUT_SIZE, fc_in), jnp.float32, -kf, kf)
    params["fc_b"] = jax.random.uniform(k2, (OUTPUT_SIZE,), jnp.float32, -kf, kf)
    return params


def pack_params(params):
    """Build merged/interleaved kernel weights: columns [i_f,i_r,f_f,f_r,o_f,o_r,g_f,g_r]."""
    H = HIDDEN_SIZE

    def gate_rows(w):
        # PyTorch row order [i, f, g, o] -> (i, f, o, g)
        return w[0:H], w[H:2 * H], w[3 * H:4 * H], w[2 * H:3 * H]

    packed = []
    for dirs in params["lstm"]:
        pf, pr = dirs
        i_f, f_f, o_f, g_f = gate_rows(pf["w_ih"])
        i_r, f_r, o_r, g_r = gate_rows(pr["w_ih"])
        wih_cat = jnp.concatenate(
            [i_f, i_r, f_f, f_r, o_f, o_r, g_f, g_r], axis=0).T       # (D_in, 8H)

        hi_f, hf_f, ho_f, hg_f = gate_rows(pf["w_hh"])                 # each (H, H)
        hi_r, hf_r, ho_r, hg_r = gate_rows(pr["w_hh"])
        Z = jnp.zeros((H, H), jnp.float32)
        top = jnp.concatenate([hi_f.T, Z, hf_f.T, Z, ho_f.T, Z, hg_f.T, Z], axis=1)
        bot = jnp.concatenate([Z, hi_r.T, Z, hf_r.T, Z, ho_r.T, Z, hg_r.T], axis=1)
        whh_blk = jnp.concatenate([top, bot], axis=0)                  # (2H, 8H) blockdiag

        bi_f, bf_f, bo_f, bg_f = gate_rows(pf["b_ih"] + pf["b_hh"])
        bi_r, bf_r, bo_r, bg_r = gate_rows(pr["b_ih"] + pr["b_hh"])
        b_cat = jnp.concatenate(
            [bi_f, bi_r, bf_f, bf_r, bo_f, bo_r, bg_f, bg_r]).reshape(1, 8 * H)

        packed += [wih_cat, whh_blk, b_cat]

    packed += [params["fc_w"].T, params["fc_b"].reshape(1, OUTPUT_SIZE)]
    return tuple(packed)


# ---------------------------------------------------------------------------
# Forward pass == SolaceLSTM.forward (eval mode: dropout is identity)
# ---------------------------------------------------------------------------
@jax.jit
def solace_lstm_forward(x_btd, packed):
    """x_btd: (B, T, input_size) batch_first, like the PyTorch module."""
    B, T, D = x_btd.shape
    H = HIDDEN_SIZE
    Bp = max(8, ((B + 7) // 8) * 8)                        # pad batch to f32 sublane width

    x = jnp.transpose(x_btd, (1, 0, 2)).astype(jnp.float32)   # (T, B, D)
    x = jnp.pad(x, ((0, 0), (0, Bp - B), (0, 0)))              # (T, Bp, D)
    x_flat = x.reshape(T * Bp, D)

    args = [x_flat] + list(packed)
    in_specs = [pl.BlockSpec(a.shape, lambda i: (0, 0)) for a in args]

    # Full unroll only for short sequences; partial unroll keeps code size bounded.
    unroll = True if T <= 16 else 8

    # Explicit VMEM budget (scratch + double-buffered inputs), clamped to a safe range.
    scratch_bytes = 4 * T * Bp * (8 * H + 2 * H)
    arg_bytes = sum(int(a.size) * 4 for a in args)
    est = scratch_bytes + 2 * arg_bytes + 2 * Bp * OUTPUT_SIZE * 4
    vmem_limit = int(min(64 * 1024 * 1024, max(32 * 1024 * 1024, 2 * est)))

    kernel = _make_fused_kernel(T, Bp, H, unroll)
    out = pl.pallas_call(
        kernel,
        out_shape=jax.ShapeDtypeStruct((Bp, OUTPUT_SIZE), jnp.float32),
        grid_spec=pltpu.PrefetchScalarGridSpec(
            num_scalar_prefetch=0,
            grid=(1,),
            in_specs=in_specs,
            out_specs=pl.BlockSpec((Bp, OUTPUT_SIZE), lambda i: (0, 0)),
            scratch_shapes=[
                pltpu.VMEM((T * Bp, 8 * H), jnp.float32),   # fused input projection
                pltpu.VMEM((T * Bp, 2 * H), jnp.float32),   # layer outputs (reused across layers)
            ],
        ),
        compiler_params=pltpu.CompilerParams(
            dimension_semantics=("arbitrary",),
            vmem_limit_bytes=vmem_limit),
    )(*args)
    return out[:B]


# ---------------------------------------------------------------------------
# Pure-JAX reference (raw PyTorch-layout params) for a correctness check
# ---------------------------------------------------------------------------
def _reference_forward(x_btd, params):
    H = HIDDEN_SIZE
    x = jnp.transpose(x_btd, (1, 0, 2)).astype(jnp.float32)   # (T, B, D)

    def run_dir(seq, p, reverse):
        w_ih, w_hh = p["w_ih"], p["w_hh"]
        b = (p["b_ih"] + p["b_hh"]).reshape(1, -1)
        xs = seq[::-1] if reverse else seq

        def step(carry, x_t):
            h, c = carry
            g = x_t @ w_ih.T + h @ w_hh.T + b
            i = jax.nn.sigmoid(g[:, 0:H])
            f = jax.nn.sigmoid(g[:, H:2 * H])
            gg = jnp.tanh(g[:, 2 * H:3 * H])
            o = jax.nn.sigmoid(g[:, 3 * H:4 * H])
            c = f * c + i * gg
            h = o * jnp.tanh(c)
            return (h, c), h

        Bsz = seq.shape[1]
        h0 = jnp.zeros((Bsz, H), jnp.float32)
        _, hs = lax.scan(step, (h0, h0), xs)
        return hs[::-1] if reverse else hs

    h = x
    for dirs in params["lstm"]:
        h = jnp.concatenate([run_dir(h, dirs[0], False), run_dir(h, dirs[1], True)], axis=-1)
    last = h[-1]                                               # == lstm_out[:, -1, :]
    return last @ params["fc_w"].T + params["fc_b"].reshape(1, -1)


if __name__ == "__main__":
    key = jax.random.PRNGKey(0)
    pkey, xkey = jax.random.split(key)
    params = init_params(pkey)
    packed = pack_params(params)

    B, T = 2, 8
    x = jax.random.normal(xkey, (B, T, INPUT_SIZE), dtype=jnp.float32)

    out = solace_lstm_forward(x, packed)
    jax.block_until_ready(out)
    assert out.shape == (B, OUTPUT_SIZE)

    ref = _reference_forward(x, params)
    err = float(jnp.max(jnp.abs(out - ref)))
    assert err < 1e-3, f"mismatch vs pure-JAX reference: {err}"

    print("KERNEL_OK")
</pallas_src>

<mosaic_0001>
module attributes {stable_mosaic.version = 11 : i64} {
  func.func @kernel(%arg0: i32, %arg1: memref<64x6xf32, #tpu.memory_space<vmem>>, %arg2: memref<6x512xf32, #tpu.memory_space<vmem>>, %arg3: memref<128x512xf32, #tpu.memory_space<vmem>>, %arg4: memref<1x512xf32, #tpu.memory_space<vmem>>, %arg5: memref<128x512xf32, #tpu.memory_space<vmem>>, %arg6: memref<128x512xf32, #tpu.memory_space<vmem>>, %arg7: memref<1x512xf32, #tpu.memory_space<vmem>>, %arg8: memref<128x512xf32, #tpu.memory_space<vmem>>, %arg9: memref<128x512xf32, #tpu.memory_space<vmem>>, %arg10: memref<1x512xf32, #tpu.memory_space<vmem>>, %arg11: memref<128x2xf32, #tpu.memory_space<vmem>>, %arg12: memref<1x2xf32, #tpu.memory_space<vmem>>, %arg13: memref<8x2xf32, #tpu.memory_space<vmem>>, %arg14: memref<64x512xf32, #tpu.memory_space<vmem>>, %arg15: memref<64x128xf32, #tpu.memory_space<vmem>>) attributes {dimension_semantics = [#tpu.dimension_semantics<arbitrary>], iteration_bounds = array<i64: 1>, scalar_prefetch = 0 : i64, scratch_operands = 2 : i64, tpu.core_type = #tpu.core_type<tc>, window_params = [{pipeline_mode = #tpu.pipeline_mode<synchronous>, transform_indices = @transform_0, window_bounds = array<i64: 64, 6>}, {pipeline_mode = #tpu.pipeline_mode<synchronous>, transform_indices = @transform_1, window_bounds = array<i64: 6, 512>}, {pipeline_mode = #tpu.pipeline_mode<synchronous>, transform_indices = @transform_2, window_bounds = array<i64: 128, 512>}, {pipeline_mode = #tpu.pipeline_mode<synchronous>, transform_indices = @transform_3, window_bounds = array<i64: 1, 512>}, {pipeline_mode = #tpu.pipeline_mode<synchronous>, transform_indices = @transform_4, window_bounds = array<i64: 128, 512>}, {pipeline_mode = #tpu.pipeline_mode<synchronous>, transform_indices = @transform_5, window_bounds = array<i64: 128, 512>}, {pipeline_mode = #tpu.pipeline_mode<synchronous>, transform_indices = @transform_6, window_bounds = array<i64: 1, 512>}, {pipeline_mode = #tpu.pipeline_mode<synchronous>, transform_indices = @transform_7, window_bounds = array<i64: 128, 512>}, {pipeline_mode = #tpu.pipeline_mode<synchronous>, transform_indices = @transform_8, window_bounds = array<i64: 128, 512>}, {pipeline_mode = #tpu.pipeline_mode<synchronous>, transform_indices = @transform_9, window_bounds = array<i64: 1, 512>}, {pipeline_mode = #tpu.pipeline_mode<synchronous>, transform_indices = @transform_10, window_bounds = array<i64: 128, 2>}, {pipeline_mode = #tpu.pipeline_mode<synchronous>, transform_indices = @transform_11, window_bounds = array<i64: 1, 2>}, {pipeline_mode = #tpu.pipeline_mode<synchronous>, transform_indices = @transform_12, window_bounds = array<i64: 8, 2>}]} {
    %cst = arith.constant 0.000000e+00 : f32
    %0 = vector.broadcast %cst : f32 to vector<8x128xf32>
    %1 = tpu.iota {dimensions = array<i32: 1>} : vector<8x512xi32>
    %c128_i32 = arith.constant 128 : i32
    %c0_i32 = arith.constant 0 : i32
    %2 = arith.cmpi eq, %c128_i32, %c0_i32 : i32
    %c1_i32 = arith.constant 1 : i32
    %3 = arith.select %2, %c1_i32, %c128_i32 : i32
    %4 = vector.broadcast %3 : i32 to vector<8x512xi32>
    %5 = arith.remsi %1, %4 : vector<8x512xi32>
    %c0_i32_0 = arith.constant 0 : i32
    %6 = vector.broadcast %c0_i32_0 : i32 to vector<8x512xi32>
    %7 = arith.cmpi ne, %5, %6 : vector<8x512xi32>
    %c0_i32_1 = arith.constant 0 : i32
    %8 = vector.broadcast %c0_i32_1 : i32 to vector<8x512xi32>
    %9 = arith.cmpi slt, %5, %8 : vector<8x512xi32>
    %c0_i32_2 = arith.constant 0 : i32
    %10 = arith.cmpi slt, %3, %c0_i32_2 : i32
    %11 = vector.broadcast %10 : i1 to vector<8x512xi1>
    %12 = vector.broadcast %11 : vector<8x512xi1> to vector<8x512xi1>
    %13 = arith.xori %9, %12 : vector<8x512xi1>
    %14 = arith.andi %13, %7 : vector<8x512xi1>
    %15 = vector.broadcast %3 : i32 to vector<8x512xi32>
    %16 = arith.addi %5, %15 : vector<8x512xi32>
    %17 = arith.select %14, %16, %5 : vector<8x512xi1>, vector<8x512xi32>
    %c64_i32 = arith.constant 64 : i32
    %18 = vector.broadcast %c64_i32 : i32 to vector<8x512xi32>
    %19 = arith.cmpi slt, %17, %18 : vector<8x512xi32>
    %c0 = arith.constant 0 : index
    %c0_3 = arith.constant 0 : index
    %20 = vector.load %arg1[%c0, %c0_3] : memref<64x6xf32, #tpu.memory_space<vmem>>, vector<64x6xf32>
    %c0_4 = arith.constant 0 : index
    %c0_5 = arith.constant 0 : index
    %21 = vector.load %arg2[%c0_4, %c0_5] : memref<6x512xf32, #tpu.memory_space<vmem>>, vector<6x512xf32>
    %cst_6 = arith.constant dense<0.000000e+00> : vector<64x512xf32>
    %22 = tpu.matmul %20, %21, %cst_6 {dimension_numbers = #tpu.dot_dimension_numbers<[1], [0], [0], [1], [0, 0, 1, 1], [], []>} : vector<64x6xf32>, vector<6x512xf32>, vector<64x512xf32> -> vector<64x512xf32>
    %c0_7 = arith.constant 0 : index
    %c0_8 = arith.constant 0 : index
    %23 = vector.load %arg4[%c0_7, %c0_8] : memref<1x512xf32, #tpu.memory_space<vmem>>, vector<1x512xf32>
    %24 = vector.broadcast %23 : vector<1x512xf32> to vector<64x512xf32>
    %25 = arith.addf %22, %24 : vector<64x512xf32>
    %c0_9 = arith.constant 0 : index
    %c0_10 = arith.constant 0 : index
    %26 = vector.load %arg14[%c0_9, %c0_10] : memref<64x512xf32, #tpu.memory_space<vmem>>, vector<64x512xf32>
    tpu.vector_store %arg14[%c0_9, %c0_10], %25 {strides = array<i32>} : memref<64x512xf32, #tpu.memory_space<vmem>>, vector<64x512xf32>,
    %c0_11 = arith.constant 0 : index
    %c0_12 = arith.constant 0 : index
    %27 = vector.load %arg3[%c0_11, %c0_12] : memref<128x512xf32, #tpu.memory_space<vmem>>, vector<128x512xf32>
    %c0_i32_13 = arith.constant 0 : i32
    %28 = tpu.assume_multiple %c0_i32_13, 8 : i32
    %c56_i32 = arith.constant 56 : i32
    %29 = tpu.assume_multiple %c56_i32, 8 : i32
    %30 = arith.index_cast %28 : i32 to index
    %c0_14 = arith.constant 0 : index
    %31 = vector.load %arg14[%30, %c0_14] : memref<64x512xf32, #tpu.memory_space<vmem>>, vector<8x512xf32>
    %32 = arith.index_cast %29 : i32 to index
    %c0_15 = arith.constant 0 : index
    %33 = vector.load %arg14[%32, %c0_15] : memref<64x512xf32, #tpu.memory_space<vmem>>, vector<8x512xf32>
    %34 = arith.select %19, %31, %33 : vector<8x512xi1>, vector<8x512xf32>
    %35 = vector.extract_strided_slice %34 {offsets = [0, 0], sizes = [8, 384], strides = [1, 1]} : vector<8x512xf32> to vector<8x384xf32>
    %cst_16 = arith.constant 5.000000e-01 : f32
    %36 = vector.broadcast %cst_16 : f32 to vector<8x384xf32>
    %37 = arith.mulf %36, %35 : vector<8x384xf32>
    %38 = math.tanh %37 : vector<8x384xf32>
    %cst_17 = arith.constant 5.000000e-01 : f32
    %39 = vector.broadcast %cst_17 : f32 to vector<8x384xf32>
    %40 = arith.mulf %39, %38 : vector<8x384xf32>
    %cst_18 = arith.constant 5.000000e-01 : f32
    %41 = vector.broadcast %cst_18 : f32 to vector<8x384xf32>
    %42 = arith.addf %40, %41 : vector<8x384xf32>
    %43 = vector.extract_strided_slice %42 {offsets = [0, 0], sizes = [8, 128], strides = [1, 1]} : vector<8x384xf32> to vector<8x128xf32>
    %44 = vector.extract_strided_slice %42 {offsets = [0, 128], sizes = [8, 128], strides = [1, 1]} : vector<8x384xf32> to vector<8x128xf32>
    %45 = vector.extract_strided_slice %42 {offsets = [0, 256], sizes = [8, 128], strides = [1, 1]} : vector<8x384xf32> to vector<8x128xf32>
    %46 = vector.extract_strided_slice %34 {offsets = [0, 384], sizes = [8, 128], strides = [1, 1]} : vector<8x512xf32> to vector<8x128xf32>
    %47 = math.tanh %46 : vector<8x128xf32>
    %48 = arith.mulf %44, %0 : vector<8x128xf32>
    %49 = arith.mulf %43, %47 : vector<8x128xf32>
    %50 = arith.addf %48, %49 : vector<8x128xf32>
    %51 = math.tanh %50 : vector<8x128xf32>
    %52 = arith.mulf %45, %51 : vector<8x128xf32>
    %53 = vector.extract_strided_slice %52 {offsets = [0, 0], sizes = [8, 64], strides = [1, 1]} : vector<8x128xf32> to vector<8x64xf32>
    %54 = arith.index_cast %28 : i32 to index
    %c0_19 = arith.constant 0 : index
    %55 = vector.load %arg15[%54, %c0_19] : memref<64x128xf32, #tpu.memory_space<vmem>>, vector<8x64xf32>
    tpu.vector_store %arg15[%54, %c0_19], %53 {strides = array<i32>} : memref<64x128xf32, #tpu.memory_space<vmem>>, vector<8x64xf32>,
    %56 = vector.extract_strided_slice %52 {offsets = [0, 64], sizes = [8, 64], strides = [1, 1]} : vector<8x128xf32> to vector<8x64xf32>
    %57 = arith.index_cast %29 : i32 to index
    %c64 = arith.constant 64 : index
    %58 = vector.load %arg15[%57, %c64] : memref<64x128xf32, #tpu.memory_space<vmem>>, vector<8x64xf32>
    tpu.vector_store %arg15[%57, %c64], %56 {strides = array<i32>} : memref<64x128xf32, #tpu.memory_space<vmem>>, vector<8x64xf32>,
    %c1_i32_20 = arith.constant 1 : i32
    %c8_i32 = arith.constant 8 : i32
    %59 = arith.muli %c1_i32_20, %c8_i32 : i32
    %60 = tpu.assume_multiple %59, 8 : i32
    %c7_i32 = arith.constant 7 : i32
    %61 = arith.subi %c7_i32, %c1_i32_20 : i32
    %c8_i32_21 = arith.constant 8 : i32
    %62 = arith.muli %61, %c8_i32_21 : i32
    %63 = tpu.assume_multiple %62, 8 : i32
    %64 = arith.index_cast %60 : i32 to index
    %c0_22 = arith.constant 0 : index
    %65 = vector.load %arg14[%64, %c0_22] : memref<64x512xf32, #tpu.memory_space<vmem>>, vector<8x512xf32>
    %66 = arith.index_cast %63 : i32 to index
    %c0_23 = arith.constant 0 : index
    %67 = vector.load %arg14[%66, %c0_23] : memref<64x512xf32, #tpu.memory_space<vmem>>, vector<8x512xf32>
    %68 = arith.select %19, %65, %67 : vector<8x512xi1>, vector<8x512xf32>
    %cst_24 = arith.constant dense<0.000000e+00> : vector<8x512xf32>
    %69 = tpu.matmul %52, %27, %cst_24 {dimension_numbers = #tpu.dot_dimension_numbers<[1], [0], [0], [1], [0, 0, 1, 1], [], []>} : vector<8x128xf32>, vector<128x512xf32>, vector<8x512xf32> -> vector<8x512xf32>
    %70 = arith.addf %68, %69 : vector<8x512xf32>
    %71 = vector.extract_strided_slice %70 {offsets = [0, 0], sizes = [8, 384], strides = [1, 1]} : vector<8x512xf32> to vector<8x384xf32>
    %cst_25 = arith.constant 5.000000e-01 : f32
    %72 = vector.broadcast %cst_25 : f32 to vector<8x384xf32>
    %73 = arith.mulf %72, %71 : vector<8x384xf32>
    %74 = math.tanh %73 : vector<8x384xf32>
    %cst_26 = arith.constant 5.000000e-01 : f32
    %75 = vector.broadcast %cst_26 : f32 to vector<8x384xf32>
    %76 = arith.mulf %75, %74 : vector<8x384xf32>
    %cst_27 = arith.constant 5.000000e-01 : f32
    %77 = vector.broadcast %cst_27 : f32 to vector<8x384xf32>
    %78 = arith.addf %76, %77 : vector<8x384xf32>
    %79 = vector.extract_strided_slice %78 {offsets = [0, 0], sizes = [8, 128], strides = [1, 1]} : vector<8x384xf32> to vector<8x128xf32>
    %80 = vector.extract_strided_slice %78 {offsets = [0, 128], sizes = [8, 128], strides = [1, 1]} : vector<8x384xf32> to vector<8x128xf32>
    %81 = vector.extract_strided_slice %78 {offsets = [0, 256], sizes = [8, 128], strides = [1, 1]} : vector<8x384xf32> to vector<8x128xf32>
    %82 = vector.extract_strided_slice %70 {offsets = [0, 384], sizes = [8, 128], strides = [1, 1]} : vector<8x512xf32> to vector<8x128xf32>
    %83 = math.tanh %82 : vector<8x128xf32>
    %84 = arith.mulf %80, %50 : vector<8x128xf32>
    %85 = arith.mulf %79, %83 : vector<8x128xf32>
    %86 = arith.addf %84, %85 : vector<8x128xf32>
    %87 = math.tanh %86 : vector<8x128xf32>
    %88 = arith.mulf %81, %87 : vector<8x128xf32>
    %89 = vector.extract_strided_slice %88 {offsets = [0, 0], sizes = [8, 64], strides = [1, 1]} : vector<8x128xf32> to vector<8x64xf32>
    %90 = arith.index_cast %60 : i32 to index
    %c0_28 = arith.constant 0 : index
    %91 = vector.load %arg15[%90, %c0_28] : memref<64x128xf32, #tpu.memory_space<vmem>>, vector<8x64xf32>
    tpu.vector_store %arg15[%90, %c0_28], %89 {strides = array<i32>} : memref<64x128xf32, #tpu.memory_space<vmem>>, vector<8x64xf32>,
    %92 = vector.extract_strided_slice %88 {offsets = [0, 64], sizes = [8, 64], strides = [1, 1]} : vector<8x128xf32> to vector<8x64xf32>
    %93 = arith.index_cast %63 : i32 to index
    %c64_29 = arith.constant 64 : index
    %94 = vector.load %arg15[%93, %c64_29] : memref<64x128xf32, #tpu.memory_space<vmem>>, vector<8x64xf32>
    tpu.vector_store %arg15[%93, %c64_29], %92 {strides = array<i32>} : memref<64x128xf32, #tpu.memory_space<vmem>>, vector<8x64xf32>,
    %c2_i32 = arith.constant 2 : i32
    %c8_i32_30 = arith.constant 8 : i32
    %95 = arith.muli %c2_i32, %c8_i32_30 : i32
    %96 = tpu.assume_multiple %95, 8 : i32
    %c7_i32_31 = arith.constant 7 : i32
    %97 = arith.subi %c7_i32_31, %c2_i32 : i32
    %c8_i32_32 = arith.constant 8 : i32
    %98 = arith.muli %97, %c8_i32_32 : i32
    %99 = tpu.assume_multiple %98, 8 : i32
    %100 = arith.index_cast %96 : i32 to index
    %c0_33 = arith.constant 0 : index
    %101 = vector.load %arg14[%100, %c0_33] : memref<64x512xf32, #tpu.memory_space<vmem>>, vector<8x512xf32>
    %102 = arith.index_cast %99 : i32 to index
    %c0_34 = arith.constant 0 : index
    %103 = vector.load %arg14[%102, %c0_34] : memref<64x512xf32, #tpu.memory_space<vmem>>, vector<8x512xf32>
    %104 = arith.select %19, %101, %103 : vector<8x512xi1>, vector<8x512xf32>
    %cst_35 = arith.constant dense<0.000000e+00> : vector<8x512xf32>
    %105 = tpu.matmul %88, %27, %cst_35 {dimension_numbers = #tpu.dot_dimension_numbers<[1], [0], [0], [1], [0, 0, 1, 1], [], []>} : vector<8x128xf32>, vector<128x512xf32>, vector<8x512xf32> -> vector<8x512xf32>
    %106 = arith.addf %104, %105 : vector<8x512xf32>
    %107 = vector.extract_strided_slice %106 {offsets = [0, 0], sizes = [8, 384], strides = [1, 1]} : vector<8x512xf32> to vector<8x384xf32>
    %cst_36 = arith.constant 5.000000e-01 : f32
    %108 = vector.broadcast %cst_36 : f32 to vector<8x384xf32>
    %109 = arith.mulf %108, %107 : vector<8x384xf32>
    %110 = math.tanh %109 : vector<8x384xf32>
    %cst_37 = arith.constant 5.000000e-01 : f32
    %111 = vector.broadcast %cst_37 : f32 to vector<8x384xf32>
    %112 = arith.mulf %111, %110 : vector<8x384xf32>
    %cst_38 = arith.constant 5.000000e-01 : f32
    %113 = vector.broadcast %cst_38 : f32 to vector<8x384xf32>
    %114 = arith.addf %112, %113 : vector<8x384xf32>
    %115 = vector.extract_strided_slice %114 {offsets = [0, 0], sizes = [8, 128], strides = [1, 1]} : vector<8x384xf32> to vector<8x128xf32>
    %116 = vector.extract_strided_slice %114 {offsets = [0, 128], sizes = [8, 128], strides = [1, 1]} : vector<8x384xf32> to vector<8x128xf32>
    %117 = vector.extract_strided_slice %114 {offsets = [0, 256], sizes = [8, 128], strides = [1, 1]} : vector<8x384xf32> to vector<8x128xf32>
    %118 = vector.extract_strided_slice %106 {offsets = [0, 384], sizes = [8, 128], strides = [1, 1]} : vector<8x512xf32> to vector<8x128xf32>
    %119 = math.tanh %118 : vector<8x128xf32>
    %120 = arith.mulf %116, %86 : vector<8x128xf32>
    %121 = arith.mulf %115, %119 : vector<8x128xf32>
    %122 = arith.addf %120, %121 : vector<8x128xf32>
    %123 = math.tanh %122 : vector<8x128xf32>
    %124 = arith.mulf %117, %123 : vector<8x128xf32>
    %125 = vector.extract_strided_slice %124 {offsets = [0, 0], sizes = [8, 64], strides = [1, 1]} : vector<8x128xf32> to vector<8x64xf32>
    %126 = arith.index_cast %96 : i32 to index
    %c0_39 = arith.constant 0 : index
    %127 = vector.load %arg15[%126, %c0_39] : memref<64x128xf32, #tpu.memory_space<vmem>>, vector<8x64xf32>
    tpu.vector_store %arg15[%126, %c0_39], %125 {strides = array<i32>} : memref<64x128xf32, #tpu.memory_space<vmem>>, vector<8x64xf32>,
    %128 = vector.extract_strided_slice %124 {offsets = [0, 64], sizes = [8, 64], strides = [1, 1]} : vector<8x128xf32> to vector<8x64xf32>
    %129 = arith.index_cast %99 : i32 to index
    %c64_40 = arith.constant 64 : index
    %130 = vector.load %arg15[%129, %c64_40] : memref<64x128xf32, #tpu.memory_space<vmem>>, vector<8x64xf32>
    tpu.vector_store %arg15[%129, %c64_40], %128 {strides = array<i32>} : memref<64x128xf32, #tpu.memory_space<vmem>>, vector<8x64xf32>,
    %c3_i32 = arith.constant 3 : i32
    %c8_i32_41 = arith.constant 8 : i32
    %131 = arith.muli %c3_i32, %c8_i32_41 : i32
    %132 = tpu.assume_multiple %131, 8 : i32
    %c7_i32_42 = arith.constant 7 : i32
    %133 = arith.subi %c7_i32_42, %c3_i32 : i32
    %c8_i32_43 = arith.constant 8 : i32
    %134 = arith.muli %133, %c8_i32_43 : i32
    %135 = tpu.assume_multiple %134, 8 : i32
    %136 = arith.index_cast %132 : i32 to index
    %c0_44 = arith.constant 0 : index
    %137 = vector.load %arg14[%136, %c0_44] : memref<64x512xf32, #tpu.memory_space<vmem>>, vector<8x512xf32>
    %138 = arith.index_cast %135 : i32 to index
    %c0_45 = arith.constant 0 : index
    %139 = vector.load %arg14[%138, %c0_45] : memref<64x512xf32, #tpu.memory_space<vmem>>, vector<8x512xf32>
    %140 = arith.select %19, %137, %139 : vector<8x512xi1>, vector<8x512xf32>
    %cst_46 = arith.constant dense<0.000000e+00> : vector<8x512xf32>
    %141 = tpu.matmul %124, %27, %cst_46 {dimension_numbers = #tpu.dot_dimension_numbers<[1], [0], [0], [1], [0, 0, 1, 1], [], []>} : vector<8x128xf32>, vector<128x512xf32>, vector<8x512xf32> -> vector<8x512xf32>
    %142 = arith.addf %140, %141 : vector<8x512xf32>
    %143 = vector.extract_strided_slice %142 {offsets = [0, 0], sizes = [8, 384], strides = [1, 1]} : vector<8x512xf32> to vector<8x384xf32>
    %cst_47 = arith.constant 5.000000e-01 : f32
    %144 = vector.broadcast %cst_47 : f32 to vector<8x384xf32>
    %145 = arith.mulf %144, %143 : vector<8x384xf32>
    %146 = math.tanh %145 : vector<8x384xf32>
    %cst_48 = arith.constant 5.000000e-01 : f32
    %147 = vector.broadcast %cst_48 : f32 to vector<8x384xf32>
    %148 = arith.mulf %147, %146 : vector<8x384xf32>
    %cst_49 = arith.constant 5.000000e-01 : f32
    %149 = vector.broadcast %cst_49 : f32 to vector<8x384xf32>
    %150 = arith.addf %148, %149 : vector<8x384xf32>
    %151 = vector.extract_strided_slice %150 {offsets = [0, 0], sizes = [8, 128], strides = [1, 1]} : vector<8x384xf32> to vector<8x128xf32>
    %152 = vector.extract_strided_slice %150 {offsets = [0, 128], sizes = [8, 128], strides = [1, 1]} : vector<8x384xf32> to vector<8x128xf32>
    %153 = vector.extract_strided_slice %150 {offsets = [0, 256], sizes = [8, 128], strides = [1, 1]} : vector<8x384xf32> to vector<8x128xf32>
    %154 = vector.extract_strided_slice %142 {offsets = [0, 384], sizes = [8, 128], strides = [1, 1]} : vector<8x512xf32> to vector<8x128xf32>
    %155 = math.tanh %154 : vector<8x128xf32>
    %156 = arith.mulf %152, %122 : vector<8x128xf32>
    %157 = arith.mulf %151, %155 : vector<8x128xf32>
    %158 = arith.addf %156, %157 : vector<8x128xf32>
    %159 = math.tanh %158 : vector<8x128xf32>
    %160 = arith.mulf %153, %159 : vector<8x128xf32>
    %161 = vector.extract_strided_slice %160 {offsets = [0, 0], sizes = [8, 64], strides = [1, 1]} : vector<8x128xf32> to vector<8x64xf32>
    %162 = arith.index_cast %132 : i32 to index
    %c0_50 = arith.constant 0 : index
    %163 = vector.load %arg15[%162, %c0_50] : memref<64x128xf32, #tpu.memory_space<vmem>>, vector<8x64xf32>
    tpu.vector_store %arg15[%162, %c0_50], %161 {strides = array<i32>} : memref<64x128xf32, #tpu.memory_space<vmem>>, vector<8x64xf32>,
    %164 = vector.extract_strided_slice %160 {offsets = [0, 64], sizes = [8, 64], strides = [1, 1]} : vector<8x128xf32> to vector<8x64xf32>
    %165 = arith.index_cast %135 : i32 to index
    %c64_51 = arith.constant 64 : index
    %166 = vector.load %arg15[%165, %c64_51] : memref<64x128xf32, #tpu.memory_space<vmem>>, vector<8x64xf32>
    tpu.vector_store %arg15[%165, %c64_51], %164 {strides = array<i32>} : memref<64x128xf32, #tpu.memory_space<vmem>>, vector<8x64xf32>,
    %c4_i32 = arith.constant 4 : i32
    %c8_i32_52 = arith.constant 8 : i32
    %167 = arith.muli %c4_i32, %c8_i32_52 : i32
    %168 = tpu.assume_multiple %167, 8 : i32
    %c7_i32_53 = arith.constant 7 : i32
    %169 = arith.subi %c7_i32_53, %c4_i32 : i32
    %c8_i32_54 = arith.constant 8 : i32
    %170 = arith.muli %169, %c8_i32_54 : i32
    %171 = tpu.assume_multiple %170, 8 : i32
    %172 = arith.index_cast %168 : i32 to index
    %c0_55 = arith.constant 0 : index
    %173 = vector.load %arg14[%172, %c0_55] : memref<64x512xf32, #tpu.memory_space<vmem>>, vector<8x512xf32>
    %174 = arith.index_cast %171 : i32 to index
    %c0_56 = arith.constant 0 : index
    %175 = vector.load %arg14[%174, %c0_56] : memref<64x512xf32, #tpu.memory_space<vmem>>, vector<8x512xf32>
    %176 = arith.select %19, %173, %175 : vector<8x512xi1>, vector<8x512xf32>
    %cst_57 = arith.constant dense<0.000000e+00> : vector<8x512xf32>
    %177 = tpu.matmul %160, %27, %cst_57 {dimension_numbers = #tpu.dot_dimension_numbers<[1], [0], [0], [1], [0, 0, 1, 1], [], []>} : vector<8x128xf32>, vector<128x512xf32>, vector<8x512xf32> -> vector<8x512xf32>
    %178 = arith.addf %176, %177 : vector<8x512xf32>
    %179 = vector.extract_strided_slice %178 {offsets = [0, 0], sizes = [8, 384], strides = [1, 1]} : vector<8x512xf32> to vector<8x384xf32>
    %cst_58 = arith.constant 5.000000e-01 : f32
    %180 = vector.broadcast %cst_58 : f32 to vector<8x384xf32>
    %181 = arith.mulf %180, %179 : vector<8x384xf32>
    %182 = math.tanh %181 : vector<8x384xf32>
    %cst_59 = arith.constant 5.000000e-01 : f32
    %183 = vector.broadcast %cst_59 : f32 to vector<8x384xf32>
    %184 = arith.mulf %183, %182 : vector<8x384xf32>
    %cst_60 = arith.constant 5.000000e-01 : f32
    %185 = vector.broadcast %cst_60 : f32 to vector<8x384xf32>
    %186 = arith.addf %184, %185 : vector<8x384xf32>
    %187 = vector.extract_strided_slice %186 {offsets = [0, 0], sizes = [8, 128], strides = [1, 1]} : vector<8x384xf32> to vector<8x128xf32>
    %188 = vector.extract_strided_slice %186 {offsets = [0, 128], sizes = [8, 128], strides = [1, 1]} : vector<8x384xf32> to vector<8x128xf32>
    %189 = vector.extract_strided_slice %186 {offsets = [0, 256], sizes = [8, 128], strides = [1, 1]} : vector<8x384xf32> to vector<8x128xf32>
    %190 = vector.extract_strided_slice %178 {offsets = [0, 384], sizes = [8, 128], strides = [1, 1]} : vector<8x512xf32> to vector<8x128xf32>
    %191 = math.tanh %190 : vector<8x128xf32>
    %192 = arith.mulf %188, %158 : vector<8x128xf32>
    %193 = arith.mulf %187, %191 : vector<8x128xf32>
    %194 = arith.addf %192, %193 : vector<8x128xf32>
    %195 = math.tanh %194 : vector<8x128xf32>
    %196 = arith.mulf %189, %195 : vector<8x128xf32>
    %197 = vector.extract_strided_slice %196 {offsets = [0, 0], sizes = [8, 64], strides = [1, 1]} : vector<8x128xf32> to vector<8x64xf32>
    %198 = arith.index_cast %168 : i32 to index
    %c0_61 = arith.constant 0 : index
    %199 = vector.load %arg15[%198, %c0_61] : memref<64x128xf32, #tpu.memory_space<vmem>>, vector<8x64xf32>
    tpu.vector_store %arg15[%198, %c0_61], %197 {strides = array<i32>} : memref<64x128xf32, #tpu.memory_space<vmem>>, vector<8x64xf32>,
    %200 = vector.extract_strided_slice %196 {offsets = [0, 64], sizes = [8, 64], strides = [1, 1]} : vector<8x128xf32> to vector<8x64xf32>
    %201 = arith.index_cast %171 : i32 to index
    %c64_62 = arith.constant 64 : index
    %202 = vector.load %arg15[%201, %c64_62] : memref<64x128xf32, #tpu.memory_space<vmem>>, vector<8x64xf32>
    tpu.vector_store %arg15[%201, %c64_62], %200 {strides = array<i32>} : memref<64x128xf32, #tpu.memory_space<vmem>>, vector<8x64xf32>,
    %c5_i32 = arith.constant 5 : i32
    %c8_i32_63 = arith.constant 8 : i32
    %203 = arith.muli %c5_i32, %c8_i32_63 : i32
    %204 = tpu.assume_multiple %203, 8 : i32
    %c7_i32_64 = arith.constant 7 : i32
    %205 = arith.subi %c7_i32_64, %c5_i32 : i32
    %c8_i32_65 = arith.constant 8 : i32
    %206 = arith.muli %205, %c8_i32_65 : i32
    %207 = tpu.assume_multiple %206, 8 : i32
    %208 = arith.index_cast %204 : i32 to index
    %c0_66 = arith.constant 0 : index
    %209 = vector.load %arg14[%208, %c0_66] : memref<64x512xf32, #tpu.memory_space<vmem>>, vector<8x512xf32>
    %210 = arith.index_cast %207 : i32 to index
    %c0_67 = arith.constant 0 : index
    %211 = vector.load %arg14[%210, %c0_67] : memref<64x512xf32, #tpu.memory_space<vmem>>, vector<8x512xf32>
    %212 = arith.select %19, %209, %211 : vector<8x512xi1>, vector<8x512xf32>
    %cst_68 = arith.constant dense<0.000000e+00> : vector<8x512xf32>
    %213 = tpu.matmul %196, %27, %cst_68 {dimension_numbers = #tpu.dot_dimension_numbers<[1], [0], [0], [1], [0, 0, 1, 1], [], []>} : vector<8x128xf32>, vector<128x512xf32>, vector<8x512xf32> -> vector<8x512xf32>
    %214 = arith.addf %212, %213 : vector<8x512xf32>
    %215 = vector.extract_strided_slice %214 {offsets = [0, 0], sizes = [8, 384], strides = [1, 1]} : vector<8x512xf32> to vector<8x384xf32>
    %cst_69 = arith.constant 5.000000e-01 : f32
    %216 = vector.broadcast %cst_69 : f32 to vector<8x384xf32>
    %217 = arith.mulf %216, %215 : vector<8x384xf32>
    %218 = math.tanh %217 : vector<8x384xf32>
    %cst_70 = arith.constant 5.000000e-01 : f32
    %219 = vector.broadcast %cst_70 : f32 to vector<8x384xf32>
    %220 = arith.mulf %219, %218 : vector<8x384xf32>
    %cst_71 = arith.constant 5.000000e-01 : f32
    %221 = vector.broadcast %cst_71 : f32 to vector<8x384xf32>
    %222 = arith.addf %220, %221 : vector<8x384xf32>
    %223 = vector.extract_strided_slice %222 {offsets = [0, 0], sizes = [8, 128], strides = [1, 1]} : vector<8x384xf32> to vector<8x128xf32>
    %224 = vector.extract_strided_slice %222 {offsets = [0, 128], sizes = [8, 128], strides = [1, 1]} : vector<8x384xf32> to vector<8x128xf32>
    %225 = vector.extract_strided_slice %222 {offsets = [0, 256], sizes = [8, 128], strides = [1, 1]} : vector<8x384xf32> to vector<8x128xf32>
    %226 = vector.extract_strided_slice %214 {offsets = [0, 384], sizes = [8, 128], strides = [1, 1]} : vector<8x512xf32> to vector<8x128xf32>
    %227 = math.tanh %226 : vector<8x128xf32>
    %228 = arith.mulf %224, %194 : vector<8x128xf32>
    %229 = arith.mulf %223, %227 : vector<8x128xf32>
    %230 = arith.addf %228, %229 : vector<8x128xf32>
    %231 = math.tanh %230 : vector<8x128xf32>
    %232 = arith.mulf %225, %231 : vector<8x128xf32>
    %233 = vector.extract_strided_slice %232 {offsets = [0, 0], sizes = [8, 64], strides = [1, 1]} : vector<8x128xf32> to vector<8x64xf32>
    %234 = arith.index_cast %204 : i32 to index
    %c0_72 = arith.constant 0 : index
    %235 = vector.load %arg15[%234, %c0_72] : memref<64x128xf32, #tpu.memory_space<vmem>>, vector<8x64xf32>
    tpu.vector_store %arg15[%234, %c0_72], %233 {strides = array<i32>} : memref<64x128xf32, #tpu.memory_space<vmem>>, vector<8x64xf32>,
    %236 = vector.extract_strided_slice %232 {offsets = [0, 64], sizes = [8, 64], strides = [1, 1]} : vector<8x128xf32> to vector<8x64xf32>
    %237 = arith.index_cast %207 : i32 to index
    %c64_73 = arith.constant 64 : index
    %238 = vector.load %arg15[%237, %c64_73] : memref<64x128xf32, #tpu.memory_space<vmem>>, vector<8x64xf32>
    tpu.vector_store %arg15[%237, %c64_73], %236 {strides = array<i32>} : memref<64x128xf32, #tpu.memory_space<vmem>>, vector<8x64xf32>,
    %c6_i32 = arith.constant 6 : i32
    %c8_i32_74 = arith.constant 8 : i32
    %239 = arith.muli %c6_i32, %c8_i32_74 : i32
    %240 = tpu.assume_multiple %239, 8 : i32
    %c7_i32_75 = arith.constant 7 : i32
    %241 = arith.subi %c7_i32_75, %c6_i32 : i32
    %c8_i32_76 = arith.constant 8 : i32
    %242 = arith.muli %241, %c8_i32_76 : i32
    %243 = tpu.assume_multiple %242, 8 : i32
    %244 = arith.index_cast %240 : i32 to index
    %c0_77 = arith.constant 0 : index
    %245 = vector.load %arg14[%244, %c0_77] : memref<64x512xf32, #tpu.memory_space<vmem>>, vector<8x512xf32>
    %246 = arith.index_cast %243 : i32 to index
    %c0_78 = arith.constant 0 : index
    %247 = vector.load %arg14[%246, %c0_78] : memref<64x512xf32, #tpu.memory_space<vmem>>, vector<8x512xf32>
    %248 = arith.select %19, %245, %247 : vector<8x512xi1>, vector<8x512xf32>
    %cst_79 = arith.constant dense<0.000000e+00> : vector<8x512xf32>
    %249 = tpu.matmul %232, %27, %cst_79 {dimension_numbers = #tpu.dot_dimension_numbers<[1], [0], [0], [1], [0, 0, 1, 1], [], []>} : vector<8x128xf32>, vector<128x512xf32>, vector<8x512xf32> -> vector<8x512xf32>
    %250 = arith.addf %248, %249 : vector<8x512xf32>
    %251 = vector.extract_strided_slice %250 {offsets = [0, 0], sizes = [8, 384], strides = [1, 1]} : vector<8x512xf32> to vector<8x384xf32>
    %cst_80 = arith.constant 5.000000e-01 : f32
    %252 = vector.broadcast %cst_80 : f32 to vector<8x384xf32>
    %253 = arith.mulf %252, %251 : vector<8x384xf32>
    %254 = math.tanh %253 : vector<8x384xf32>
    %cst_81 = arith.constant 5.000000e-01 : f32
    %255 = vector.broadcast %cst_81 : f32 to vector<8x384xf32>
    %256 = arith.mulf %255, %254 : vector<8x384xf32>
    %cst_82 = arith.constant 5.000000e-01 : f32
    %257 = vector.broadcast %cst_82 : f32 to vector<8x384xf32>
    %258 = arith.addf %256, %257 : vector<8x384xf32>
    %259 = vector.extract_strided_slice %258 {offsets = [0, 0], sizes = [8, 128], strides = [1, 1]} : vector<8x384xf32> to vector<8x128xf32>
    %260 = vector.extract_strided_slice %258 {offsets = [0, 128], sizes = [8, 128], strides = [1, 1]} : vector<8x384xf32> to vector<8x128xf32>
    %261 = vector.extract_strided_slice %258 {offsets = [0, 256], sizes = [8, 128], strides = [1, 1]} : vector<8x384xf32> to vector<8x128xf32>
    %262 = vector.extract_strided_slice %250 {offsets = [0, 384], sizes = [8, 128], strides = [1, 1]} : vector<8x512xf32> to vector<8x128xf32>
    %263 = math.tanh %262 : vector<8x128xf32>
    %264 = arith.mulf %260, %230 : vector<8x128xf32>
    %265 = arith.mulf %259, %263 : vector<8x128xf32>
    %266 = arith.addf %264, %265 : vector<8x128xf32>
    %267 = math.tanh %266 : vector<8x128xf32>
    %268 = arith.mulf %261, %267 : vector<8x128xf32>
    %269 = vector.extract_strided_slice %268 {offsets = [0, 0], sizes = [8, 64], strides = [1, 1]} : vector<8x128xf32> to vector<8x64xf32>
    %270 = arith.index_cast %240 : i32 to index
    %c0_83 = arith.constant 0 : index
    %271 = vector.load %arg15[%270, %c0_83] : memref<64x128xf32, #tpu.memory_space<vmem>>, vector<8x64xf32>
    tpu.vector_store %arg15[%270, %c0_83], %269 {strides = array<i32>} : memref<64x128xf32, #tpu.memory_space<vmem>>, vector<8x64xf32>,
    %272 = vector.extract_strided_slice %268 {offsets = [0, 64], sizes = [8, 64], strides = [1, 1]} : vector<8x128xf32> to vector<8x64xf32>
    %273 = arith.index_cast %243 : i32 to index
    %c64_84 = arith.constant 64 : index
    %274 = vector.load %arg15[%273, %c64_84] : memref<64x128xf32, #tpu.memory_space<vmem>>, vector<8x64xf32>
    tpu.vector_store %arg15[%273, %c64_84], %272 {strides = array<i32>} : memref<64x128xf32, #tpu.memory_space<vmem>>, vector<8x64xf32>,
    %c7_i32_85 = arith.constant 7 : i32
    %c8_i32_86 = arith.constant 8 : i32
    %275 = arith.muli %c7_i32_85, %c8_i32_86 : i32
    %276 = tpu.assume_multiple %275, 8 : i32
    %c7_i32_87 = arith.constant 7 : i32
    %277 = arith.subi %c7_i32_87, %c7_i32_85 : i32
    %c8_i32_88 = arith.constant 8 : i32
    %278 = arith.muli %277, %c8_i32_88 : i32
    %279 = tpu.assume_multiple %278, 8 : i32
    %280 = arith.index_cast %276 : i32 to index
    %c0_89 = arith.constant 0 : index
    %281 = vector.load %arg14[%280, %c0_89] : memref<64x512xf32, #tpu.memory_space<vmem>>, vector<8x512xf32>
    %282 = arith.index_cast %279 : i32 to index
    %c0_90 = arith.constant 0 : index
    %283 = vector.load %arg14[%282, %c0_90] : memref<64x512xf32, #tpu.memory_space<vmem>>, vector<8x512xf32>
    %284 = arith.select %19, %281, %283 : vector<8x512xi1>, vector<8x512xf32>
    %cst_91 = arith.constant dense<0.000000e+00> : vector<8x512xf32>
    %285 = tpu.matmul %268, %27, %cst_91 {dimension_numbers = #tpu.dot_dimension_numbers<[1], [0], [0], [1], [0, 0, 1, 1], [], []>} : vector<8x128xf32>, vector<128x512xf32>, vector<8x512xf32> -> vector<8x512xf32>
    %286 = arith.addf %284, %285 : vector<8x512xf32>
    %287 = vector.extract_strided_slice %286 {offsets = [0, 0], sizes = [8, 384], strides = [1, 1]} : vector<8x512xf32> to vector<8x384xf32>
    %cst_92 = arith.constant 5.000000e-01 : f32
    %288 = vector.broadcast %cst_92 : f32 to vector<8x384xf32>
    %289 = arith.mulf %288, %287 : vector<8x384xf32>
    %290 = math.tanh %289 : vector<8x384xf32>
    %cst_93 = arith.constant 5.000000e-01 : f32
    %291 = vector.broadcast %cst_93 : f32 to vector<8x384xf32>
    %292 = arith.mulf %291, %290 : vector<8x384xf32>
    %cst_94 = arith.constant 5.000000e-01 : f32
    %293 = vector.broadcast %cst_94 : f32 to vector<8x384xf32>
    %294 = arith.addf %292, %293 : vector<8x384xf32>
    %295 = vector.extract_strided_slice %294 {offsets = [0, 0], sizes = [8, 128], strides = [1, 1]} : vector<8x384xf32> to vector<8x128xf32>
    %296 = vector.extract_strided_slice %294 {offsets = [0, 128], sizes = [8, 128], strides = [1, 1]} : vector<8x384xf32> to vector<8x128xf32>
    %297 = vector.extract_strided_slice %294 {offsets = [0, 256], sizes = [8, 128], strides = [1, 1]} : vector<8x384xf32> to vector<8x128xf32>
    %298 = vector.extract_strided_slice %286 {offsets = [0, 384], sizes = [8, 128], strides = [1, 1]} : vector<8x512xf32> to vector<8x128xf32>
    %299 = math.tanh %298 : vector<8x128xf32>
    %300 = arith.mulf %296, %266 : vector<8x128xf32>
    %301 = arith.mulf %295, %299 : vector<8x128xf32>
    %302 = arith.addf %300, %301 : vector<8x128xf32>
    %303 = math.tanh %302 : vector<8x128xf32>
    %304 = arith.mulf %297, %303 : vector<8x128xf32>
    %305 = vector.extract_strided_slice %304 {offsets = [0, 0], sizes = [8, 64], strides = [1, 1]} : vector<8x128xf32> to vector<8x64xf32>
    %306 = arith.index_cast %276 : i32 to index
    %c0_95 = arith.constant 0 : index
    %307 = vector.load %arg15[%306, %c0_95] : memref<64x128xf32, #tpu.memory_space<vmem>>, vector<8x64xf32>
    tpu.vector_store %arg15[%306, %c0_95], %305 {strides = array<i32>} : memref<64x128xf32, #tpu.memory_space<vmem>>, vector<8x64xf32>,
    %308 = vector.extract_strided_slice %304 {offsets = [0, 64], sizes = [8, 64], strides = [1, 1]} : vector<8x128xf32> to vector<8x64xf32>
    %309 = arith.index_cast %279 : i32 to index
    %c64_96 = arith.constant 64 : index
    %310 = vector.load %arg15[%309, %c64_96] : memref<64x128xf32, #tpu.memory_space<vmem>>, vector<8x64xf32>
    tpu.vector_store %arg15[%309, %c64_96], %308 {strides = array<i32>} : memref<64x128xf32, #tpu.memory_space<vmem>>, vector<8x64xf32>,
    %c7_i32_97 = arith.constant 7 : i32
    %c0_98 = arith.constant 0 : index
    %c0_99 = arith.constant 0 : index
    %311 = vector.load %arg15[%c0_98, %c0_99] : memref<64x128xf32, #tpu.memory_space<vmem>>, vector<64x128xf32>
    %c0_100 = arith.constant 0 : index
    %c0_101 = arith.constant 0 : index
    %312 = vector.load %arg5[%c0_100, %c0_101] : memref<128x512xf32, #tpu.memory_space<vmem>>, vector<128x512xf32>
    %cst_102 = arith.constant dense<0.000000e+00> : vector<64x512xf32>
    %313 = tpu.matmul %311, %312, %cst_102 {dimension_numbers = #tpu.dot_dimension_numbers<[1], [0], [0], [1], [0, 0, 1, 1], [], []>} : vector<64x128xf32>, vector<128x512xf32>, vector<64x512xf32> -> vector<64x512xf32>
    %c0_103 = arith.constant 0 : index
    %c0_104 = arith.constant 0 : index
    %314 = vector.load %arg7[%c0_103, %c0_104] : memref<1x512xf32, #tpu.memory_space<vmem>>, vector<1x512xf32>
    %315 = vector.broadcast %314 : vector<1x512xf32> to vector<64x512xf32>
    %316 = arith.addf %313, %315 : vector<64x512xf32>
    %c0_105 = arith.constant 0 : index
    %c0_106 = arith.constant 0 : index
    %317 = vector.load %arg14[%c0_105, %c0_106] : memref<64x512xf32, #tpu.memory_space<vmem>>, vector<64x512xf32>
    tpu.vector_store %arg14[%c0_105, %c0_106], %316 {strides = array<i32>} : memref<64x512xf32, #tpu.memory_space<vmem>>, vector<64x512xf32>,
    %c0_107 = arith.constant 0 : index
    %c0_108 = arith.constant 0 : index
    %318 = vector.load %arg6[%c0_107, %c0_108] : memref<128x512xf32, #tpu.memory_space<vmem>>, vector<128x512xf32>
    %c0_i32_109 = arith.constant 0 : i32
    %319 = tpu.assume_multiple %c0_i32_109, 8 : i32
    %c56_i32_110 = arith.constant 56 : i32
    %320 = tpu.assume_multiple %c56_i32_110, 8 : i32
    %321 = arith.index_cast %319 : i32 to index
    %c0_111 = arith.constant 0 : index
    %322 = vector.load %arg14[%321, %c0_111] : memref<64x512xf32, #tpu.memory_space<vmem>>, vector<8x512xf32>
    %323 = arith.index_cast %320 : i32 to index
    %c0_112 = arith.constant 0 : index
    %324 = vector.load %arg14[%323, %c0_112] : memref<64x512xf32, #tpu.memory_space<vmem>>, vector<8x512xf32>
    %325 = arith.select %19, %322, %324 : vector<8x512xi1>, vector<8x512xf32>
    %326 = vector.extract_strided_slice %325 {offsets = [0, 0], sizes = [8, 384], strides = [1, 1]} : vector<8x512xf32> to vector<8x384xf32>
    %cst_113 = arith.constant 5.000000e-01 : f32
    %327 = vector.broadcast %cst_113 : f32 to vector<8x384xf32>
    %328 = arith.mulf %327, %326 : vector<8x384xf32>
    %329 = math.tanh %328 : vector<8x384xf32>
    %cst_114 = arith.constant 5.000000e-01 : f32
    %330 = vector.broadcast %cst_114 : f32 to vector<8x384xf32>
    %331 = arith.mulf %330, %329 : vector<8x384xf32>
    %cst_115 = arith.constant 5.000000e-01 : f32
    %332 = vector.broadcast %cst_115 : f32 to vector<8x384xf32>
    %333 = arith.addf %331, %332 : vector<8x384xf32>
    %334 = vector.extract_strided_slice %333 {offsets = [0, 0], sizes = [8, 128], strides = [1, 1]} : vector<8x384xf32> to vector<8x128xf32>
    %335 = vector.extract_strided_slice %333 {offsets = [0, 128], sizes = [8, 128], strides = [1, 1]} : vector<8x384xf32> to vector<8x128xf32>
    %336 = vector.extract_strided_slice %333 {offsets = [0, 256], sizes = [8, 128], strides = [1, 1]} : vector<8x384xf32> to vector<8x128xf32>
    %337 = vector.extract_strided_slice %325 {offsets = [0, 384], sizes = [8, 128], strides = [1, 1]} : vector<8x512xf32> to vector<8x128xf32>
    %338 = math.tanh %337 : vector<8x128xf32>
    %339 = arith.mulf %335, %0 : vector<8x128xf32>
    %340 = arith.mulf %334, %338 : vector<8x128xf32>
    %341 = arith.addf %339, %340 : vector<8x128xf32>
    %342 = math.tanh %341 : vector<8x128xf32>
    %343 = arith.mulf %336, %342 : vector<8x128xf32>
    %344 = vector.extract_strided_slice %343 {offsets = [0, 0], sizes = [8, 64], strides = [1, 1]} : vector<8x128xf32> to vector<8x64xf32>
    %345 = arith.index_cast %319 : i32 to index
    %c0_116 = arith.constant 0 : index
    %346 = vector.load %arg15[%345, %c0_116] : memref<64x128xf32, #tpu.memory_space<vmem>>, vector<8x64xf32>
    tpu.vector_store %arg15[%345, %c0_116], %344 {strides = array<i32>} : memref<64x128xf32, #tpu.memory_space<vmem>>, vector<8x64xf32>,
    %347 = vector.extract_strided_slice %343 {offsets = [0, 64], sizes = [8, 64], strides = [1, 1]} : vector<8x128xf32> to vector<8x64xf32>
    %348 = arith.index_cast %320 : i32 to index
    %c64_117 = arith.constant 64 : index
    %349 = vector.load %arg15[%348, %c64_117] : memref<64x128xf32, #tpu.memory_space<vmem>>, vector<8x64xf32>
    tpu.vector_store %arg15[%348, %c64_117], %347 {strides = array<i32>} : memref<64x128xf32, #tpu.memory_space<vmem>>, vector<8x64xf32>,
    %c1_i32_118 = arith.constant 1 : i32
    %c8_i32_119 = arith.constant 8 : i32
    %350 = arith.muli %c1_i32_118, %c8_i32_119 : i32
    %351 = tpu.assume_multiple %350, 8 : i32
    %c7_i32_120 = arith.constant 7 : i32
    %352 = arith.subi %c7_i32_120, %c1_i32_118 : i32
    %c8_i32_121 = arith.constant 8 : i32
    %353 = arith.muli %352, %c8_i32_121 : i32
    %354 = tpu.assume_multiple %353, 8 : i32
    %355 = arith.index_cast %351 : i32 to index
    %c0_122 = arith.constant 0 : index
    %356 = vector.load %arg14[%355, %c0_122] : memref<64x512xf32, #tpu.memory_space<vmem>>, vector<8x512xf32>
    %357 = arith.index_cast %354 : i32 to index
    %c0_123 = arith.constant 0 : index
    %358 = vector.load %arg14[%357, %c0_123] : memref<64x512xf32, #tpu.memory_space<vmem>>, vector<8x512xf32>
    %359 = arith.select %19, %356, %358 : vector<8x512xi1>, vector<8x512xf32>
    %cst_124 = arith.constant dense<0.000000e+00> : vector<8x512xf32>
    %360 = tpu.matmul %343, %318, %cst_124 {dimension_numbers = #tpu.dot_dimension_numbers<[1], [0], [0], [1], [0, 0, 1, 1], [], []>} : vector<8x128xf32>, vector<128x512xf32>, vector<8x512xf32> -> vector<8x512xf32>
    %361 = arith.addf %359, %360 : vector<8x512xf32>
    %362 = vector.extract_strided_slice %361 {offsets = [0, 0], sizes = [8, 384], strides = [1, 1]} : vector<8x512xf32> to vector<8x384xf32>
    %cst_125 = arith.constant 5.000000e-01 : f32
    %363 = vector.broadcast %cst_125 : f32 to vector<8x384xf32>
    %364 = arith.mulf %363, %362 : vector<8x384xf32>
    %365 = math.tanh %364 : vector<8x384xf32>
    %cst_126 = arith.constant 5.000000e-01 : f32
    %366 = vector.broadcast %cst_126 : f32 to vector<8x384xf32>
    %367 = arith.mulf %366, %365 : vector<8x384xf32>
    %cst_127 = arith.constant 5.000000e-01 : f32
    %368 = vector.broadcast %cst_127 : f32 to vector<8x384xf32>
    %369 = arith.addf %367, %368 : vector<8x384xf32>
    %370 = vector.extract_strided_slice %369 {offsets = [0, 0], sizes = [8, 128], strides = [1, 1]} : vector<8x384xf32> to vector<8x128xf32>
    %371 = vector.extract_strided_slice %369 {offsets = [0, 128], sizes = [8, 128], strides = [1, 1]} : vector<8x384xf32> to vector<8x128xf32>
    %372 = vector.extract_strided_slice %369 {offsets = [0, 256], sizes = [8, 128], strides = [1, 1]} : vector<8x384xf32> to vector<8x128xf32>
    %373 = vector.extract_strided_slice %361 {offsets = [0, 384], sizes = [8, 128], strides = [1, 1]} : vector<8x512xf32> to vector<8x128xf32>
    %374 = math.tanh %373 : vector<8x128xf32>
    %375 = arith.mulf %371, %341 : vector<8x128xf32>
    %376 = arith.mulf %370, %374 : vector<8x128xf32>
    %377 = arith.addf %375, %376 : vector<8x128xf32>
    %378 = math.tanh %377 : vector<8x128xf32>
    %379 = arith.mulf %372, %378 : vector<8x128xf32>
    %380 = vector.extract_strided_slice %379 {offsets = [0, 0], sizes = [8, 64], strides = [1, 1]} : vector<8x128xf32> to vector<8x64xf32>
    %381 = arith.index_cast %351 : i32 to index
    %c0_128 = arith.constant 0 : index
    %382 = vector.load %arg15[%381, %c0_128] : memref<64x128xf32, #tpu.memory_space<vmem>>, vector<8x64xf32>
    tpu.vector_store %arg15[%381, %c0_128], %380 {strides = array<i32>} : memref<64x128xf32, #tpu.memory_space<vmem>>, vector<8x64xf32>,
    %383 = vector.extract_strided_slice %379 {offsets = [0, 64], sizes = [8, 64], strides = [1, 1]} : vector<8x128xf32> to vector<8x64xf32>
    %384 = arith.index_cast %354 : i32 to index
    %c64_129 = arith.constant 64 : index
    %385 = vector.load %arg15[%384, %c64_129] : memref<64x128xf32, #tpu.memory_space<vmem>>, vector<8x64xf32>
    tpu.vector_store %arg15[%384, %c64_129], %383 {strides = array<i32>} : memref<64x128xf32, #tpu.memory_space<vmem>>, vector<8x64xf32>,
    %c2_i32_130 = arith.constant 2 : i32
    %c8_i32_131 = arith.constant 8 : i32
    %386 = arith.muli %c2_i32_130, %c8_i32_131 : i32
    %387 = tpu.assume_multiple %386, 8 : i32
    %c7_i32_132 = arith.constant 7 : i32
    %388 = arith.subi %c7_i32_132, %c2_i32_130 : i32
    %c8_i32_133 = arith.constant 8 : i32
    %389 = arith.muli %388, %c8_i32_133 : i32
    %390 = tpu.assume_multiple %389, 8 : i32
    %391 = arith.index_cast %387 : i32 to index
    %c0_134 = arith.constant 0 : index
    %392 = vector.load %arg14[%391, %c0_134] : memref<64x512xf32, #tpu.memory_space<vmem>>, vector<8x512xf32>
    %393 = arith.index_cast %390 : i32 to index
    %c0_135 = arith.constant 0 : index
    %394 = vector.load %arg14[%393, %c0_135] : memref<64x512xf32, #tpu.memory_space<vmem>>, vector<8x512xf32>
    %395 = arith.select %19, %392, %394 : vector<8x512xi1>, vector<8x512xf32>
    %cst_136 = arith.constant dense<0.000000e+00> : vector<8x512xf32>
    %396 = tpu.matmul %379, %318, %cst_136 {dimension_numbers = #tpu.dot_dimension_numbers<[1], [0], [0], [1], [0, 0, 1, 1], [], []>} : vector<8x128xf32>, vector<128x512xf32>, vector<8x512xf32> -> vector<8x512xf32>
    %397 = arith.addf %395, %396 : vector<8x512xf32>
    %398 = vector.extract_strided_slice %397 {offsets = [0, 0], sizes = [8, 384], strides = [1, 1]} : vector<8x512xf32> to vector<8x384xf32>
    %cst_137 = arith.constant 5.000000e-01 : f32
    %399 = vector.broadcast %cst_137 : f32 to vector<8x384xf32>
    %400 = arith.mulf %399, %398 : vector<8x384xf32>
    %401 = math.tanh %400 : vector<8x384xf32>
    %cst_138 = arith.constant 5.000000e-01 : f32
    %402 = vector.broadcast %cst_138 : f32 to vector<8x384xf32>
    %403 = arith.mulf %402, %401 : vector<8x384xf32>
    %cst_139 = arith.constant 5.000000e-01 : f32
    %404 = vector.broadcast %cst_139 : f32 to vector<8x384xf32>
    %405 = arith.addf %403, %404 : vector<8x384xf32>
    %406 = vector.extract_strided_slice %405 {offsets = [0, 0], sizes = [8, 128], strides = [1, 1]} : vector<8x384xf32> to vector<8x128xf32>
    %407 = vector.extract_strided_slice %405 {offsets = [0, 128], sizes = [8, 128], strides = [1, 1]} : vector<8x384xf32> to vector<8x128xf32>
    %408 = vector.extract_strided_slice %405 {offsets = [0, 256], sizes = [8, 128], strides = [1, 1]} : vector<8x384xf32> to vector<8x128xf32>
    %409 = vector.extract_strided_slice %397 {offsets = [0, 384], sizes = [8, 128], strides = [1, 1]} : vector<8x512xf32> to vector<8x128xf32>
    %410 = math.tanh %409 : vector<8x128xf32>
    %411 = arith.mulf %407, %377 : vector<8x128xf32>
    %412 = arith.mulf %406, %410 : vector<8x128xf32>
    %413 = arith.addf %411, %412 : vector<8x128xf32>
    %414 = math.tanh %413 : vector<8x128xf32>
    %415 = arith.mulf %408, %414 : vector<8x128xf32>
    %416 = vector.extract_strided_slice %415 {offsets = [0, 0], sizes = [8, 64], strides = [1, 1]} : vector<8x128xf32> to vector<8x64xf32>
    %417 = arith.index_cast %387 : i32 to index
    %c0_140 = arith.constant 0 : index
    %418 = vector.load %arg15[%417, %c0_140] : memref<64x128xf32, #tpu.memory_space<vmem>>, vector<8x64xf32>
    tpu.vector_store %arg15[%417, %c0_140], %416 {strides = array<i32>} : memref<64x128xf32, #tpu.memory_space<vmem>>, vector<8x64xf32>,
    %419 = vector.extract_strided_slice %415 {offsets = [0, 64], sizes = [8, 64], strides = [1, 1]} : vector<8x128xf32> to vector<8x64xf32>
    %420 = arith.index_cast %390 : i32 to index
    %c64_141 = arith.constant 64 : index
    %421 = vector.load %arg15[%420, %c64_141] : memref<64x128xf32, #tpu.memory_space<vmem>>, vector<8x64xf32>
    tpu.vector_store %arg15[%420, %c64_141], %419 {strides = array<i32>} : memref<64x128xf32, #tpu.memory_space<vmem>>, vector<8x64xf32>,
    %c3_i32_142 = arith.constant 3 : i32
    %c8_i32_143 = arith.constant 8 : i32
    %422 = arith.muli %c3_i32_142, %c8_i32_143 : i32
    %423 = tpu.assume_multiple %422, 8 : i32
    %c7_i32_144 = arith.constant 7 : i32
    %424 = arith.subi %c7_i32_144, %c3_i32_142 : i32
    %c8_i32_145 = arith.constant 8 : i32
    %425 = arith.muli %424, %c8_i32_145 : i32
    %426 = tpu.assume_multiple %425, 8 : i32
    %427 = arith.index_cast %423 : i32 to index
    %c0_146 = arith.constant 0 : index
    %428 = vector.load %arg14[%427, %c0_146] : memref<64x512xf32, #tpu.memory_space<vmem>>, vector<8x512xf32>
    %429 = arith.index_cast %426 : i32 to index
    %c0_147 = arith.constant 0 : index
    %430 = vector.load %arg14[%429, %c0_147] : memref<64x512xf32, #tpu.memory_space<vmem>>, vector<8x512xf32>
    %431 = arith.select %19, %428, %430 : vector<8x512xi1>, vector<8x512xf32>
    %cst_148 = arith.constant dense<0.000000e+00> : vector<8x512xf32>
    %432 = tpu.matmul %415, %318, %cst_148 {dimension_numbers = #tpu.dot_dimension_numbers<[1], [0], [0], [1], [0, 0, 1, 1], [], []>} : vector<8x128xf32>, vector<128x512xf32>, vector<8x512xf32> -> vector<8x512xf32>
    %433 = arith.addf %431, %432 : vector<8x512xf32>
    %434 = vector.extract_strided_slice %433 {offsets = [0, 0], sizes = [8, 384], strides = [1, 1]} : vector<8x512xf32> to vector<8x384xf32>
    %cst_149 = arith.constant 5.000000e-01 : f32
    %435 = vector.broadcast %cst_149 : f32 to vector<8x384xf32>
    %436 = arith.mulf %435, %434 : vector<8x384xf32>
    %437 = math.tanh %436 : vector<8x384xf32>
    %cst_150 = arith.constant 5.000000e-01 : f32
    %438 = vector.broadcast %cst_150 : f32 to vector<8x384xf32>
    %439 = arith.mulf %438, %437 : vector<8x384xf32>
    %cst_151 = arith.constant 5.000000e-01 : f32
    %440 = vector.broadcast %cst_151 : f32 to vector<8x384xf32>
    %441 = arith.addf %439, %440 : vector<8x384xf32>
    %442 = vector.extract_strided_slice %441 {offsets = [0, 0], sizes = [8, 128], strides = [1, 1]} : vector<8x384xf32> to vector<8x128xf32>
    %443 = vector.extract_strided_slice %441 {offsets = [0, 128], sizes = [8, 128], strides = [1, 1]} : vector<8x384xf32> to vector<8x128xf32>
    %444 = vector.extract_strided_slice %441 {offsets = [0, 256], sizes = [8, 128], strides = [1, 1]} : vector<8x384xf32> to vector<8x128xf32>
    %445 = vector.extract_strided_slice %433 {offsets = [0, 384], sizes = [8, 128], strides = [1, 1]} : vector<8x512xf32> to vector<8x128xf32>
    %446 = math.tanh %445 : vector<8x128xf32>
    %447 = arith.mulf %443, %413 : vector<8x128xf32>
    %448 = arith.mulf %442, %446 : vector<8x128xf32>
    %449 = arith.addf %447, %448 : vector<8x128xf32>
    %450 = math.tanh %449 : vector<8x128xf32>
    %451 = arith.mulf %444, %450 : vector<8x128xf32>
    %452 = vector.extract_strided_slice %451 {offsets = [0, 0], sizes = [8, 64], strides = [1, 1]} : vector<8x128xf32> to vector<8x64xf32>
    %453 = arith.index_cast %423 : i32 to index
    %c0_152 = arith.constant 0 : index
    %454 = vector.load %arg15[%453, %c0_152] : memref<64x128xf32, #tpu.memory_space<vmem>>, vector<8x64xf32>
    tpu.vector_store %arg15[%453, %c0_152], %452 {strides = array<i32>} : memref<64x128xf32, #tpu.memory_space<vmem>>, vector<8x64xf32>,
    %455 = vector.extract_strided_slice %451 {offsets = [0, 64], sizes = [8, 64], strides = [1, 1]} : vector<8x128xf32> to vector<8x64xf32>
    %456 = arith.index_cast %426 : i32 to index
    %c64_153 = arith.constant 64 : index
    %457 = vector.load %arg15[%456, %c64_153] : memref<64x128xf32, #tpu.memory_space<vmem>>, vector<8x64xf32>
    tpu.vector_store %arg15[%456, %c64_153], %455 {strides = array<i32>} : memref<64x128xf32, #tpu.memory_space<vmem>>, vector<8x64xf32>,
    %c4_i32_154 = arith.constant 4 : i32
    %c8_i32_155 = arith.constant 8 : i32
    %458 = arith.muli %c4_i32_154, %c8_i32_155 : i32
    %459 = tpu.assume_multiple %458, 8 : i32
    %c7_i32_156 = arith.constant 7 : i32
    %460 = arith.subi %c7_i32_156, %c4_i32_154 : i32
    %c8_i32_157 = arith.constant 8 : i32
    %461 = arith.muli %460, %c8_i32_157 : i32
    %462 = tpu.assume_multiple %461, 8 : i32
    %463 = arith.index_cast %459 : i32 to index
    %c0_158 = arith.constant 0 : index
    %464 = vector.load %arg14[%463, %c0_158] : memref<64x512xf32, #tpu.memory_space<vmem>>, vector<8x512xf32>
    %465 = arith.index_cast %462 : i32 to index
    %c0_159 = arith.constant 0 : index
    %466 = vector.load %arg14[%465, %c0_159] : memref<64x512xf32, #tpu.memory_space<vmem>>, vector<8x512xf32>
    %467 = arith.select %19, %464, %466 : vector<8x512xi1>, vector<8x512xf32>
    %cst_160 = arith.constant dense<0.000000e+00> : vector<8x512xf32>
    %468 = tpu.matmul %451, %318, %cst_160 {dimension_numbers = #tpu.dot_dimension_numbers<[1], [0], [0], [1], [0, 0, 1, 1], [], []>} : vector<8x128xf32>, vector<128x512xf32>, vector<8x512xf32> -> vector<8x512xf32>
    %469 = arith.addf %467, %468 : vector<8x512xf32>
    %470 = vector.extract_strided_slice %469 {offsets = [0, 0], sizes = [8, 384], strides = [1, 1]} : vector<8x512xf32> to vector<8x384xf32>
    %cst_161 = arith.constant 5.000000e-01 : f32
    %471 = vector.broadcast %cst_161 : f32 to vector<8x384xf32>
    %472 = arith.mulf %471, %470 : vector<8x384xf32>
    %473 = math.tanh %472 : vector<8x384xf32>
    %cst_162 = arith.constant 5.000000e-01 : f32
    %474 = vector.broadcast %cst_162 : f32 to vector<8x384xf32>
    %475 = arith.mulf %474, %473 : vector<8x384xf32>
    %cst_163 = arith.constant 5.000000e-01 : f32
    %476 = vector.broadcast %cst_163 : f32 to vector<8x384xf32>
    %477 = arith.addf %475, %476 : vector<8x384xf32>
    %478 = vector.extract_strided_slice %477 {offsets = [0, 0], sizes = [8, 128], strides = [1, 1]} : vector<8x384xf32> to vector<8x128xf32>
    %479 = vector.extract_strided_slice %477 {offsets = [0, 128], sizes = [8, 128], strides = [1, 1]} : vector<8x384xf32> to vector<8x128xf32>
    %480 = vector.extract_strided_slice %477 {offsets = [0, 256], sizes = [8, 128], strides = [1, 1]} : vector<8x384xf32> to vector<8x128xf32>
    %481 = vector.extract_strided_slice %469 {offsets = [0, 384], sizes = [8, 128], strides = [1, 1]} : vector<8x512xf32> to vector<8x128xf32>
    %482 = math.tanh %481 : vector<8x128xf32>
    %483 = arith.mulf %479, %449 : vector<8x128xf32>
    %484 = arith.mulf %478, %482 : vector<8x128xf32>
    %485 = arith.addf %483, %484 : vector<8x128xf32>
    %486 = math.tanh %485 : vector<8x128xf32>
    %487 = arith.mulf %480, %486 : vector<8x128xf32>
    %488 = vector.extract_strided_slice %487 {offsets = [0, 0], sizes = [8, 64], strides = [1, 1]} : vector<8x128xf32> to vector<8x64xf32>
    %489 = arith.index_cast %459 : i32 to index
    %c0_164 = arith.constant 0 : index
    %490 = vector.load %arg15[%489, %c0_164] : memref<64x128xf32, #tpu.memory_space<vmem>>, vector<8x64xf32>
    tpu.vector_store %arg15[%489, %c0_164], %488 {strides = array<i32>} : memref<64x128xf32, #tpu.memory_space<vmem>>, vector<8x64xf32>,
    %491 = vector.extract_strided_slice %487 {offsets = [0, 64], sizes = [8, 64], strides = [1, 1]} : vector<8x128xf32> to vector<8x64xf32>
    %492 = arith.index_cast %462 : i32 to index
    %c64_165 = arith.constant 64 : index
    %493 = vector.load %arg15[%492, %c64_165] : memref<64x128xf32, #tpu.memory_space<vmem>>, vector<8x64xf32>
    tpu.vector_store %arg15[%492, %c64_165], %491 {strides = array<i32>} : memref<64x128xf32, #tpu.memory_space<vmem>>, vector<8x64xf32>,
    %c5_i32_166 = arith.constant 5 : i32
    %c8_i32_167 = arith.constant 8 : i32
    %494 = arith.muli %c5_i32_166, %c8_i32_167 : i32
    %495 = tpu.assume_multiple %494, 8 : i32
    %c7_i32_168 = arith.constant 7 : i32
    %496 = arith.subi %c7_i32_168, %c5_i32_166 : i32
    %c8_i32_169 = arith.constant 8 : i32
    %497 = arith.muli %496, %c8_i32_169 : i32
    %498 = tpu.assume_multiple %497, 8 : i32
    %499 = arith.index_cast %495 : i32 to index
    %c0_170 = arith.constant 0 : index
    %500 = vector.load %arg14[%499, %c0_170] : memref<64x512xf32, #tpu.memory_space<vmem>>, vector<8x512xf32>
    %501 = arith.index_cast %498 : i32 to index
    %c0_171 = arith.constant 0 : index
    %502 = vector.load %arg14[%501, %c0_171] : memref<64x512xf32, #tpu.memory_space<vmem>>, vector<8x512xf32>
    %503 = arith.select %19, %500, %502 : vector<8x512xi1>, vector<8x512xf32>
    %cst_172 = arith.constant dense<0.000000e+00> : vector<8x512xf32>
    %504 = tpu.matmul %487, %318, %cst_172 {dimension_numbers = #tpu.dot_dimension_numbers<[1], [0], [0], [1], [0, 0, 1, 1], [], []>} : vector<8x128xf32>, vector<128x512xf32>, vector<8x512xf32> -> vector<8x512xf32>
    %505 = arith.addf %503, %504 : vector<8x512xf32>
    %506 = vector.extract_strided_slice %505 {offsets = [0, 0], sizes = [8, 384], strides = [1, 1]} : vector<8x512xf32> to vector<8x384xf32>
    %cst_173 = arith.constant 5.000000e-01 : f32
    %507 = vector.broadcast %cst_173 : f32 to vector<8x384xf32>
    %508 = arith.mulf %507, %506 : vector<8x384xf32>
    %509 = math.tanh %508 : vector<8x384xf32>
    %cst_174 = arith.constant 5.000000e-01 : f32
    %510 = vector.broadcast %cst_174 : f32 to vector<8x384xf32>
    %511 = arith.mulf %510, %509 : vector<8x384xf32>
    %cst_175 = arith.constant 5.000000e-01 : f32
    %512 = vector.broadcast %cst_175 : f32 to vector<8x384xf32>
    %513 = arith.addf %511, %512 : vector<8x384xf32>
    %514 = vector.extract_strided_slice %513 {offsets = [0, 0], sizes = [8, 128], strides = [1, 1]} : vector<8x384xf32> to vector<8x128xf32>
    %515 = vector.extract_strided_slice %513 {offsets = [0, 128], sizes = [8, 128], strides = [1, 1]} : vector<8x384xf32> to vector<8x128xf32>
    %516 = vector.extract_strided_slice %513 {offsets = [0, 256], sizes = [8, 128], strides = [1, 1]} : vector<8x384xf32> to vector<8x128xf32>
    %517 = vector.extract_strided_slice %505 {offsets = [0, 384], sizes = [8, 128], strides = [1, 1]} : vector<8x512xf32> to vector<8x128xf32>
    %518 = math.tanh %517 : vector<8x128xf32>
    %519 = arith.mulf %515, %485 : vector<8x128xf32>
    %520 = arith.mulf %514, %518 : vector<8x128xf32>
    %521 = arith.addf %519, %520 : vector<8x128xf32>
    %522 = math.tanh %521 : vector<8x128xf32>
    %523 = arith.mulf %516, %522 : vector<8x128xf32>
    %524 = vector.extract_strided_slice %523 {offsets = [0, 0], sizes = [8, 64], strides = [1, 1]} : vector<8x128xf32> to vector<8x64xf32>
    %525 = arith.index_cast %495 : i32 to index
    %c0_176 = arith.constant 0 : index
    %526 = vector.load %arg15[%525, %c0_176] : memref<64x128xf32, #tpu.memory_space<vmem>>, vector<8x64xf32>
    tpu.vector_store %arg15[%525, %c0_176], %524 {strides = array<i32>} : memref<64x128xf32, #tpu.memory_space<vmem>>, vector<8x64xf32>,
    %527 = vector.extract_strided_slice %523 {offsets = [0, 64], sizes = [8, 64], strides = [1, 1]} : vector<8x128xf32> to vector<8x64xf32>
    %528 = arith.index_cast %498 : i32 to index
    %c64_177 = arith.constant 64 : index
    %529 = vector.load %arg15[%528, %c64_177] : memref<64x128xf32, #tpu.memory_space<vmem>>, vector<8x64xf32>
    tpu.vector_store %arg15[%528, %c64_177], %527 {strides = array<i32>} : memref<64x128xf32, #tpu.memory_space<vmem>>, vector<8x64xf32>,
    %c6_i32_178 = arith.constant 6 : i32
    %c8_i32_179 = arith.constant 8 : i32
    %530 = arith.muli %c6_i32_178, %c8_i32_179 : i32
    %531 = tpu.assume_multiple %530, 8 : i32
    %c7_i32_180 = arith.constant 7 : i32
    %532 = arith.subi %c7_i32_180, %c6_i32_178 : i32
    %c8_i32_181 = arith.constant 8 : i32
    %533 = arith.muli %532, %c8_i32_181 : i32
    %534 = tpu.assume_multiple %533, 8 : i32
    %535 = arith.index_cast %531 : i32 to index
    %c0_182 = arith.constant 0 : index
    %536 = vector.load %arg14[%535, %c0_182] : memref<64x512xf32, #tpu.memory_space<vmem>>, vector<8x512xf32>
    %537 = arith.index_cast %534 : i32 to index
    %c0_183 = arith.constant 0 : index
    %538 = vector.load %arg14[%537, %c0_183] : memref<64x512xf32, #tpu.memory_space<vmem>>, vector<8x512xf32>
    %539 = arith.select %19, %536, %538 : vector<8x512xi1>, vector<8x512xf32>
    %cst_184 = arith.constant dense<0.000000e+00> : vector<8x512xf32>
    %540 = tpu.matmul %523, %318, %cst_184 {dimension_numbers = #tpu.dot_dimension_numbers<[1], [0], [0], [1], [0, 0, 1, 1], [], []>} : vector<8x128xf32>, vector<128x512xf32>, vector<8x512xf32> -> vector<8x512xf32>
    %541 = arith.addf %539, %540 : vector<8x512xf32>
    %542 = vector.extract_strided_slice %541 {offsets = [0, 0], sizes = [8, 384], strides = [1, 1]} : vector<8x512xf32> to vector<8x384xf32>
    %cst_185 = arith.constant 5.000000e-01 : f32
    %543 = vector.broadcast %cst_185 : f32 to vector<8x384xf32>
    %544 = arith.mulf %543, %542 : vector<8x384xf32>
    %545 = math.tanh %544 : vector<8x384xf32>
    %cst_186 = arith.constant 5.000000e-01 : f32
    %546 = vector.broadcast %cst_186 : f32 to vector<8x384xf32>
    %547 = arith.mulf %546, %545 : vector<8x384xf32>
    %cst_187 = arith.constant 5.000000e-01 : f32
    %548 = vector.broadcast %cst_187 : f32 to vector<8x384xf32>
    %549 = arith.addf %547, %548 : vector<8x384xf32>
    %550 = vector.extract_strided_slice %549 {offsets = [0, 0], sizes = [8, 128], strides = [1, 1]} : vector<8x384xf32> to vector<8x128xf32>
    %551 = vector.extract_strided_slice %549 {offsets = [0, 128], sizes = [8, 128], strides = [1, 1]} : vector<8x384xf32> to vector<8x128xf32>
    %552 = vector.extract_strided_slice %549 {offsets = [0, 256], sizes = [8, 128], strides = [1, 1]} : vector<8x384xf32> to vector<8x128xf32>
    %553 = vector.extract_strided_slice %541 {offsets = [0, 384], sizes = [8, 128], strides = [1, 1]} : vector<8x512xf32> to vector<8x128xf32>
    %554 = math.tanh %553 : vector<8x128xf32>
    %555 = arith.mulf %551, %521 : vector<8x128xf32>
    %556 = arith.mulf %550, %554 : vector<8x128xf32>
    %557 = arith.addf %555, %556 : vector<8x128xf32>
    %558 = math.tanh %557 : vector<8x128xf32>
    %559 = arith.mulf %552, %558 : vector<8x128xf32>
    %560 = vector.extract_strided_slice %559 {offsets = [0, 0], sizes = [8, 64], strides = [1, 1]} : vector<8x128xf32> to vector<8x64xf32>
    %561 = arith.index_cast %531 : i32 to index
    %c0_188 = arith.constant 0 : index
    %562 = vector.load %arg15[%561, %c0_188] : memref<64x128xf32, #tpu.memory_space<vmem>>, vector<8x64xf32>
    tpu.vector_store %arg15[%561, %c0_188], %560 {strides = array<i32>} : memref<64x128xf32, #tpu.memory_space<vmem>>, vector<8x64xf32>,
    %563 = vector.extract_strided_slice %559 {offsets = [0, 64], sizes = [8, 64], strides = [1, 1]} : vector<8x128xf32> to vector<8x64xf32>
    %564 = arith.index_cast %534 : i32 to index
    %c64_189 = arith.constant 64 : index
    %565 = vector.load %arg15[%564, %c64_189] : memref<64x128xf32, #tpu.memory_space<vmem>>, vector<8x64xf32>
    tpu.vector_store %arg15[%564, %c64_189], %563 {strides = array<i32>} : memref<64x128xf32, #tpu.memory_space<vmem>>, vector<8x64xf32>,
    %c7_i32_190 = arith.constant 7 : i32
    %c8_i32_191 = arith.constant 8 : i32
    %566 = arith.muli %c7_i32_190, %c8_i32_191 : i32
    %567 = tpu.assume_multiple %566, 8 : i32
    %c7_i32_192 = arith.constant 7 : i32
    %568 = arith.subi %c7_i32_192, %c7_i32_190 : i32
    %c8_i32_193 = arith.constant 8 : i32
    %569 = arith.muli %568, %c8_i32_193 : i32
    %570 = tpu.assume_multiple %569, 8 : i32
    %571 = arith.index_cast %567 : i32 to index
    %c0_194 = arith.constant 0 : index
    %572 = vector.load %arg14[%571, %c0_194] : memref<64x512xf32, #tpu.memory_space<vmem>>, vector<8x512xf32>
    %573 = arith.index_cast %570 : i32 to index
    %c0_195 = arith.constant 0 : index
    %574 = vector.load %arg14[%573, %c0_195] : memref<64x512xf32, #tpu.memory_space<vmem>>, vector<8x512xf32>
    %575 = arith.select %19, %572, %574 : vector<8x512xi1>, vector<8x512xf32>
    %cst_196 = arith.constant dense<0.000000e+00> : vector<8x512xf32>
    %576 = tpu.matmul %559, %318, %cst_196 {dimension_numbers = #tpu.dot_dimension_numbers<[1], [0], [0], [1], [0, 0, 1, 1], [], []>} : vector<8x128xf32>, vector<128x512xf32>, vector<8x512xf32> -> vector<8x512xf32>
    %577 = arith.addf %575, %576 : vector<8x512xf32>
    %578 = vector.extract_strided_slice %577 {offsets = [0, 0], sizes = [8, 384], strides = [1, 1]} : vector<8x512xf32> to vector<8x384xf32>
    %cst_197 = arith.constant 5.000000e-01 : f32
    %579 = vector.broadcast %cst_197 : f32 to vector<8x384xf32>
    %580 = arith.mulf %579, %578 : vector<8x384xf32>
    %581 = math.tanh %580 : vector<8x384xf32>
    %cst_198 = arith.constant 5.000000e-01 : f32
    %582 = vector.broadcast %cst_198 : f32 to vector<8x384xf32>
    %583 = arith.mulf %582, %581 : vector<8x384xf32>
    %cst_199 = arith.constant 5.000000e-01 : f32
    %584 = vector.broadcast %cst_199 : f32 to vector<8x384xf32>
    %585 = arith.addf %583, %584 : vector<8x384xf32>
    %586 = vector.extract_strided_slice %585 {offsets = [0, 0], sizes = [8, 128], strides = [1, 1]} : vector<8x384xf32> to vector<8x128xf32>
    %587 = vector.extract_strided_slice %585 {offsets = [0, 128], sizes = [8, 128], strides = [1, 1]} : vector<8x384xf32> to vector<8x128xf32>
    %588 = vector.extract_strided_slice %585 {offsets = [0, 256], sizes = [8, 128], strides = [1, 1]} : vector<8x384xf32> to vector<8x128xf32>
    %589 = vector.extract_strided_slice %577 {offsets = [0, 384], sizes = [8, 128], strides = [1, 1]} : vector<8x512xf32> to vector<8x128xf32>
    %590 = math.tanh %589 : vector<8x128xf32>
    %591 = arith.mulf %587, %557 : vector<8x128xf32>
    %592 = arith.mulf %586, %590 : vector<8x128xf32>
    %593 = arith.addf %591, %592 : vector<8x128xf32>
    %594 = math.tanh %593 : vector<8x128xf32>
    %595 = arith.mulf %588, %594 : vector<8x128xf32>
    %596 = vector.extract_strided_slice %595 {offsets = [0, 0], sizes = [8, 64], strides = [1, 1]} : vector<8x128xf32> to vector<8x64xf32>
    %597 = arith.index_cast %567 : i32 to index
    %c0_200 = arith.constant 0 : index
    %598 = vector.load %arg15[%597, %c0_200] : memref<64x128xf32, #tpu.memory_space<vmem>>, vector<8x64xf32>
    tpu.vector_store %arg15[%597, %c0_200], %596 {strides = array<i32>} : memref<64x128xf32, #tpu.memory_space<vmem>>, vector<8x64xf32>,
    %599 = vector.extract_strided_slice %595 {offsets = [0, 64], sizes = [8, 64], strides = [1, 1]} : vector<8x128xf32> to vector<8x64xf32>
    %600 = arith.index_cast %570 : i32 to index
    %c64_201 = arith.constant 64 : index
    %601 = vector.load %arg15[%600, %c64_201] : memref<64x128xf32, #tpu.memory_space<vmem>>, vector<8x64xf32>
    tpu.vector_store %arg15[%600, %c64_201], %599 {strides = array<i32>} : memref<64x128xf32, #tpu.memory_space<vmem>>, vector<8x64xf32>,
    %c7_i32_202 = arith.constant 7 : i32
    %c0_203 = arith.constant 0 : index
    %c0_204 = arith.constant 0 : index
    %602 = vector.load %arg15[%c0_203, %c0_204] : memref<64x128xf32, #tpu.memory_space<vmem>>, vector<64x128xf32>
    %c0_205 = arith.constant 0 : index
    %c0_206 = arith.constant 0 : index
    %603 = vector.load %arg8[%c0_205, %c0_206] : memref<128x512xf32, #tpu.memory_space<vmem>>, vector<128x512xf32>
    %cst_207 = arith.constant dense<0.000000e+00> : vector<64x512xf32>
    %604 = tpu.matmul %602, %603, %cst_207 {dimension_numbers = #tpu.dot_dimension_numbers<[1], [0], [0], [1], [0, 0, 1, 1], [], []>} : vector<64x128xf32>, vector<128x512xf32>, vector<64x512xf32> -> vector<64x512xf32>
    %c0_208 = arith.constant 0 : index
    %c0_209 = arith.constant 0 : index
    %605 = vector.load %arg10[%c0_208, %c0_209] : memref<1x512xf32, #tpu.memory_space<vmem>>, vector<1x512xf32>
    %606 = vector.broadcast %605 : vector<1x512xf32> to vector<64x512xf32>
    %607 = arith.addf %604, %606 : vector<64x512xf32>
    %c0_210 = arith.constant 0 : index
    %c0_211 = arith.constant 0 : index
    %608 = vector.load %arg14[%c0_210, %c0_211] : memref<64x512xf32, #tpu.memory_space<vmem>>, vector<64x512xf32>
    tpu.vector_store %arg14[%c0_210, %c0_211], %607 {strides = array<i32>} : memref<64x512xf32, #tpu.memory_space<vmem>>, vector<64x512xf32>,
    %c0_212 = arith.constant 0 : index
    %c0_213 = arith.constant 0 : index
    %609 = vector.load %arg9[%c0_212, %c0_213] : memref<128x512xf32, #tpu.memory_space<vmem>>, vector<128x512xf32>
    %c0_i32_214 = arith.constant 0 : i32
    %610 = tpu.assume_multiple %c0_i32_214, 8 : i32
    %c56_i32_215 = arith.constant 56 : i32
    %611 = tpu.assume_multiple %c56_i32_215, 8 : i32
    %612 = arith.index_cast %610 : i32 to index
    %c0_216 = arith.constant 0 : index
    %613 = vector.load %arg14[%612, %c0_216] : memref<64x512xf32, #tpu.memory_space<vmem>>, vector<8x512xf32>
    %614 = arith.index_cast %611 : i32 to index
    %c0_217 = arith.constant 0 : index
    %615 = vector.load %arg14[%614, %c0_217] : memref<64x512xf32, #tpu.memory_space<vmem>>, vector<8x512xf32>
    %616 = arith.select %19, %613, %615 : vector<8x512xi1>, vector<8x512xf32>
    %617 = vector.extract_strided_slice %616 {offsets = [0, 0], sizes = [8, 384], strides = [1, 1]} : vector<8x512xf32> to vector<8x384xf32>
    %cst_218 = arith.constant 5.000000e-01 : f32
    %618 = vector.broadcast %cst_218 : f32 to vector<8x384xf32>
    %619 = arith.mulf %618, %617 : vector<8x384xf32>
    %620 = math.tanh %619 : vector<8x384xf32>
    %cst_219 = arith.constant 5.000000e-01 : f32
    %621 = vector.broadcast %cst_219 : f32 to vector<8x384xf32>
    %622 = arith.mulf %621, %620 : vector<8x384xf32>
    %cst_220 = arith.constant 5.000000e-01 : f32
    %623 = vector.broadcast %cst_220 : f32 to vector<8x384xf32>
    %624 = arith.addf %622, %623 : vector<8x384xf32>
    %625 = vector.extract_strided_slice %624 {offsets = [0, 0], sizes = [8, 128], strides = [1, 1]} : vector<8x384xf32> to vector<8x128xf32>
    %626 = vector.extract_strided_slice %624 {offsets = [0, 128], sizes = [8, 128], strides = [1, 1]} : vector<8x384xf32> to vector<8x128xf32>
    %627 = vector.extract_strided_slice %624 {offsets = [0, 256], sizes = [8, 128], strides = [1, 1]} : vector<8x384xf32> to vector<8x128xf32>
    %628 = vector.extract_strided_slice %616 {offsets = [0, 384], sizes = [8, 128], strides = [1, 1]} : vector<8x512xf32> to vector<8x128xf32>
    %629 = math.tanh %628 : vector<8x128xf32>
    %630 = arith.mulf %626, %0 : vector<8x128xf32>
    %631 = arith.mulf %625, %629 : vector<8x128xf32>
    %632 = arith.addf %630, %631 : vector<8x128xf32>
    %633 = math.tanh %632 : vector<8x128xf32>
    %634 = arith.mulf %627, %633 : vector<8x128xf32>
    %c1_i32_221 = arith.constant 1 : i32
    %c8_i32_222 = arith.constant 8 : i32
    %635 = arith.muli %c1_i32_221, %c8_i32_222 : i32
    %636 = tpu.assume_multiple %635, 8 : i32
    %c7_i32_223 = arith.constant 7 : i32
    %637 = arith.subi %c7_i32_223, %c1_i32_221 : i32
    %c8_i32_224 = arith.constant 8 : i32
    %638 = arith.muli %637, %c8_i32_224 : i32
    %639 = tpu.assume_multiple %638, 8 : i32
    %640 = arith.index_cast %636 : i32 to index
    %c0_225 = arith.constant 0 : index
    %641 = vector.load %arg14[%640, %c0_225] : memref<64x512xf32, #tpu.memory_space<vmem>>, vector<8x512xf32>
    %642 = arith.index_cast %639 : i32 to index
    %c0_226 = arith.constant 0 : index
    %643 = vector.load %arg14[%642, %c0_226] : memref<64x512xf32, #tpu.memory_space<vmem>>, vector<8x512xf32>
    %644 = arith.select %19, %641, %643 : vector<8x512xi1>, vector<8x512xf32>
    %cst_227 = arith.constant dense<0.000000e+00> : vector<8x512xf32>
    %645 = tpu.matmul %634, %609, %cst_227 {dimension_numbers = #tpu.dot_dimension_numbers<[1], [0], [0], [1], [0, 0, 1, 1], [], []>} : vector<8x128xf32>, vector<128x512xf32>, vector<8x512xf32> -> vector<8x512xf32>
    %646 = arith.addf %644, %645 : vector<8x512xf32>
    %647 = vector.extract_strided_slice %646 {offsets = [0, 0], sizes = [8, 384], strides = [1, 1]} : vector<8x512xf32> to vector<8x384xf32>
    %cst_228 = arith.constant 5.000000e-01 : f32
    %648 = vector.broadcast %cst_228 : f32 to vector<8x384xf32>
    %649 = arith.mulf %648, %647 : vector<8x384xf32>
    %650 = math.tanh %649 : vector<8x384xf32>
    %cst_229 = arith.constant 5.000000e-01 : f32
    %651 = vector.broadcast %cst_229 : f32 to vector<8x384xf32>
    %652 = arith.mulf %651, %650 : vector<8x384xf32>
    %cst_230 = arith.constant 5.000000e-01 : f32
    %653 = vector.broadcast %cst_230 : f32 to vector<8x384xf32>
    %654 = arith.addf %652, %653 : vector<8x384xf32>
    %655 = vector.extract_strided_slice %654 {offsets = [0, 0], sizes = [8, 128], strides = [1, 1]} : vector<8x384xf32> to vector<8x128xf32>
    %656 = vector.extract_strided_slice %654 {offsets = [0, 128], sizes = [8, 128], strides = [1, 1]} : vector<8x384xf32> to vector<8x128xf32>
    %657 = vector.extract_strided_slice %654 {offsets = [0, 256], sizes = [8, 128], strides = [1, 1]} : vector<8x384xf32> to vector<8x128xf32>
    %658 = vector.extract_strided_slice %646 {offsets = [0, 384], sizes = [8, 128], strides = [1, 1]} : vector<8x512xf32> to vector<8x128xf32>
    %659 = math.tanh %658 : vector<8x128xf32>
    %660 = arith.mulf %656, %632 : vector<8x128xf32>
    %661 = arith.mulf %655, %659 : vector<8x128xf32>
    %662 = arith.addf %660, %661 : vector<8x128xf32>
    %663 = math.tanh %662 : vector<8x128xf32>
    %664 = arith.mulf %657, %663 : vector<8x128xf32>
    %c2_i32_231 = arith.constant 2 : i32
    %c8_i32_232 = arith.constant 8 : i32
    %665 = arith.muli %c2_i32_231, %c8_i32_232 : i32
    %666 = tpu.assume_multiple %665, 8 : i32
    %c7_i32_233 = arith.constant 7 : i32
    %667 = arith.subi %c7_i32_233, %c2_i32_231 : i32
    %c8_i32_234 = arith.constant 8 : i32
    %668 = arith.muli %667, %c8_i32_234 : i32
    %669 = tpu.assume_multiple %668, 8 : i32
    %670 = arith.index_cast %666 : i32 to index
    %c0_235 = arith.constant 0 : index
    %671 = vector.load %arg14[%670, %c0_235] : memref<64x512xf32, #tpu.memory_space<vmem>>, vector<8x512xf32>
    %672 = arith.index_cast %669 : i32 to index
    %c0_236 = arith.constant 0 : index
    %673 = vector.load %arg14[%672, %c0_236] : memref<64x512xf32, #tpu.memory_space<vmem>>, vector<8x512xf32>
    %674 = arith.select %19, %671, %673 : vector<8x512xi1>, vector<8x512xf32>
    %cst_237 = arith.constant dense<0.000000e+00> : vector<8x512xf32>
    %675 = tpu.matmul %664, %609, %cst_237 {dimension_numbers = #tpu.dot_dimension_numbers<[1], [0], [0], [1], [0, 0, 1, 1], [], []>} : vector<8x128xf32>, vector<128x512xf32>, vector<8x512xf32> -> vector<8x512xf32>
    %676 = arith.addf %674, %675 : vector<8x512xf32>
    %677 = vector.extract_strided_slice %676 {offsets = [0, 0], sizes = [8, 384], strides = [1, 1]} : vector<8x512xf32> to vector<8x384xf32>
    %cst_238 = arith.constant 5.000000e-01 : f32
    %678 = vector.broadcast %cst_238 : f32 to vector<8x384xf32>
    %679 = arith.mulf %678, %677 : vector<8x384xf32>
    %680 = math.tanh %679 : vector<8x384xf32>
    %cst_239 = arith.constant 5.000000e-01 : f32
    %681 = vector.broadcast %cst_239 : f32 to vector<8x384xf32>
    %682 = arith.mulf %681, %680 : vector<8x384xf32>
    %cst_240 = arith.constant 5.000000e-01 : f32
    %683 = vector.broadcast %cst_240 : f32 to vector<8x384xf32>
    %684 = arith.addf %682, %683 : vector<8x384xf32>
    %685 = vector.extract_strided_slice %684 {offsets = [0, 0], sizes = [8, 128], strides = [1, 1]} : vector<8x384xf32> to vector<8x128xf32>
    %686 = vector.extract_strided_slice %684 {offsets = [0, 128], sizes = [8, 128], strides = [1, 1]} : vector<8x384xf32> to vector<8x128xf32>
    %687 = vector.extract_strided_slice %684 {offsets = [0, 256], sizes = [8, 128], strides = [1, 1]} : vector<8x384xf32> to vector<8x128xf32>
    %688 = vector.extract_strided_slice %676 {offsets = [0, 384], sizes = [8, 128], strides = [1, 1]} : vector<8x512xf32> to vector<8x128xf32>
    %689 = math.tanh %688 : vector<8x128xf32>
    %690 = arith.mulf %686, %662 : vector<8x128xf32>
    %691 = arith.mulf %685, %689 : vector<8x128xf32>
    %692 = arith.addf %690, %691 : vector<8x128xf32>
    %693 = math.tanh %692 : vector<8x128xf32>
    %694 = arith.mulf %687, %693 : vector<8x128xf32>
    %c3_i32_241 = arith.constant 3 : i32
    %c8_i32_242 = arith.constant 8 : i32
    %695 = arith.muli %c3_i32_241, %c8_i32_242 : i32
    %696 = tpu.assume_multiple %695, 8 : i32
    %c7_i32_243 = arith.constant 7 : i32
    %697 = arith.subi %c7_i32_243, %c3_i32_241 : i32
    %c8_i32_244 = arith.constant 8 : i32
    %698 = arith.muli %697, %c8_i32_244 : i32
    %699 = tpu.assume_multiple %698, 8 : i32
    %700 = arith.index_cast %696 : i32 to index
    %c0_245 = arith.constant 0 : index
    %701 = vector.load %arg14[%700, %c0_245] : memref<64x512xf32, #tpu.memory_space<vmem>>, vector<8x512xf32>
    %702 = arith.index_cast %699 : i32 to index
    %c0_246 = arith.constant 0 : index
    %703 = vector.load %arg14[%702, %c0_246] : memref<64x512xf32, #tpu.memory_space<vmem>>, vector<8x512xf32>
    %704 = arith.select %19, %701, %703 : vector<8x512xi1>, vector<8x512xf32>
    %cst_247 = arith.constant dense<0.000000e+00> : vector<8x512xf32>
    %705 = tpu.matmul %694, %609, %cst_247 {dimension_numbers = #tpu.dot_dimension_numbers<[1], [0], [0], [1], [0, 0, 1, 1], [], []>} : vector<8x128xf32>, vector<128x512xf32>, vector<8x512xf32> -> vector<8x512xf32>
    %706 = arith.addf %704, %705 : vector<8x512xf32>
    %707 = vector.extract_strided_slice %706 {offsets = [0, 0], sizes = [8, 384], strides = [1, 1]} : vector<8x512xf32> to vector<8x384xf32>
    %cst_248 = arith.constant 5.000000e-01 : f32
    %708 = vector.broadcast %cst_248 : f32 to vector<8x384xf32>
    %709 = arith.mulf %708, %707 : vector<8x384xf32>
    %710 = math.tanh %709 : vector<8x384xf32>
    %cst_249 = arith.constant 5.000000e-01 : f32
    %711 = vector.broadcast %cst_249 : f32 to vector<8x384xf32>
    %712 = arith.mulf %711, %710 : vector<8x384xf32>
    %cst_250 = arith.constant 5.000000e-01 : f32
    %713 = vector.broadcast %cst_250 : f32 to vector<8x384xf32>
    %714 = arith.addf %712, %713 : vector<8x384xf32>
    %715 = vector.extract_strided_slice %714 {offsets = [0, 0], sizes = [8, 128], strides = [1, 1]} : vector<8x384xf32> to vector<8x128xf32>
    %716 = vector.extract_strided_slice %714 {offsets = [0, 128], sizes = [8, 128], strides = [1, 1]} : vector<8x384xf32> to vector<8x128xf32>
    %717 = vector.extract_strided_slice %714 {offsets = [0, 256], sizes = [8, 128], strides = [1, 1]} : vector<8x384xf32> to vector<8x128xf32>
    %718 = vector.extract_strided_slice %706 {offsets = [0, 384], sizes = [8, 128], strides = [1, 1]} : vector<8x512xf32> to vector<8x128xf32>
    %719 = math.tanh %718 : vector<8x128xf32>
    %720 = arith.mulf %716, %692 : vector<8x128xf32>
    %721 = arith.mulf %715, %719 : vector<8x128xf32>
    %722 = arith.addf %720, %721 : vector<8x128xf32>
    %723 = math.tanh %722 : vector<8x128xf32>
    %724 = arith.mulf %717, %723 : vector<8x128xf32>
    %c4_i32_251 = arith.constant 4 : i32
    %c8_i32_252 = arith.constant 8 : i32
    %725 = arith.muli %c4_i32_251, %c8_i32_252 : i32
    %726 = tpu.assume_multiple %725, 8 : i32
    %c7_i32_253 = arith.constant 7 : i32
    %727 = arith.subi %c7_i32_253, %c4_i32_251 : i32
    %c8_i32_254 = arith.constant 8 : i32
    %728 = arith.muli %727, %c8_i32_254 : i32
    %729 = tpu.assume_multiple %728, 8 : i32
    %730 = arith.index_cast %726 : i32 to index
    %c0_255 = arith.constant 0 : index
    %731 = vector.load %arg14[%730, %c0_255] : memref<64x512xf32, #tpu.memory_space<vmem>>, vector<8x512xf32>
    %732 = arith.index_cast %729 : i32 to index
    %c0_256 = arith.constant 0 : index
    %733 = vector.load %arg14[%732, %c0_256] : memref<64x512xf32, #tpu.memory_space<vmem>>, vector<8x512xf32>
    %734 = arith.select %19, %731, %733 : vector<8x512xi1>, vector<8x512xf32>
    %cst_257 = arith.constant dense<0.000000e+00> : vector<8x512xf32>
    %735 = tpu.matmul %724, %609, %cst_257 {dimension_numbers = #tpu.dot_dimension_numbers<[1], [0], [0], [1], [0, 0, 1, 1], [], []>} : vector<8x128xf32>, vector<128x512xf32>, vector<8x512xf32> -> vector<8x512xf32>
    %736 = arith.addf %734, %735 : vector<8x512xf32>
    %737 = vector.extract_strided_slice %736 {offsets = [0, 0], sizes = [8, 384], strides = [1, 1]} : vector<8x512xf32> to vector<8x384xf32>
    %cst_258 = arith.constant 5.000000e-01 : f32
    %738 = vector.broadcast %cst_258 : f32 to vector<8x384xf32>
    %739 = arith.mulf %738, %737 : vector<8x384xf32>
    %740 = math.tanh %739 : vector<8x384xf32>
    %cst_259 = arith.constant 5.000000e-01 : f32
    %741 = vector.broadcast %cst_259 : f32 to vector<8x384xf32>
    %742 = arith.mulf %741, %740 : vector<8x384xf32>
    %cst_260 = arith.constant 5.000000e-01 : f32
    %743 = vector.broadcast %cst_260 : f32 to vector<8x384xf32>
    %744 = arith.addf %742, %743 : vector<8x384xf32>
    %745 = vector.extract_strided_slice %744 {offsets = [0, 0], sizes = [8, 128], strides = [1, 1]} : vector<8x384xf32> to vector<8x128xf32>
    %746 = vector.extract_strided_slice %744 {offsets = [0, 128], sizes = [8, 128], strides = [1, 1]} : vector<8x384xf32> to vector<8x128xf32>
    %747 = vector.extract_strided_slice %744 {offsets = [0, 256], sizes = [8, 128], strides = [1, 1]} : vector<8x384xf32> to vector<8x128xf32>
    %748 = vector.extract_strided_slice %736 {offsets = [0, 384], sizes = [8, 128], strides = [1, 1]} : vector<8x512xf32> to vector<8x128xf32>
    %749 = math.tanh %748 : vector<8x128xf32>
    %750 = arith.mulf %746, %722 : vector<8x128xf32>
    %751 = arith.mulf %745, %749 : vector<8x128xf32>
    %752 = arith.addf %750, %751 : vector<8x128xf32>
    %753 = math.tanh %752 : vector<8x128xf32>
    %754 = arith.mulf %747, %753 : vector<8x128xf32>
    %c5_i32_261 = arith.constant 5 : i32
    %c8_i32_262 = arith.constant 8 : i32
    %755 = arith.muli %c5_i32_261, %c8_i32_262 : i32
    %756 = tpu.assume_multiple %755, 8 : i32
    %c7_i32_263 = arith.constant 7 : i32
    %757 = arith.subi %c7_i32_263, %c5_i32_261 : i32
    %c8_i32_264 = arith.constant 8 : i32
    %758 = arith.muli %757, %c8_i32_264 : i32
    %759 = tpu.assume_multiple %758, 8 : i32
    %760 = arith.index_cast %756 : i32 to index
    %c0_265 = arith.constant 0 : index
    %761 = vector.load %arg14[%760, %c0_265] : memref<64x512xf32, #tpu.memory_space<vmem>>, vector<8x512xf32>
    %762 = arith.index_cast %759 : i32 to index
    %c0_266 = arith.constant 0 : index
    %763 = vector.load %arg14[%762, %c0_266] : memref<64x512xf32, #tpu.memory_space<vmem>>, vector<8x512xf32>
    %764 = arith.select %19, %761, %763 : vector<8x512xi1>, vector<8x512xf32>
    %cst_267 = arith.constant dense<0.000000e+00> : vector<8x512xf32>
    %765 = tpu.matmul %754, %609, %cst_267 {dimension_numbers = #tpu.dot_dimension_numbers<[1], [0], [0], [1], [0, 0, 1, 1], [], []>} : vector<8x128xf32>, vector<128x512xf32>, vector<8x512xf32> -> vector<8x512xf32>
    %766 = arith.addf %764, %765 : vector<8x512xf32>
    %767 = vector.extract_strided_slice %766 {offsets = [0, 0], sizes = [8, 384], strides = [1, 1]} : vector<8x512xf32> to vector<8x384xf32>
    %cst_268 = arith.constant 5.000000e-01 : f32
    %768 = vector.broadcast %cst_268 : f32 to vector<8x384xf32>
    %769 = arith.mulf %768, %767 : vector<8x384xf32>
    %770 = math.tanh %769 : vector<8x384xf32>
    %cst_269 = arith.constant 5.000000e-01 : f32
    %771 = vector.broadcast %cst_269 : f32 to vector<8x384xf32>
    %772 = arith.mulf %771, %770 : vector<8x384xf32>
    %cst_270 = arith.constant 5.000000e-01 : f32
    %773 = vector.broadcast %cst_270 : f32 to vector<8x384xf32>
    %774 = arith.addf %772, %773 : vector<8x384xf32>
    %775 = vector.extract_strided_slice %774 {offsets = [0, 0], sizes = [8, 128], strides = [1, 1]} : vector<8x384xf32> to vector<8x128xf32>
    %776 = vector.extract_strided_slice %774 {offsets = [0, 128], sizes = [8, 128], strides = [1, 1]} : vector<8x384xf32> to vector<8x128xf32>
    %777 = vector.extract_strided_slice %774 {offsets = [0, 256], sizes = [8, 128], strides = [1, 1]} : vector<8x384xf32> to vector<8x128xf32>
    %778 = vector.extract_strided_slice %766 {offsets = [0, 384], sizes = [8, 128], strides = [1, 1]} : vector<8x512xf32> to vector<8x128xf32>
    %779 = math.tanh %778 : vector<8x128xf32>
    %780 = arith.mulf %776, %752 : vector<8x128xf32>
    %781 = arith.mulf %775, %779 : vector<8x128xf32>
    %782 = arith.addf %780, %781 : vector<8x128xf32>
    %783 = math.tanh %782 : vector<8x128xf32>
    %784 = arith.mulf %777, %783 : vector<8x128xf32>
    %c6_i32_271 = arith.constant 6 : i32
    %c8_i32_272 = arith.constant 8 : i32
    %785 = arith.muli %c6_i32_271, %c8_i32_272 : i32
    %786 = tpu.assume_multiple %785, 8 : i32
    %c7_i32_273 = arith.constant 7 : i32
    %787 = arith.subi %c7_i32_273, %c6_i32_271 : i32
    %c8_i32_274 = arith.constant 8 : i32
    %788 = arith.muli %787, %c8_i32_274 : i32
    %789 = tpu.assume_multiple %788, 8 : i32
    %790 = arith.index_cast %786 : i32 to index
    %c0_275 = arith.constant 0 : index
    %791 = vector.load %arg14[%790, %c0_275] : memref<64x512xf32, #tpu.memory_space<vmem>>, vector<8x512xf32>
    %792 = arith.index_cast %789 : i32 to index
    %c0_276 = arith.constant 0 : index
    %793 = vector.load %arg14[%792, %c0_276] : memref<64x512xf32, #tpu.memory_space<vmem>>, vector<8x512xf32>
    %794 = arith.select %19, %791, %793 : vector<8x512xi1>, vector<8x512xf32>
    %cst_277 = arith.constant dense<0.000000e+00> : vector<8x512xf32>
    %795 = tpu.matmul %784, %609, %cst_277 {dimension_numbers = #tpu.dot_dimension_numbers<[1], [0], [0], [1], [0, 0, 1, 1], [], []>} : vector<8x128xf32>, vector<128x512xf32>, vector<8x512xf32> -> vector<8x512xf32>
    %796 = arith.addf %794, %795 : vector<8x512xf32>
    %797 = vector.extract_strided_slice %796 {offsets = [0, 0], sizes = [8, 384], strides = [1, 1]} : vector<8x512xf32> to vector<8x384xf32>
    %cst_278 = arith.constant 5.000000e-01 : f32
    %798 = vector.broadcast %cst_278 : f32 to vector<8x384xf32>
    %799 = arith.mulf %798, %797 : vector<8x384xf32>
    %800 = math.tanh %799 : vector<8x384xf32>
    %cst_279 = arith.constant 5.000000e-01 : f32
    %801 = vector.broadcast %cst_279 : f32 to vector<8x384xf32>
    %802 = arith.mulf %801, %800 : vector<8x384xf32>
    %cst_280 = arith.constant 5.000000e-01 : f32
    %803 = vector.broadcast %cst_280 : f32 to vector<8x384xf32>
    %804 = arith.addf %802, %803 : vector<8x384xf32>
    %805 = vector.extract_strided_slice %804 {offsets = [0, 0], sizes = [8, 128], strides = [1, 1]} : vector<8x384xf32> to vector<8x128xf32>
    %806 = vector.extract_strided_slice %804 {offsets = [0, 128], sizes = [8, 128], strides = [1, 1]} : vector<8x384xf32> to vector<8x128xf32>
    %807 = vector.extract_strided_slice %804 {offsets = [0, 256], sizes = [8, 128], strides = [1, 1]} : vector<8x384xf32> to vector<8x128xf32>
    %808 = vector.extract_strided_slice %796 {offsets = [0, 384], sizes = [8, 128], strides = [1, 1]} : vector<8x512xf32> to vector<8x128xf32>
    %809 = math.tanh %808 : vector<8x128xf32>
    %810 = arith.mulf %806, %782 : vector<8x128xf32>
    %811 = arith.mulf %805, %809 : vector<8x128xf32>
    %812 = arith.addf %810, %811 : vector<8x128xf32>
    %813 = math.tanh %812 : vector<8x128xf32>
    %814 = arith.mulf %807, %813 : vector<8x128xf32>
    %c7_i32_281 = arith.constant 7 : i32
    %c8_i32_282 = arith.constant 8 : i32
    %815 = arith.muli %c7_i32_281, %c8_i32_282 : i32
    %816 = tpu.assume_multiple %815, 8 : i32
    %c7_i32_283 = arith.constant 7 : i32
    %817 = arith.subi %c7_i32_283, %c7_i32_281 : i32
    %c8_i32_284 = arith.constant 8 : i32
    %818 = arith.muli %817, %c8_i32_284 : i32
    %819 = tpu.assume_multiple %818, 8 : i32
    %820 = arith.index_cast %816 : i32 to index
    %c0_285 = arith.constant 0 : index
    %821 = vector.load %arg14[%820, %c0_285] : memref<64x512xf32, #tpu.memory_space<vmem>>, vector<8x512xf32>
    %822 = arith.index_cast %819 : i32 to index
    %c0_286 = arith.constant 0 : index
    %823 = vector.load %arg14[%822, %c0_286] : memref<64x512xf32, #tpu.memory_space<vmem>>, vector<8x512xf32>
    %824 = arith.select %19, %821, %823 : vector<8x512xi1>, vector<8x512xf32>
    %cst_287 = arith.constant dense<0.000000e+00> : vector<8x512xf32>
    %825 = tpu.matmul %814, %609, %cst_287 {dimension_numbers = #tpu.dot_dimension_numbers<[1], [0], [0], [1], [0, 0, 1, 1], [], []>} : vector<8x128xf32>, vector<128x512xf32>, vector<8x512xf32> -> vector<8x512xf32>
    %826 = arith.addf %824, %825 : vector<8x512xf32>
    %827 = vector.extract_strided_slice %826 {offsets = [0, 0], sizes = [8, 384], strides = [1, 1]} : vector<8x512xf32> to vector<8x384xf32>
    %cst_288 = arith.constant 5.000000e-01 : f32
    %828 = vector.broadcast %cst_288 : f32 to vector<8x384xf32>
    %829 = arith.mulf %828, %827 : vector<8x384xf32>
    %830 = math.tanh %829 : vector<8x384xf32>
    %cst_289 = arith.constant 5.000000e-01 : f32
    %831 = vector.broadcast %cst_289 : f32 to vector<8x384xf32>
    %832 = arith.mulf %831, %830 : vector<8x384xf32>
    %cst_290 = arith.constant 5.000000e-01 : f32
    %833 = vector.broadcast %cst_290 : f32 to vector<8x384xf32>
    %834 = arith.addf %832, %833 : vector<8x384xf32>
    %835 = vector.extract_strided_slice %834 {offsets = [0, 0], sizes = [8, 128], strides = [1, 1]} : vector<8x384xf32> to vector<8x128xf32>
    %836 = vector.extract_strided_slice %834 {offsets = [0, 128], sizes = [8, 128], strides = [1, 1]} : vector<8x384xf32> to vector<8x128xf32>
    %837 = vector.extract_strided_slice %834 {offsets = [0, 256], sizes = [8, 128], strides = [1, 1]} : vector<8x384xf32> to vector<8x128xf32>
    %838 = vector.extract_strided_slice %826 {offsets = [0, 384], sizes = [8, 128], strides = [1, 1]} : vector<8x512xf32> to vector<8x128xf32>
    %839 = math.tanh %838 : vector<8x128xf32>
    %840 = arith.mulf %836, %812 : vector<8x128xf32>
    %841 = arith.mulf %835, %839 : vector<8x128xf32>
    %842 = arith.addf %840, %841 : vector<8x128xf32>
    %843 = math.tanh %842 : vector<8x128xf32>
    %844 = arith.mulf %837, %843 : vector<8x128xf32>
    %c7_i32_291 = arith.constant 7 : i32
    %845 = vector.extract_strided_slice %844 {offsets = [0, 0], sizes = [8, 64], strides = [1, 1]} : vector<8x128xf32> to vector<8x64xf32>
    %846 = vector.extract_strided_slice %634 {offsets = [0, 64], sizes = [8, 64], strides = [1, 1]} : vector<8x128xf32> to vector<8x64xf32>
    %847 = tpu.concatenate %845, %846 in 1 : vector<8x64xf32>, vector<8x64xf32> -> vector<8x128xf32>
    %c0_292 = arith.constant 0 : index
    %c0_293 = arith.constant 0 : index
    %848 = vector.load %arg11[%c0_292, %c0_293] : memref<128x2xf32, #tpu.memory_space<vmem>>, vector<128x2xf32>
    %cst_294 = arith.constant dense<0.000000e+00> : vector<8x2xf32>
    %849 = tpu.matmul %847, %848, %cst_294 {dimension_numbers = #tpu.dot_dimension_numbers<[1], [0], [0], [1], [0, 0, 1, 1], [], []>} : vector<8x128xf32>, vector<128x2xf32>, vector<8x2xf32> -> vector<8x2xf32>
    %c0_295 = arith.constant 0 : index
    %c0_296 = arith.constant 0 : index
    %850 = vector.load %arg12[%c0_295, %c0_296] : memref<1x2xf32, #tpu.memory_space<vmem>>, vector<1x2xf32>
    %851 = vector.broadcast %850 : vector<1x2xf32> to vector<8x2xf32>
    %852 = arith.addf %849, %851 : vector<8x2xf32>
    %c0_297 = arith.constant 0 : index
    %c0_298 = arith.constant 0 : index
    %853 = vector.load %arg13[%c0_297, %c0_298] : memref<8x2xf32, #tpu.memory_space<vmem>>, vector<8x2xf32>
    tpu.vector_store %arg13[%c0_297, %c0_298], %852 {strides = array<i32>} : memref<8x2xf32, #tpu.memory_space<vmem>>, vector<8x2xf32>,
    return
  }
  func.func @transform_0(%arg0: i32) -> (i32, i32) {
    %c0_i32 = arith.constant 0 : i32
    %c0_i32_0 = arith.constant 0 : i32
    %c0_i32_1 = arith.constant 0 : i32
    return %c0_i32, %c0_i32_0 : i32, i32
  }
  func.func @transform_1(%arg0: i32) -> (i32, i32) {
    %c0_i32 = arith.constant 0 : i32
    %c0_i32_0 = arith.constant 0 : i32
    %c0_i32_1 = arith.constant 0 : i32
    return %c0_i32, %c0_i32_0 : i32, i32
  }
  func.func @transform_2(%arg0: i32) -> (i32, i32) {
    %c0_i32 = arith.constant 0 : i32
    %c0_i32_0 = arith.constant 0 : i32
    %c0_i32_1 = arith.constant 0 : i32
    return %c0_i32, %c0_i32_0 : i32, i32
  }
  func.func @transform_3(%arg0: i32) -> (i32, i32) {
    %c0_i32 = arith.constant 0 : i32
    %c0_i32_0 = arith.constant 0 : i32
    %c0_i32_1 = arith.constant 0 : i32
    return %c0_i32, %c0_i32_0 : i32, i32
  }
  func.func @transform_4(%arg0: i32) -> (i32, i32) {
    %c0_i32 = arith.constant 0 : i32
    %c0_i32_0 = arith.constant 0 : i32
    %c0_i32_1 = arith.constant 0 : i32
    return %c0_i32, %c0_i32_0 : i32, i32
  }
  func.func @transform_5(%arg0: i32) -> (i32, i32) {
    %c0_i32 = arith.constant 0 : i32
    %c0_i32_0 = arith.constant 0 : i32
    %c0_i32_1 = arith.constant 0 : i32
    return %c0_i32, %c0_i32_0 : i32, i32
  }
  func.func @transform_6(%arg0: i32) -> (i32, i32) {
    %c0_i32 = arith.constant 0 : i32
    %c0_i32_0 = arith.constant 0 : i32
    %c0_i32_1 = arith.constant 0 : i32
    return %c0_i32, %c0_i32_0 : i32, i32
  }
  func.func @transform_7(%arg0: i32) -> (i32, i32) {
    %c0_i32 = arith.constant 0 : i32
    %c0_i32_0 = arith.constant 0 : i32
    %c0_i32_1 = arith.constant 0 : i32
    return %c0_i32, %c0_i32_0 : i32, i32
  }
  func.func @transform_8(%arg0: i32) -> (i32, i32) {
    %c0_i32 = arith.constant 0 : i32
    %c0_i32_0 = arith.constant 0 : i32
    %c0_i32_1 = arith.constant 0 : i32
    return %c0_i32, %c0_i32_0 : i32, i32
  }
  func.func @transform_9(%arg0: i32) -> (i32, i32) {
    %c0_i32 = arith.constant 0 : i32
    %c0_i32_0 = arith.constant 0 : i32
    %c0_i32_1 = arith.constant 0 : i32
    return %c0_i32, %c0_i32_0 : i32, i32
  }
  func.func @transform_10(%arg0: i32) -> (i32, i32) {
    %c0_i32 = arith.constant 0 : i32
    %c0_i32_0 = arith.constant 0 : i32
    %c0_i32_1 = arith.constant 0 : i32
    return %c0_i32, %c0_i32_0 : i32, i32
  }
  func.func @transform_11(%arg0: i32) -> (i32, i32) {
    %c0_i32 = arith.constant 0 : i32
    %c0_i32_0 = arith.constant 0 : i32
    %c0_i32_1 = arith.constant 0 : i32
    return %c0_i32, %c0_i32_0 : i32, i32
  }
  func.func @transform_12(%arg0: i32) -> (i32, i32) {
    %c0_i32 = arith.constant 0 : i32
    %c0_i32_0 = arith.constant 0 : i32
    %c0_i32_1 = arith.constant 0 : i32
    return %c0_i32, %c0_i32_0 : i32, i32
  }
}

</mosaic_0001>

<llo_original>
// kernel: solace_lstm_forward.1
$region0: #{solace_lstm_forward.1}
  #allocation0 [shape = 'u32[]', space=smem, size = 0x4, offset = 0x4, fixed_abs, tag = 'smem constant byte address 0x4 - core index']
  #allocation1 [shape = 'u32[72,128]{1,0:T(1,128)}', space=vmem, size = 0x9000, scoped, tag = 'internal scratch']
  #allocation2 [shape = 'f32[64,512]{1,0:T(8,128)}', space=vmem, size = 0x20000, scoped, tag = 'scratch operand']
  #allocation3 [shape = 'f32[64,128]{1,0:T(8,128)}', space=vmem, size = 0x8000, scoped, tag = 'scratch operand']
  %s0 = inlined_call_operand.vmem [shape: f32[64,6], index: 0, kind: input, shape index: {}]
  %s1 = inlined_call_operand.vmem [shape: f32[6,512], index: 1, kind: input, shape index: {}]
  %s2 = inlined_call_operand.hbm [shape: f32[128,512], index: 2, kind: input, shape index: {}]
  %s3 = inlined_call_operand.vmem [shape: f32[1,512], index: 3, kind: input, shape index: {}]
  %s4 = inlined_call_operand.hbm [shape: f32[128,512], index: 4, kind: input, shape index: {}]
  %s5 = inlined_call_operand.hbm [shape: f32[128,512], index: 5, kind: input, shape index: {}]
  %s6 = inlined_call_operand.vmem [shape: f32[1,512], index: 6, kind: input, shape index: {}]
  %s7 = inlined_call_operand.hbm [shape: f32[128,512], index: 7, kind: input, shape index: {}]
  %s8 = inlined_call_operand.hbm [shape: f32[128,512], index: 8, kind: input, shape index: {}]
  %s9 = inlined_call_operand.vmem [shape: f32[1,512], index: 9, kind: input, shape index: {}]
  %s10 = inlined_call_operand.vmem [shape: f32[128,2], index: 10, kind: input, shape index: {}]
  %s11 = inlined_call_operand.vmem [shape: f32[1,2], index: 11, kind: input, shape index: {}]
  %s12 = inlined_call_operand.vmem [shape: f32[8,2], index: 12, kind: output, shape index: {}]
  %s13 = sld [smem:[#allocation0]]
  $region78: #{solace_lstm_forward.1} parent=0
    _
  %s15 = ssub.s32 1, %s13
  %s16 = scalar_select 0, %s15, %s13
  $region1: #{solace_lstm_forward.1} parent=0
    #allocation4 [shape = 'u8[262144]{0}', space=vmem, size = 0x40000, scoped, tag = 'input window, operand 2, single buffered']
    #allocation5 [shape = 's32[1]{0}', space=sflag, size = 0x4, scoped, tag = 'scoped memory for solace_lstm_forward.1']
    #allocation6 [shape = 'u8[262144]{0}', space=vmem, size = 0x40000, scoped, tag = 'input window, operand 4, single buffered']
    #allocation7 [shape = 's32[1]{0}', space=sflag, size = 0x4, scoped, tag = 'scoped memory for solace_lstm_forward.1']
    #allocation8 [shape = 'u8[262144]{0}', space=vmem, size = 0x40000, scoped, tag = 'input window, operand 5, single buffered']
    #allocation9 [shape = 'u8[262144]{0}', space=vmem, size = 0x40000, scoped, tag = 'input window, operand 7, single buffered']
    #allocation10 [shape = 's32[1]{0}', space=sflag, size = 0x4, scoped, tag = 'scoped memory for solace_lstm_forward.1']
    #allocation11 [shape = 'u8[262144]{0}', space=vmem, size = 0x40000, scoped, tag = 'input window, operand 8, single buffered']
    %17 = vsyncpa [#allocation5], 0
    %18 = vsyncpa [#allocation7], 0
    %19 = vsyncpa [#allocation10], 0
    // Predicated region
    $region2: #{solace_lstm_forward.1} parent=1 // pred_check
      _
    $region3: #{solace_lstm_forward.1} parent=1 // pred_check_branch
      %21 = sbr.rel (0) target = $region5
    $region4: #{solace_lstm_forward.1} parent=1 // pred_region
      _
    $region5: #{solace_lstm_forward.1} parent=1 // pred_fallthru
      _
    // Predicated region
    $region6: #{solace_lstm_forward.1} parent=1 // pred_check
      _
    $region7: #{solace_lstm_forward.1} parent=1 // pred_check_branch
      %23 = sbr.rel (0) target = $region9
    $region8: #{solace_lstm_forward.1} parent=1 // pred_region
      _
    $region9: #{solace_lstm_forward.1} parent=1 // pred_fallthru
      _
    // Predicated region
    $region10: #{solace_lstm_forward.1} parent=1 // pred_check
      _
    $region11: #{solace_lstm_forward.1} parent=1 // pred_check_branch
      %25 = sbr.rel (0) target = $region13
    $region12: #{solace_lstm_forward.1} parent=1 // pred_region
      %27 = vsyncadd [#allocation5], 0
      %s28 = sshll.u32 %s2, 4
      %s29 = int_to_ptr.hbm [resolvable:$true] %s28
      %s30 = sshll.u32 [#allocation4], 4
      %s31 = int_to_ptr.vmem [resolvable:$true] %s30
      %36 = dma.hbm_to_vmem [thread:$0]  %s29, 8192, %s31, [#allocation5], 512, 512, 32
    $region13: #{solace_lstm_forward.1} parent=1 // pred_fallthru
      _
    // Predicated region
    $region14: #{solace_lstm_forward.1} parent=1 // pred_check
      _
    $region15: #{solace_lstm_forward.1} parent=1 // pred_check_branch
      %38 = sbr.rel (0) target = $region17
    $region16: #{solace_lstm_forward.1} parent=1 // pred_region
      _
    $region17: #{solace_lstm_forward.1} parent=1 // pred_fallthru
      _
    // Predicated region
    $region18: #{solace_lstm_forward.1} parent=1 // pred_check
      _
    $region19: #{solace_lstm_forward.1} parent=1 // pred_check_branch
      %40 = sbr.rel (0) target = $region21
    $region20: #{solace_lstm_forward.1} parent=1 // pred_region
      %42 = vsyncadd [#allocation7], 0
      %s43 = sshll.u32 %s4, 4
      %s44 = int_to_ptr.hbm [resolvable:$true] %s43
      %s45 = sshll.u32 [#allocation6], 4
      %s46 = int_to_ptr.vmem [resolvable:$true] %s45
      %51 = dma.hbm_to_vmem [thread:$0]  %s44, 8192, %s46, [#allocation7], 512, 512, 32
    $region21: #{solace_lstm_forward.1} parent=1 // pred_fallthru
      _
    // Predicated region
    $region22: #{solace_lstm_forward.1} parent=1 // pred_check
      _
    $region23: #{solace_lstm_forward.1} parent=1 // pred_check_branch
      %53 = sbr.rel (0) target = $region25
    $region24: #{solace_lstm_forward.1} parent=1 // pred_region
      %55 = vsyncadd [#allocation7], 0
      %s56 = sshll.u32 %s5, 4
      %s57 = int_to_ptr.hbm [resolvable:$true] %s56
      %s58 = sshll.u32 [#allocation8], 4
      %s59 = int_to_ptr.vmem [resolvable:$true] %s58
      %64 = dma.hbm_to_vmem [thread:$0]  %s57, 8192, %s59, [#allocation7], 512, 512, 32
    $region25: #{solace_lstm_forward.1} parent=1 // pred_fallthru
      _
    // Predicated region
    $region26: #{solace_lstm_forward.1} parent=1 // pred_check
      _
    $region27: #{solace_lstm_forward.1} parent=1 // pred_check_branch
      %66 = sbr.rel (0) target = $region29
    $region28: #{solace_lstm_forward.1} parent=1 // pred_region
      _
    $region29: #{solace_lstm_forward.1} parent=1 // pred_fallthru
      _
    // Predicated region
    $region30: #{solace_lstm_forward.1} parent=1 // pred_check
      _
    $region31: #{solace_lstm_forward.1} parent=1 // pred_check_branch
      %68 = sbr.rel (0) target = $region33
    $region32: #{solace_lstm_forward.1} parent=1 // pred_region
      %70 = vsyncadd [#allocation10], 0
      %s71 = sshll.u32 %s7, 4
      %s72 = int_to_ptr.hbm [resolvable:$true] %s71
      %s73 = sshll.u32 [#allocation9], 4
      %s74 = int_to_ptr.vmem [resolvable:$true] %s73
      %79 = dma.hbm_to_vmem [thread:$0]  %s72, 8192, %s74, [#allocation10], 512, 512, 32
    $region33: #{solace_lstm_forward.1} parent=1 // pred_fallthru
      _
    // Predicated region
    $region34: #{solace_lstm_forward.1} parent=1 // pred_check
      _
    $region35: #{solace_lstm_forward.1} parent=1 // pred_check_branch
      %81 = sbr.rel (0) target = $region37
    $region36: #{solace_lstm_forward.1} parent=1 // pred_region
      %83 = vsyncadd [#allocation10], 0
      %s84 = sshll.u32 %s8, 4
      %s85 = int_to_ptr.hbm [resolvable:$true] %s84
      %s86 = sshll.u32 [#allocation11], 4
      %s87 = int_to_ptr.vmem [resolvable:$true] %s86
      %92 = dma.hbm_to_vmem [thread:$0]  %s85, 8192, %s87, [#allocation10], 512, 512, 32
    $region37: #{solace_lstm_forward.1} parent=1 // pred_fallthru
      _
    // Predicated region
    $region38: #{solace_lstm_forward.1} parent=1 // pred_check
      _
    $region39: #{solace_lstm_forward.1} parent=1 // pred_check_branch
      %94 = sbr.rel (0) target = $region41
    $region40: #{solace_lstm_forward.1} parent=1 // pred_region
      _
    $region41: #{solace_lstm_forward.1} parent=1 // pred_fallthru
      _
    // Predicated region
    $region42: #{solace_lstm_forward.1} parent=1 // pred_check
      _
    $region43: #{solace_lstm_forward.1} parent=1 // pred_check_branch
      %96 = sbr.rel (0) target = $region45
    $region44: #{solace_lstm_forward.1} parent=1 // pred_region
      _
    $region45: #{solace_lstm_forward.1} parent=1 // pred_fallthru
      _
    // Predicated region
    $region46: #{solace_lstm_forward.1} parent=1 // pred_check
      _
    $region47: #{solace_lstm_forward.1} parent=1 // pred_check_branch
      %98 = sbr.rel (0) target = $region49
    $region48: #{solace_lstm_forward.1} parent=1 // pred_region
      _
    $region49: #{solace_lstm_forward.1} parent=1 // pred_fallthru
      _
    // Predicated region
    $region50: #{solace_lstm_forward.1} parent=1 // pred_check
      _
    $region51: #{solace_lstm_forward.1} parent=1 // pred_check_branch
      %100 = sbr.rel (0) target = $region53
    $region52: #{solace_lstm_forward.1} parent=1 // pred_region
      %102 = dma.done [#allocation5], 8192
    $region53: #{solace_lstm_forward.1} parent=1 // pred_fallthru
      _
    // Predicated region
    $region54: #{solace_lstm_forward.1} parent=1 // pred_check
      _
    $region55: #{solace_lstm_forward.1} parent=1 // pred_check_branch
      %104 = sbr.rel (0) target = $region57
    $region56: #{solace_lstm_forward.1} parent=1 // pred_region
      %106 = dma.done [#allocation7], 8192
    $region57: #{solace_lstm_forward.1} parent=1 // pred_fallthru
      _
    // Predicated region
    $region58: #{solace_lstm_forward.1} parent=1 // pred_check
      _
    $region59: #{solace_lstm_forward.1} parent=1 // pred_check_branch
      %108 = sbr.rel (0) target = $region61
    $region60: #{solace_lstm_forward.1} parent=1 // pred_region
      %110 = dma.done [#allocation7], 8192
    $region61: #{solace_lstm_forward.1} parent=1 // pred_fallthru
      _
    // Predicated region
    $region62: #{solace_lstm_forward.1} parent=1 // pred_check
      _
    $region63: #{solace_lstm_forward.1} parent=1 // pred_check_branch
      %112 = sbr.rel (0) target = $region65
    $region64: #{solace_lstm_forward.1} parent=1 // pred_region
      %114 = dma.done [#allocation10], 8192
    $region65: #{solace_lstm_forward.1} parent=1 // pred_fallthru
      _
    // Predicated region
    $region66: #{solace_lstm_forward.1} parent=1 // pred_check
      _
    $region67: #{solace_lstm_forward.1} parent=1 // pred_check_branch
      %116 = sbr.rel (0) target = $region69
    $region68: #{solace_lstm_forward.1} parent=1 // pred_region
      %118 = dma.done [#allocation10], 8192
    $region69: #{solace_lstm_forward.1} parent=1 // pred_fallthru
      _
    %v119 = vlaneseq
    %v120 = vand.u32 %v119, 127
    %v121 = vadd.s32 %v120, 128
    %v122 = vadd.s32 %v120, 256
    %v123 = vadd.s32 %v120, 384
    %vm124 = vcmp.lt.s32.totalorder %v120, 0
    %v125 = vsub.s32 0, %v120
    %v126 = vsel %vm124, %v125, %v120
    %v127 = vshrl.u32 %v126, 7
    %v128 = vand.u32 %v126, 127
    %v129 = vsub.s32 0, %v128
    %v130 = vsel %vm124, %v129, %v128
    %vm131 = vcmp.lt.s32.totalorder %v121, 0
    %v132 = vsub.s32 0, %v121
    %v133 = vsel %vm131, %v132, %v121
    %v134 = vshrl.u32 %v133, 7
    %v135 = vand.u32 %v133, 127
    %v136 = vsub.s32 0, %v135
    %v137 = vsel %vm131, %v136, %v135
    %vm138 = vcmp.lt.s32.totalorder %v122, 0
    %v139 = vsub.s32 0, %v122
    %v140 = vsel %vm138, %v139, %v122
    %v141 = vshrl.u32 %v140, 7
    %v142 = vand.u32 %v140, 127
    %v143 = vsub.s32 0, %v142
    %v144 = vsel %vm138, %v143, %v142
    %vm145 = vcmp.lt.s32.totalorder %v123, 0
    %v146 = vsub.s32 0, %v123
    %v147 = vsel %vm145, %v146, %v123
    %v148 = vshrl.u32 %v147, 7
    %v149 = vand.u32 %v147, 127
    %v150 = vsub.s32 0, %v149
    %v151 = vsel %vm145, %v150, %v149
    %vm152 = vcmp.ne.s32.totalorder %v130, 0
    %vm153 = vcmp.ne.s32.totalorder %v137, 0
    %vm154 = vcmp.ne.s32.totalorder %v144, 0
    %vm155 = vcmp.ne.s32.totalorder %v151, 0
    %vm156 = vcmp.lt.s32.totalorder %v130, 0
    %vm157 = vcmp.lt.s32.totalorder %v137, 0
    %vm158 = vcmp.lt.s32.totalorder %v144, 0
    %vm159 = vcmp.lt.s32.totalorder %v151, 0
    %vm160 = vmand %vm156, %vm152
    %vm161 = vmand %vm157, %vm153
    %vm162 = vmand %vm158, %vm154
    %vm163 = vmand %vm159, %vm155
    %v164 = vadd.s32 %v130, 128
    %v165 = vadd.s32 %v137, 128
    %v166 = vadd.s32 %v144, 128
    %v167 = vadd.s32 %v151, 128
    %v168 = vsel %vm160, %v164, %v130
    %v169 = vsel %vm161, %v165, %v137
    %v170 = vsel %vm162, %v166, %v144
    %v171 = vsel %vm163, %v167, %v151
    %vm172 = vcmp.lt.s32.totalorder %v168, 64
    %vm173 = vcmp.lt.s32.totalorder %v169, 64
    %vm174 = vcmp.lt.s32.totalorder %v170, 64
    %vm175 = vcmp.lt.s32.totalorder %v171, 64
    %v176 = vld [vmem:[%s0] sm:$0xff]
    %v177 = vld [vmem:[%s0 + $0x8] sm:$0xff]
    %v178 = vld [vmem:[%s0 + $0x10] sm:$0xff]
    %v179 = vld [vmem:[%s0 + $0x18] sm:$0xff]
    %v180 = vld [vmem:[%s0 + $0x20] sm:$0xff]
    %v181 = vld [vmem:[%s0 + $0x28] sm:$0xff]
    %v182 = vld [vmem:[%s0 + $0x30] sm:$0xff]
    %v183 = vld [vmem:[%s0 + $0x38] sm:$0xff]
    %v184 = vld [vmem:[%s1] sm:$0x3f]
    %v185 = vld [vmem:[%s1 + $0x8] sm:$0x3f]
    %v186 = vld [vmem:[%s1 + $0x10] sm:$0x3f]
    %v187 = vld [vmem:[%s1 + $0x18] sm:$0x3f]
    %v188 = vld [vmem:[%s3] sm:$0xf]
    %v190 = vperm.slane %v188, 0
    %v191 = vperm.slane %v188, 1
    %v192 = vperm.slane %v188, 2
    %v193 = vperm.slane %v188, 3
    %vm198 = vcmask 48128
    %v200 = vsel %vm198, %v176, 0
    %v203 = vsel %vm198, %v177, 0
    %v206 = vsel %vm198, %v178, 0
    %v209 = vsel %vm198, %v179, 0
    %v212 = vsel %vm198, %v180, 0
    %v215 = vsel %vm198, %v181, 0
    %v218 = vsel %vm198, %v182, 0
    %v221 = vsel %vm198, %v183, 0
    %vm223 = vcmask 1045504
    %v225 = vsel %vm223, %v184, 0
    %v228 = vsel %vm223, %v185, 0
    %v231 = vsel %vm223, %v186, 0
    %v234 = vsel %vm223, %v187, 0
    %236 = vmatpush.msra.mxu0 0.0
    %237 = vmatpush.msra.mxu0 0.0
    %238 = vmatpush.msra.mxu0 0.0
    %239 = vmatpush.msra.mxu0 0.0
    %240 = vmatpush.msra.mxu0 0.0
    %241 = vmatpush.msra.mxu0 0.0
    %242 = vmatpush.msra.mxu0 0.0
    %243 = vmatpush.msra.mxu0 0.0
    %244 = vmatpush.msra.mxu0 0.0
    %245 = vmatpush.msra.mxu0 0.0
    %246 = vmatpush.msra.mxu0 0.0
    %247 = vmatpush.msra.mxu0 0.0
    %248 = vmatpush.msra.mxu0 0.0
    %249 = vmatpush.msra.mxu0 0.0
    %250 = vmatpush.msra.mxu0 0.0
    %251 = vmatpush.msra.mxu0 %v225
    %252 = vmatmul.f32.gmra.mxu0 %v200
    %v253 = vpop.f32.mrf.mxu0
    %v254 = vadd.f32 %v190, %v253
    %255 = vmatmul.f32.gmra.mxu0 %v203
    %v256 = vpop.f32.mrf.mxu0
    %v257 = vadd.f32 %v190, %v256
    %258 = vmatmul.f32.gmra.mxu0 %v206
    %v259 = vpop.f32.mrf.mxu0
    %v260 = vadd.f32 %v190, %v259
    %261 = vmatmul.f32.gmra.mxu0 %v209
    %v262 = vpop.f32.mrf.mxu0
    %v263 = vadd.f32 %v190, %v262
    %264 = vmatmul.f32.gmra.mxu0 %v212
    %v265 = vpop.f32.mrf.mxu0
    %v266 = vadd.f32 %v190, %v265
    %267 = vmatmul.f32.gmra.mxu0 %v215
    %v268 = vpop.f32.mrf.mxu0
    %v269 = vadd.f32 %v190, %v268
    %270 = vmatmul.f32.gmra.mxu0 %v218
    %v271 = vpop.f32.mrf.mxu0
    %v272 = vadd.f32 %v190, %v271
    %273 = vmatmul.f32.gmra.mxu0 %v221
    %v274 = vpop.f32.mrf.mxu0
    %v275 = vadd.f32 %v190, %v274
    %276 = vdwg.mxu0
    %277 = vmatpush.msra.mxu0 0.0
    %278 = vmatpush.msra.mxu0 0.0
    %279 = vmatpush.msra.mxu0 0.0
    %280 = vmatpush.msra.mxu0 0.0
    %281 = vmatpush.msra.mxu0 0.0
    %282 = vmatpush.msra.mxu0 0.0
    %283 = vmatpush.msra.mxu0 0.0
    %284 = vmatpush.msra.mxu0 0.0
    %285 = vmatpush.msra.mxu0 0.0
    %286 = vmatpush.msra.mxu0 0.0
    %287 = vmatpush.msra.mxu0 0.0
    %288 = vmatpush.msra.mxu0 0.0
    %289 = vmatpush.msra.mxu0 0.0
    %290 = vmatpush.msra.mxu0 0.0
    %291 = vmatpush.msra.mxu0 0.0
    %292 = vmatpush.msra.mxu0 %v228
    %293 = vmatmul.f32.gmra.mxu0 %v200
    %v294 = vpop.f32.mrf.mxu0
    %v295 = vadd.f32 %v191, %v294
    %296 = vmatmul.f32.gmra.mxu0 %v203
    %v297 = vpop.f32.mrf.mxu0
    %v298 = vadd.f32 %v191, %v297
    %299 = vmatmul.f32.gmra.mxu0 %v206
    %v300 = vpop.f32.mrf.mxu0
    %v301 = vadd.f32 %v191, %v300
    %302 = vmatmul.f32.gmra.mxu0 %v209
    %v303 = vpop.f32.mrf.mxu0
    %v304 = vadd.f32 %v191, %v303
    %305 = vmatmul.f32.gmra.mxu0 %v212
    %v306 = vpop.f32.mrf.mxu0
    %v307 = vadd.f32 %v191, %v306
    %308 = vmatmul.f32.gmra.mxu0 %v215
    %v309 = vpop.f32.mrf.mxu0
    %v310 = vadd.f32 %v191, %v309
    %311 = vmatmul.f32.gmra.mxu0 %v218
    %v312 = vpop.f32.mrf.mxu0
    %v313 = vadd.f32 %v191, %v312
    %314 = vmatmul.f32.gmra.mxu0 %v221
    %v315 = vpop.f32.mrf.mxu0
    %v316 = vadd.f32 %v191, %v315
    %317 = vdwg.mxu0
    %318 = vmatpush.msra.mxu0 0.0
    %319 = vmatpush.msra.mxu0 0.0
    %320 = vmatpush.msra.mxu0 0.0
    %321 = vmatpush.msra.mxu0 0.0
    %322 = vmatpush.msra.mxu0 0.0
    %323 = vmatpush.msra.mxu0 0.0
    %324 = vmatpush.msra.mxu0 0.0
    %325 = vmatpush.msra.mxu0 0.0
    %326 = vmatpush.msra.mxu0 0.0
    %327 = vmatpush.msra.mxu0 0.0
    %328 = vmatpush.msra.mxu0 0.0
    %329 = vmatpush.msra.mxu0 0.0
    %330 = vmatpush.msra.mxu0 0.0
    %331 = vmatpush.msra.mxu0 0.0
    %332 = vmatpush.msra.mxu0 0.0
    %333 = vmatpush.msra.mxu0 %v231
    %334 = vmatmul.f32.gmra.mxu0 %v200
    %v335 = vpop.f32.mrf.mxu0
    %v336 = vadd.f32 %v192, %v335
    %337 = vmatmul.f32.gmra.mxu0 %v203
    %v338 = vpop.f32.mrf.mxu0
    %v339 = vadd.f32 %v192, %v338
    %340 = vmatmul.f32.gmra.mxu0 %v206
    %v341 = vpop.f32.mrf.mxu0
    %v342 = vadd.f32 %v192, %v341
    %343 = vmatmul.f32.gmra.mxu0 %v209
    %v344 = vpop.f32.mrf.mxu0
    %v345 = vadd.f32 %v192, %v344
    %346 = vmatmul.f32.gmra.mxu0 %v212
    %v347 = vpop.f32.mrf.mxu0
    %v348 = vadd.f32 %v192, %v347
    %349 = vmatmul.f32.gmra.mxu0 %v215
    %v350 = vpop.f32.mrf.mxu0
    %v351 = vadd.f32 %v192, %v350
    %352 = vmatmul.f32.gmra.mxu0 %v218
    %v353 = vpop.f32.mrf.mxu0
    %v354 = vadd.f32 %v192, %v353
    %355 = vmatmul.f32.gmra.mxu0 %v221
    %v356 = vpop.f32.mrf.mxu0
    %v357 = vadd.f32 %v192, %v356
    %358 = vdwg.mxu0
    %359 = vmatpush.msra.mxu0 0.0
    %360 = vmatpush.msra.mxu0 0.0
    %361 = vmatpush.msra.mxu0 0.0
    %362 = vmatpush.msra.mxu0 0.0
    %363 = vmatpush.msra.mxu0 0.0
    %364 = vmatpush.msra.mxu0 0.0
    %365 = vmatpush.msra.mxu0 0.0
    %366 = vmatpush.msra.mxu0 0.0
    %367 = vmatpush.msra.mxu0 0.0
    %368 = vmatpush.msra.mxu0 0.0
    %369 = vmatpush.msra.mxu0 0.0
    %370 = vmatpush.msra.mxu0 0.0
    %371 = vmatpush.msra.mxu0 0.0
    %372 = vmatpush.msra.mxu0 0.0
    %373 = vmatpush.msra.mxu0 0.0
    %374 = vmatpush.msra.mxu0 %v234
    %375 = vmatmul.f32.gmra.mxu0 %v200
    %v376 = vpop.f32.mrf.mxu0
    %v377 = vadd.f32 %v193, %v376
    %378 = vmatmul.f32.gmra.mxu0 %v203
    %v379 = vpop.f32.mrf.mxu0
    %v380 = vadd.f32 %v193, %v379
    %381 = vmatmul.f32.gmra.mxu0 %v206
    %v382 = vpop.f32.mrf.mxu0
    %v383 = vadd.f32 %v193, %v382
    %384 = vmatmul.f32.gmra.mxu0 %v209
    %v385 = vpop.f32.mrf.mxu0
    %v386 = vadd.f32 %v193, %v385
    %387 = vmatmul.f32.gmra.mxu0 %v212
    %v388 = vpop.f32.mrf.mxu0
    %v389 = vadd.f32 %v193, %v388
    %390 = vmatmul.f32.gmra.mxu0 %v215
    %v391 = vpop.f32.mrf.mxu0
    %v392 = vadd.f32 %v193, %v391
    %393 = vmatmul.f32.gmra.mxu0 %v218
    %v394 = vpop.f32.mrf.mxu0
    %v395 = vadd.f32 %v193, %v394
    %396 = vmatmul.f32.gmra.mxu0 %v221
    %v397 = vpop.f32.mrf.mxu0
    %v398 = vadd.f32 %v193, %v397
    %399 = vdwg.mxu0
    %400 = vst [vmem:[#allocation2] sm:$0xff] %v254
    %401 = vst [vmem:[#allocation2 + $0x8] sm:$0xff] %v295
    %402 = vst [vmem:[#allocation2 + $0x10] sm:$0xff] %v336
    %403 = vst [vmem:[#allocation2 + $0x18] sm:$0xff] %v377
    %404 = vst [vmem:[#allocation2 + $0x20] sm:$0xff] %v257
    %405 = vst [vmem:[#allocation2 + $0x28] sm:$0xff] %v298
    %406 = vst [vmem:[#allocation2 + $0x30] sm:$0xff] %v339
    %407 = vst [vmem:[#allocation2 + $0x38] sm:$0xff] %v380
    %408 = vst [vmem:[#allocation2 + $0x40] sm:$0xff] %v260
    %409 = vst [vmem:[#allocation2 + $0x48] sm:$0xff] %v301
    %410 = vst [vmem:[#allocation2 + $0x50] sm:$0xff] %v342
    %411 = vst [vmem:[#allocation2 + $0x58] sm:$0xff] %v383
    %412 = vst [vmem:[#allocation2 + $0x60] sm:$0xff] %v263
    %413 = vst [vmem:[#allocation2 + $0x68] sm:$0xff] %v304
    %414 = vst [vmem:[#allocation2 + $0x70] sm:$0xff] %v345
    %415 = vst [vmem:[#allocation2 + $0x78] sm:$0xff] %v386
    %416 = vst [vmem:[#allocation2 + $0x80] sm:$0xff] %v266
    %417 = vst [vmem:[#allocation2 + $0x88] sm:$0xff] %v307
    %418 = vst [vmem:[#allocation2 + $0x90] sm:$0xff] %v348
    %419 = vst [vmem:[#allocation2 + $0x98] sm:$0xff] %v389
    %420 = vst [vmem:[#allocation2 + $0xa0] sm:$0xff] %v269
    %421 = vst [vmem:[#allocation2 + $0xa8] sm:$0xff] %v310
    %422 = vst [vmem:[#allocation2 + $0xb0] sm:$0xff] %v351
    %423 = vst [vmem:[#allocation2 + $0xb8] sm:$0xff] %v392
    %424 = vst [vmem:[#allocation2 + $0xc0] sm:$0xff] %v272
    %425 = vst [vmem:[#allocation2 + $0xc8] sm:$0xff] %v313
    %426 = vst [vmem:[#allocation2 + $0xd0] sm:$0xff] %v354
    %427 = vst [vmem:[#allocation2 + $0xd8] sm:$0xff] %v395
    %428 = vst [vmem:[#allocation2 + $0xe0] sm:$0xff] %v275
    %429 = vst [vmem:[#allocation2 + $0xe8] sm:$0xff] %v316
    %430 = vst [vmem:[#allocation2 + $0xf0] sm:$0xff] %v357
    %431 = vst [vmem:[#allocation2 + $0xf8] sm:$0xff] %v398
    %v432 = vld [vmem:[#allocation4] sm:$0xff]
    %v433 = vld [vmem:[#allocation4 + $0x8] sm:$0xff]
    %v434 = vld [vmem:[#allocation4 + $0x10] sm:$0xff]
    %v435 = vld [vmem:[#allocation4 + $0x18] sm:$0xff]
    %v436 = vld [vmem:[#allocation4 + $0x20] sm:$0xff]
    %v437 = vld [vmem:[#allocation4 + $0x28] sm:$0xff]
    %v438 = vld [vmem:[#allocation4 + $0x30] sm:$0xff]
    %v439 = vld [vmem:[#allocation4 + $0x38] sm:$0xff]
    %v440 = vld [vmem:[#allocation4 + $0x40] sm:$0xff]
    %v441 = vld [vmem:[#allocation4 + $0x48] sm:$0xff]
    %v442 = vld [vmem:[#allocation4 + $0x50] sm:$0xff]
    %v443 = vld [vmem:[#allocation4 + $0x58] sm:$0xff]
    %v444 = vld [vmem:[#allocation4 + $0x60] sm:$0xff]
    %v445 = vld [vmem:[#allocation4 + $0x68] sm:$0xff]
    %v446 = vld [vmem:[#allocation4 + $0x70] sm:$0xff]
    %v447 = vld [vmem:[#allocation4 + $0x78] sm:$0xff]
    %v448 = vld [vmem:[#allocation4 + $0x80] sm:$0xff]
    %v449 = vld [vmem:[#allocation4 + $0x88] sm:$0xff]
    %v450 = vld [vmem:[#allocation4 + $0x90] sm:$0xff]
    %v451 = vld [vmem:[#allocation4 + $0x98] sm:$0xff]
    %v452 = vld [vmem:[#allocation4 + $0xa0] sm:$0xff]
    %v453 = vld [vmem:[#allocation4 + $0xa8] sm:$0xff]
    %v454 = vld [vmem:[#allocation4 + $0xb0] sm:$0xff]
    %v455 = vld [vmem:[#allocation4 + $0xb8] sm:$0xff]
    %v456 = vld [vmem:[#allocation4 + $0xc0] sm:$0xff]
    %v457 = vld [vmem:[#allocation4 + $0xc8] sm:$0xff]
    %v458 = vld [vmem:[#allocation4 + $0xd0] sm:$0xff]
    %v459 = vld [vmem:[#allocation4 + $0xd8] sm:$0xff]
    %v460 = vld [vmem:[#allocation4 + $0xe0] sm:$0xff]
    %v461 = vld [vmem:[#allocation4 + $0xe8] sm:$0xff]
    %v462 = vld [vmem:[#allocation4 + $0xf0] sm:$0xff]
    %v463 = vld [vmem:[#allocation4 + $0xf8] sm:$0xff]
    %v464 = vld [vmem:[#allocation4 + $0x100] sm:$0xff]
    %v465 = vld [vmem:[#allocation4 + $0x108] sm:$0xff]
    %v466 = vld [vmem:[#allocation4 + $0x110] sm:$0xff]
    %v467 = vld [vmem:[#allocation4 + $0x118] sm:$0xff]
    %v468 = vld [vmem:[#allocation4 + $0x120] sm:$0xff]
    %v469 = vld [vmem:[#allocation4 + $0x128] sm:$0xff]
    %v470 = vld [vmem:[#allocation4 + $0x130] sm:$0xff]
    %v471 = vld [vmem:[#allocation4 + $0x138] sm:$0xff]
    %v472 = vld [vmem:[#allocation4 + $0x140] sm:$0xff]
    %v473 = vld [vmem:[#allocation4 + $0x148] sm:$0xff]
    %v474 = vld [vmem:[#allocation4 + $0x150] sm:$0xff]
    %v475 = vld [vmem:[#allocation4 + $0x158] sm:$0xff]
    %v476 = vld [vmem:[#allocation4 + $0x160] sm:$0xff]
    %v477 = vld [vmem:[#allocation4 + $0x168] sm:$0xff]
    %v478 = vld [vmem:[#allocation4 + $0x170] sm:$0xff]
    %v479 = vld [vmem:[#allocation4 + $0x178] sm:$0xff]
    %v480 = vld [vmem:[#allocation4 + $0x180] sm:$0xff]
    %v481 = vld [vmem:[#allocation4 + $0x188] sm:$0xff]
    %v482 = vld [vmem:[#allocation4 + $0x190] sm:$0xff]
    %v483 = vld [vmem:[#allocation4 + $0x198] sm:$0xff]
    %v484 = vld [vmem:[#allocation4 + $0x1a0] sm:$0xff]
    %v485 = vld [vmem:[#allocation4 + $0x1a8] sm:$0xff]
    %v486 = vld [vmem:[#allocation4 + $0x1b0] sm:$0xff]
    %v487 = vld [vmem:[#allocation4 + $0x1b8] sm:$0xff]
    %v488 = vld [vmem:[#allocation4 + $0x1c0] sm:$0xff]
    %v489 = vld [vmem:[#allocation4 + $0x1c8] sm:$0xff]
    %v490 = vld [vmem:[#allocation4 + $0x1d0] sm:$0xff]
    %v491 = vld [vmem:[#allocation4 + $0x1d8] sm:$0xff]
    %v492 = vld [vmem:[#allocation4 + $0x1e0] sm:$0xff]
    %v493 = vld [vmem:[#allocation4 + $0x1e8] sm:$0xff]
    %v494 = vld [vmem:[#allocation4 + $0x1f0] sm:$0xff]
    %v495 = vld [vmem:[#allocation4 + $0x1f8] sm:$0xff]
    %s496 = smul.u32 0, 4
    %s497 = smul.addr %s496, 8
    %s498 = scalar_lea.vmem [#allocation2], %s497
    %v499 = vld [vmem:[%s498] sm:$0xff]
    %v500 = vld [vmem:[%s498 + $0x8] sm:$0xff]
    %v501 = vld [vmem:[%s498 + $0x10] sm:$0xff]
    %v502 = vld [vmem:[%s498 + $0x18] sm:$0xff]
    %s503 = smul.u32 7, 4
    %s504 = smul.addr %s503, 8
    %s505 = scalar_lea.vmem [#allocation2], %s504
    %v506 = vld [vmem:[%s505] sm:$0xff]
    %v507 = vld [vmem:[%s505 + $0x8] sm:$0xff]
    %v508 = vld [vmem:[%s505 + $0x10] sm:$0xff]
    %v509 = vld [vmem:[%s505 + $0x18] sm:$0xff]
    %v510 = vsel %vm172, %v499, %v506
    %v511 = vsel %vm173, %v500, %v507
    %v512 = vsel %vm174, %v501, %v508
    %v513 = vsel %vm175, %v502, %v509
    %v514 = vmul.f32 %v510, 0.5
    %v515 = vmul.f32 %v511, 0.5
    %v516 = vmul.f32 %v512, 0.5
    %v517 = vtanh.pop %v514
    %v518 = vtanh.pop %v515
    %v519 = vtanh.pop %v516
    %v520 = vmul.f32 %v517, 0.5
    %v521 = vmul.f32 %v518, 0.5
    %v522 = vmul.f32 %v519, 0.5
    %v523 = vadd.f32 %v520, 0.5
    %v524 = vadd.f32 %v521, 0.5
    %v525 = vadd.f32 %v522, 0.5
    %v526 = vtanh.pop %v513
    %v527 = vmul.f32 %v524, 0.0
    %v528 = vmul.f32 %v523, %v526
    %v529 = vadd.f32 %v527, %v528
    %v530 = vtanh.pop %v529
    %v531 = vmul.f32 %v525, %v530
    %vm532 = vcmask 523264
    %533 = vst.msk [vmem:[#allocation3] sm:$0xff] %vm532, %v531
    %s534 = scalar_lea.vmem [#allocation3], 56
    %vm535 = vcmask 1048064
    %536 = vst.msk [vmem:[%s534] sm:$0xff] %vm535, %v531
    %s537 = smul.u32 1, 4
    %s538 = smul.addr %s537, 8
    %s539 = scalar_lea.vmem [#allocation2], %s538
    %v540 = vld [vmem:[%s539] sm:$0xff]
    %v541 = vld [vmem:[%s539 + $0x8] sm:$0xff]
    %v542 = vld [vmem:[%s539 + $0x10] sm:$0xff]
    %v543 = vld [vmem:[%s539 + $0x18] sm:$0xff]
    %s544 = smul.u32 6, 4
    %s545 = smul.addr %s544, 8
    %s546 = scalar_lea.vmem [#allocation2], %s545
    %v547 = vld [vmem:[%s546] sm:$0xff]
    %v548 = vld [vmem:[%s546 + $0x8] sm:$0xff]
    %v549 = vld [vmem:[%s546 + $0x10] sm:$0xff]
    %v550 = vld [vmem:[%s546 + $0x18] sm:$0xff]
    %v551 = vsel %vm172, %v540, %v547
    %v552 = vsel %vm173, %v541, %v548
    %v553 = vsel %vm174, %v542, %v549
    %v554 = vsel %vm175, %v543, %v550
    %555 = vmatpush.msra.mxu0 %v492
    %556 = vmatpush.msra.mxu0 %v488
    %557 = vmatpush.msra.mxu0 %v484
    %558 = vmatpush.msra.mxu0 %v480
    %559 = vmatpush.msra.mxu0 %v476
    %560 = vmatpush.msra.mxu0 %v472
    %561 = vmatpush.msra.mxu0 %v468
    %562 = vmatpush.msra.mxu0 %v464
    %563 = vmatpush.msra.mxu0 %v460
    %564 = vmatpush.msra.mxu0 %v456
    %565 = vmatpush.msra.mxu0 %v452
    %566 = vmatpush.msra.mxu0 %v448
    %567 = vmatpush.msra.mxu0 %v444
    %568 = vmatpush.msra.mxu0 %v440
    %569 = vmatpush.msra.mxu0 %v436
    %570 = vmatpush.msra.mxu0 %v432
    %571 = vmatmul.f32.gmra.mxu0 %v531
    %v572 = vpop.f32.mrf.mxu0
    %v573 = vadd.f32 0.0, %v572
    %574 = vdwg.mxu0
    %575 = vmatpush.msra.mxu0 %v493
    %576 = vmatpush.msra.mxu0 %v489
    %577 = vmatpush.msra.mxu0 %v485
    %578 = vmatpush.msra.mxu0 %v481
    %579 = vmatpush.msra.mxu0 %v477
    %580 = vmatpush.msra.mxu0 %v473
    %581 = vmatpush.msra.mxu0 %v469
    %582 = vmatpush.msra.mxu0 %v465
    %583 = vmatpush.msra.mxu0 %v461
    %584 = vmatpush.msra.mxu0 %v457
    %585 = vmatpush.msra.mxu0 %v453
    %586 = vmatpush.msra.mxu0 %v449
    %587 = vmatpush.msra.mxu0 %v445
    %588 = vmatpush.msra.mxu0 %v441
    %589 = vmatpush.msra.mxu0 %v437
    %590 = vmatpush.msra.mxu0 %v433
    %591 = vmatmul.f32.gmra.mxu0 %v531
    %v592 = vpop.f32.mrf.mxu0
    %v593 = vadd.f32 0.0, %v592
    %594 = vdwg.mxu0
    %595 = vmatpush.msra.mxu0 %v494
    %596 = vmatpush.msra.mxu0 %v490
    %597 = vmatpush.msra.mxu0 %v486
    %598 = vmatpush.msra.mxu0 %v482
    %599 = vmatpush.msra.mxu0 %v478
    %600 = vmatpush.msra.mxu0 %v474
    %601 = vmatpush.msra.mxu0 %v470
    %602 = vmatpush.msra.mxu0 %v466
    %603 = vmatpush.msra.mxu0 %v462
    %604 = vmatpush.msra.mxu0 %v458
    %605 = vmatpush.msra.mxu0 %v454
    %606 = vmatpush.msra.mxu0 %v450
    %607 = vmatpush.msra.mxu0 %v446
    %608 = vmatpush.msra.mxu0 %v442
    %609 = vmatpush.msra.mxu0 %v438
    %610 = vmatpush.msra.mxu0 %v434
    %611 = vmatmul.f32.gmra.mxu0 %v531
    %v612 = vpop.f32.mrf.mxu0
    %v613 = vadd.f32 0.0, %v612
    %614 = vdwg.mxu0
    %615 = vmatpush.msra.mxu0 %v495
    %616 = vmatpush.msra.mxu0 %v491
    %617 = vmatpush.msra.mxu0 %v487
    %618 = vmatpush.msra.mxu0 %v483
    %619 = vmatpush.msra.mxu0 %v479
    %620 = vmatpush.msra.mxu0 %v475
    %621 = vmatpush.msra.mxu0 %v471
    %622 = vmatpush.msra.mxu0 %v467
    %623 = vmatpush.msra.mxu0 %v463
    %624 = vmatpush.msra.mxu0 %v459
    %625 = vmatpush.msra.mxu0 %v455
    %626 = vmatpush.msra.mxu0 %v451
    %627 = vmatpush.msra.mxu0 %v447
    %628 = vmatpush.msra.mxu0 %v443
    %629 = vmatpush.msra.mxu0 %v439
    %630 = vmatpush.msra.mxu0 %v435
    %631 = vmatmul.f32.gmra.mxu0 %v531
    %v632 = vpop.f32.mrf.mxu0
    %v633 = vadd.f32 0.0, %v632
    %634 = vdwg.mxu0
    %v635 = vadd.f32 %v551, %v573
    %v636 = vadd.f32 %v552, %v593
    %v637 = vadd.f32 %v553, %v613
    %v638 = vadd.f32 %v554, %v633
    %v639 = vmul.f32 %v635, 0.5
    %v640 = vmul.f32 %v636, 0.5
    %v641 = vmul.f32 %v637, 0.5
    %v642 = vtanh.pop %v639
    %v643 = vtanh.pop %v640
    %v644 = vtanh.pop %v641
    %v645 = vmul.f32 %v642, 0.5
    %v646 = vmul.f32 %v643, 0.5
    %v647 = vmul.f32 %v644, 0.5
    %v648 = vadd.f32 %v645, 0.5
    %v649 = vadd.f32 %v646, 0.5
    %v650 = vadd.f32 %v647, 0.5
    %v651 = vtanh.pop %v638
    %v652 = vmul.f32 %v649, %v529
    %v653 = vmul.f32 %v648, %v651
    %v654 = vadd.f32 %v652, %v653
    %v655 = vtanh.pop %v654
    %v656 = vmul.f32 %v650, %v655
    %s657 = scalar_lea.vmem [#allocation3], 8
    %658 = vst.msk [vmem:[%s657] sm:$0xff] %vm532, %v656
    %s659 = scalar_lea.vmem [#allocation3], 48
    %660 = vst.msk [vmem:[%s659] sm:$0xff] %vm535, %v656
    %s661 = smul.u32 2, 4
    %s662 = smul.addr %s661, 8
    %s663 = scalar_lea.vmem [#allocation2], %s662
    %v664 = vld [vmem:[%s663] sm:$0xff]
    %v665 = vld [vmem:[%s663 + $0x8] sm:$0xff]
    %v666 = vld [vmem:[%s663 + $0x10] sm:$0xff]
    %v667 = vld [vmem:[%s663 + $0x18] sm:$0xff]
    %s668 = smul.u32 5, 4
    %s669 = smul.addr %s668, 8
    %s670 = scalar_lea.vmem [#allocation2], %s669
    %v671 = vld [vmem:[%s670] sm:$0xff]
    %v672 = vld [vmem:[%s670 + $0x8] sm:$0xff]
    %v673 = vld [vmem:[%s670 + $0x10] sm:$0xff]
    %v674 = vld [vmem:[%s670 + $0x18] sm:$0xff]
    %v675 = vsel %vm172, %v664, %v671
    %v676 = vsel %vm173, %v665, %v672
    %v677 = vsel %vm174, %v666, %v673
    %v678 = vsel %vm175, %v667, %v674
    %679 = vmatpush.msra.mxu0 %v492
    %680 = vmatpush.msra.mxu0 %v488
    %681 = vmatpush.msra.mxu0 %v484
    %682 = vmatpush.msra.mxu0 %v480
    %683 = vmatpush.msra.mxu0 %v476
    %684 = vmatpush.msra.mxu0 %v472
    %685 = vmatpush.msra.mxu0 %v468
    %686 = vmatpush.msra.mxu0 %v464
    %687 = vmatpush.msra.mxu0 %v460
    %688 = vmatpush.msra.mxu0 %v456
    %689 = vmatpush.msra.mxu0 %v452
    %690 = vmatpush.msra.mxu0 %v448
    %691 = vmatpush.msra.mxu0 %v444
    %692 = vmatpush.msra.mxu0 %v440
    %693 = vmatpush.msra.mxu0 %v436
    %694 = vmatpush.msra.mxu0 %v432
    %695 = vmatmul.f32.gmra.mxu0 %v656
    %v696 = vpop.f32.mrf.mxu0
    %v697 = vadd.f32 0.0, %v696
    %698 = vdwg.mxu0
    %699 = vmatpush.msra.mxu0 %v493
    %700 = vmatpush.msra.mxu0 %v489
    %701 = vmatpush.msra.mxu0 %v485
    %702 = vmatpush.msra.mxu0 %v481
    %703 = vmatpush.msra.mxu0 %v477
    %704 = vmatpush.msra.mxu0 %v473
    %705 = vmatpush.msra.mxu0 %v469
    %706 = vmatpush.msra.mxu0 %v465
    %707 = vmatpush.msra.mxu0 %v461
    %708 = vmatpush.msra.mxu0 %v457
    %709 = vmatpush.msra.mxu0 %v453
    %710 = vmatpush.msra.mxu0 %v449
    %711 = vmatpush.msra.mxu0 %v445
    %712 = vmatpush.msra.mxu0 %v441
    %713 = vmatpush.msra.mxu0 %v437
    %714 = vmatpush.msra.mxu0 %v433
    %715 = vmatmul.f32.gmra.mxu0 %v656
    %v716 = vpop.f32.mrf.mxu0
    %v717 = vadd.f32 0.0, %v716
    %718 = vdwg.mxu0
    %719 = vmatpush.msra.mxu0 %v494
    %720 = vmatpush.msra.mxu0 %v490
    %721 = vmatpush.msra.mxu0 %v486
    %722 = vmatpush.msra.mxu0 %v482
    %723 = vmatpush.msra.mxu0 %v478
    %724 = vmatpush.msra.mxu0 %v474
    %725 = vmatpush.msra.mxu0 %v470
    %726 = vmatpush.msra.mxu0 %v466
    %727 = vmatpush.msra.mxu0 %v462
    %728 = vmatpush.msra.mxu0 %v458
    %729 = vmatpush.msra.mxu0 %v454
    %730 = vmatpush.msra.mxu0 %v450
    %731 = vmatpush.msra.mxu0 %v446
    %732 = vmatpush.msra.mxu0 %v442
    %733 = vmatpush.msra.mxu0 %v438
    %734 = vmatpush.msra.mxu0 %v434
    %735 = vmatmul.f32.gmra.mxu0 %v656
    %v736 = vpop.f32.mrf.mxu0
    %v737 = vadd.f32 0.0, %v736
    %738 = vdwg.mxu0
    %739 = vmatpush.msra.mxu0 %v495
    %740 = vmatpush.msra.mxu0 %v491
    %741 = vmatpush.msra.mxu0 %v487
    %742 = vmatpush.msra.mxu0 %v483
    %743 = vmatpush.msra.mxu0 %v479
    %744 = vmatpush.msra.mxu0 %v475
    %745 = vmatpush.msra.mxu0 %v471
    %746 = vmatpush.msra.mxu0 %v467
    %747 = vmatpush.msra.mxu0 %v463
    %748 = vmatpush.msra.mxu0 %v459
    %749 = vmatpush.msra.mxu0 %v455
    %750 = vmatpush.msra.mxu0 %v451
    %751 = vmatpush.msra.mxu0 %v447
    %752 = vmatpush.msra.mxu0 %v443
    %753 = vmatpush.msra.mxu0 %v439
    %754 = vmatpush.msra.mxu0 %v435
    %755 = vmatmul.f32.gmra.mxu0 %v656
    %v756 = vpop.f32.mrf.mxu0
    %v757 = vadd.f32 0.0, %v756
    %758 = vdwg.mxu0
    %v759 = vadd.f32 %v675, %v697
    %v760 = vadd.f32 %v676, %v717
    %v761 = vadd.f32 %v677, %v737
    %v762 = vadd.f32 %v678, %v757
    %v763 = vmul.f32 %v759, 0.5
    %v764 = vmul.f32 %v760, 0.5
    %v765 = vmul.f32 %v761, 0.5
    %v766 = vtanh.pop %v763
    %v767 = vtanh.pop %v764
    %v768 = vtanh.pop %v765
    %v769 = vmul.f32 %v766, 0.5
    %v770 = vmul.f32 %v767, 0.5
    %v771 = vmul.f32 %v768, 0.5
    %v772 = vadd.f32 %v769, 0.5
    %v773 = vadd.f32 %v770, 0.5
    %v774 = vadd.f32 %v771, 0.5
    %v775 = vtanh.pop %v762
    %v776 = vmul.f32 %v773, %v654
    %v777 = vmul.f32 %v772, %v775
    %v778 = vadd.f32 %v776, %v777
    %v779 = vtanh.pop %v778
    %v780 = vmul.f32 %v774, %v779
    %s781 = scalar_lea.vmem [#allocation3], 16
    %782 = vst.msk [vmem:[%s781] sm:$0xff] %vm532, %v780
    %s783 = scalar_lea.vmem [#allocation3], 40
    %784 = vst.msk [vmem:[%s783] sm:$0xff] %vm535, %v780
    %s785 = smul.u32 3, 4
    %s786 = smul.addr %s785, 8
    %s787 = scalar_lea.vmem [#allocation2], %s786
    %v788 = vld [vmem:[%s787] sm:$0xff]
    %v789 = vld [vmem:[%s787 + $0x8] sm:$0xff]
    %v790 = vld [vmem:[%s787 + $0x10] sm:$0xff]
    %v791 = vld [vmem:[%s787 + $0x18] sm:$0xff]
    %s792 = smul.u32 4, 4
    %s793 = smul.addr %s792, 8
    %s794 = scalar_lea.vmem [#allocation2], %s793
    %v795 = vld [vmem:[%s794] sm:$0xff]
    %v796 = vld [vmem:[%s794 + $0x8] sm:$0xff]
    %v797 = vld [vmem:[%s794 + $0x10] sm:$0xff]
    %v798 = vld [vmem:[%s794 + $0x18] sm:$0xff]
    %v799 = vsel %vm172, %v788, %v795
    %v800 = vsel %vm173, %v789, %v796
    %v801 = vsel %vm174, %v790, %v797
    %v802 = vsel %vm175, %v791, %v798
    %803 = vmatpush.msra.mxu0 %v492
    %804 = vmatpush.msra.mxu0 %v488
    %805 = vmatpush.msra.mxu0 %v484
    %806 = vmatpush.msra.mxu0 %v480
    %807 = vmatpush.msra.mxu0 %v476
    %808 = vmatpush.msra.mxu0 %v472
    %809 = vmatpush.msra.mxu0 %v468
    %810 = vmatpush.msra.mxu0 %v464
    %811 = vmatpush.msra.mxu0 %v460
    %812 = vmatpush.msra.mxu0 %v456
    %813 = vmatpush.msra.mxu0 %v452
    %814 = vmatpush.msra.mxu0 %v448
    %815 = vmatpush.msra.mxu0 %v444
    %816 = vmatpush.msra.mxu0 %v440
    %817 = vmatpush.msra.mxu0 %v436
    %818 = vmatpush.msra.mxu0 %v432
    %819 = vmatmul.f32.gmra.mxu0 %v780
    %v820 = vpop.f32.mrf.mxu0
    %v821 = vadd.f32 0.0, %v820
    %822 = vdwg.mxu0
    %823 = vmatpush.msra.mxu0 %v493
    %824 = vmatpush.msra.mxu0 %v489
    %825 = vmatpush.msra.mxu0 %v485
    %826 = vmatpush.msra.mxu0 %v481
    %827 = vmatpush.msra.mxu0 %v477
    %828 = vmatpush.msra.mxu0 %v473
    %829 = vmatpush.msra.mxu0 %v469
    %830 = vmatpush.msra.mxu0 %v465
    %831 = vmatpush.msra.mxu0 %v461
    %832 = vmatpush.msra.mxu0 %v457
    %833 = vmatpush.msra.mxu0 %v453
    %834 = vmatpush.msra.mxu0 %v449
    %835 = vmatpush.msra.mxu0 %v445
    %836 = vmatpush.msra.mxu0 %v441
    %837 = vmatpush.msra.mxu0 %v437
    %838 = vmatpush.msra.mxu0 %v433
    %839 = vmatmul.f32.gmra.mxu0 %v780
    %v840 = vpop.f32.mrf.mxu0
    %v841 = vadd.f32 0.0, %v840
    %842 = vdwg.mxu0
    %843 = vmatpush.msra.mxu0 %v494
    %844 = vmatpush.msra.mxu0 %v490
    %845 = vmatpush.msra.mxu0 %v486
    %846 = vmatpush.msra.mxu0 %v482
    %847 = vmatpush.msra.mxu0 %v478
    %848 = vmatpush.msra.mxu0 %v474
    %849 = vmatpush.msra.mxu0 %v470
    %850 = vmatpush.msra.mxu0 %v466
    %851 = vmatpush.msra.mxu0 %v462
    %852 = vmatpush.msra.mxu0 %v458
    %853 = vmatpush.msra.mxu0 %v454
    %854 = vmatpush.msra.mxu0 %v450
    %855 = vmatpush.msra.mxu0 %v446
    %856 = vmatpush.msra.mxu0 %v442
    %857 = vmatpush.msra.mxu0 %v438
    %858 = vmatpush.msra.mxu0 %v434
    %859 = vmatmul.f32.gmra.mxu0 %v780
    %v860 = vpop.f32.mrf.mxu0
    %v861 = vadd.f32 0.0, %v860
    %862 = vdwg.mxu0
    %863 = vmatpush.msra.mxu0 %v495
    %864 = vmatpush.msra.mxu0 %v491
    %865 = vmatpush.msra.mxu0 %v487
    %866 = vmatpush.msra.mxu0 %v483
    %867 = vmatpush.msra.mxu0 %v479
    %868 = vmatpush.msra.mxu0 %v475
    %869 = vmatpush.msra.mxu0 %v471
    %870 = vmatpush.msra.mxu0 %v467
    %871 = vmatpush.msra.mxu0 %v463
    %872 = vmatpush.msra.mxu0 %v459
    %873 = vmatpush.msra.mxu0 %v455
    %874 = vmatpush.msra.mxu0 %v451
    %875 = vmatpush.msra.mxu0 %v447
    %876 = vmatpush.msra.mxu0 %v443
    %877 = vmatpush.msra.mxu0 %v439
    %878 = vmatpush.msra.mxu0 %v435
    %879 = vmatmul.f32.gmra.mxu0 %v780
    %v880 = vpop.f32.mrf.mxu0
    %v881 = vadd.f32 0.0, %v880
    %882 = vdwg.mxu0
    %v883 = vadd.f32 %v799, %v821
    %v884 = vadd.f32 %v800, %v841
    %v885 = vadd.f32 %v801, %v861
    %v886 = vadd.f32 %v802, %v881
    %v887 = vmul.f32 %v883, 0.5
    %v888 = vmul.f32 %v884, 0.5
    %v889 = vmul.f32 %v885, 0.5
    %v890 = vtanh.pop %v887
    %v891 = vtanh.pop %v888
    %v892 = vtanh.pop %v889
    %v893 = vmul.f32 %v890, 0.5
    %v894 = vmul.f32 %v891, 0.5
    %v895 = vmul.f32 %v892, 0.5
    %v896 = vadd.f32 %v893, 0.5
    %v897 = vadd.f32 %v894, 0.5
    %v898 = vadd.f32 %v895, 0.5
    %v899 = vtanh.pop %v886
    %v900 = vmul.f32 %v897, %v778
    %v901 = vmul.f32 %v896, %v899
    %v902 = vadd.f32 %v900, %v901
    %v903 = vtanh.pop %v902
    %v904 = vmul.f32 %v898, %v903
    %s905 = scalar_lea.vmem [#allocation3], 24
    %906 = vst.msk [vmem:[%s905] sm:$0xff] %vm532, %v904
    %s907 = scalar_lea.vmem [#allocation3], 32
    %908 = vst.msk [vmem:[%s907] sm:$0xff] %vm535, %v904
    %v909 = vld [vmem:[%s794] sm:$0xff]
    %v910 = vld [vmem:[%s794 + $0x8] sm:$0xff]
    %v911 = vld [vmem:[%s794 + $0x10] sm:$0xff]
    %v912 = vld [vmem:[%s794 + $0x18] sm:$0xff]
    %v913 = vld [vmem:[%s787] sm:$0xff]
    %v914 = vld [vmem:[%s787 + $0x8] sm:$0xff]
    %v915 = vld [vmem:[%s787 + $0x10] sm:$0xff]
    %v916 = vld [vmem:[%s787 + $0x18] sm:$0xff]
    %v917 = vsel %vm172, %v909, %v913
    %v918 = vsel %vm173, %v910, %v914
    %v919 = vsel %vm174, %v911, %v915
    %v920 = vsel %vm175, %v912, %v916
    %921 = vmatpush.msra.mxu0 %v492
    %922 = vmatpush.msra.mxu0 %v488
    %923 = vmatpush.msra.mxu0 %v484
    %924 = vmatpush.msra.mxu0 %v480
    %925 = vmatpush.msra.mxu0 %v476
    %926 = vmatpush.msra.mxu0 %v472
    %927 = vmatpush.msra.mxu0 %v468
    %928 = vmatpush.msra.mxu0 %v464
    %929 = vmatpush.msra.mxu0 %v460
    %930 = vmatpush.msra.mxu0 %v456
    %931 = vmatpush.msra.mxu0 %v452
    %932 = vmatpush.msra.mxu0 %v448
    %933 = vmatpush.msra.mxu0 %v444
    %934 = vmatpush.msra.mxu0 %v440
    %935 = vmatpush.msra.mxu0 %v436
    %936 = vmatpush.msra.mxu0 %v432
    %937 = vmatmul.f32.gmra.mxu0 %v904
    %v938 = vpop.f32.mrf.mxu0
    %v939 = vadd.f32 0.0, %v938
    %940 = vdwg.mxu0
    %941 = vmatpush.msra.mxu0 %v493
    %942 = vmatpush.msra.mxu0 %v489
    %943 = vmatpush.msra.mxu0 %v485
    %944 = vmatpush.msra.mxu0 %v481
    %945 = vmatpush.msra.mxu0 %v477
    %946 = vmatpush.msra.mxu0 %v473
    %947 = vmatpush.msra.mxu0 %v469
    %948 = vmatpush.msra.mxu0 %v465
    %949 = vmatpush.msra.mxu0 %v461
    %950 = vmatpush.msra.mxu0 %v457
    %951 = vmatpush.msra.mxu0 %v453
    %952 = vmatpush.msra.mxu0 %v449
    %953 = vmatpush.msra.mxu0 %v445
    %954 = vmatpush.msra.mxu0 %v441
    %955 = vmatpush.msra.mxu0 %v437
    %956 = vmatpush.msra.mxu0 %v433
    %957 = vmatmul.f32.gmra.mxu0 %v904
    %v958 = vpop.f32.mrf.mxu0
    %v959 = vadd.f32 0.0, %v958
    %960 = vdwg.mxu0
    %961 = vmatpush.msra.mxu0 %v494
    %962 = vmatpush.msra.mxu0 %v490
    %963 = vmatpush.msra.mxu0 %v486
    %964 = vmatpush.msra.mxu0 %v482
    %965 = vmatpush.msra.mxu0 %v478
    %966 = vmatpush.msra.mxu0 %v474
    %967 = vmatpush.msra.mxu0 %v470
    %968 = vmatpush.msra.mxu0 %v466
    %969 = vmatpush.msra.mxu0 %v462
    %970 = vmatpush.msra.mxu0 %v458
    %971 = vmatpush.msra.mxu0 %v454
    %972 = vmatpush.msra.mxu0 %v450
    %973 = vmatpush.msra.mxu0 %v446
    %974 = vmatpush.msra.mxu0 %v442
    %975 = vmatpush.msra.mxu0 %v438
    %976 = vmatpush.msra.mxu0 %v434
    %977 = vmatmul.f32.gmra.mxu0 %v904
    %v978 = vpop.f32.mrf.mxu0
    %v979 = vadd.f32 0.0, %v978
    %980 = vdwg.mxu0
    %981 = vmatpush.msra.mxu0 %v495
    %982 = vmatpush.msra.mxu0 %v491
    %983 = vmatpush.msra.mxu0 %v487
    %984 = vmatpush.msra.mxu0 %v483
    %985 = vmatpush.msra.mxu0 %v479
    %986 = vmatpush.msra.mxu0 %v475
    %987 = vmatpush.msra.mxu0 %v471
    %988 = vmatpush.msra.mxu0 %v467
    %989 = vmatpush.msra.mxu0 %v463
    %990 = vmatpush.msra.mxu0 %v459
    %991 = vmatpush.msra.mxu0 %v455
    %992 = vmatpush.msra.mxu0 %v451
    %993 = vmatpush.msra.mxu0 %v447
    %994 = vmatpush.msra.mxu0 %v443
    %995 = vmatpush.msra.mxu0 %v439
    %996 = vmatpush.msra.mxu0 %v435
    %997 = vmatmul.f32.gmra.mxu0 %v904
    %v998 = vpop.f32.mrf.mxu0
    %v999 = vadd.f32 0.0, %v998
    %1000 = vdwg.mxu0
    %v1001 = vadd.f32 %v917, %v939
    %v1002 = vadd.f32 %v918, %v959
    %v1003 = vadd.f32 %v919, %v979
    %v1004 = vadd.f32 %v920, %v999
    %v1005 = vmul.f32 %v1001, 0.5
    %v1006 = vmul.f32 %v1002, 0.5
    %v1007 = vmul.f32 %v1003, 0.5
    %v1008 = vtanh.pop %v1005
    %v1009 = vtanh.pop %v1006
    %v1010 = vtanh.pop %v1007
    %v1011 = vmul.f32 %v1008, 0.5
    %v1012 = vmul.f32 %v1009, 0.5
    %v1013 = vmul.f32 %v1010, 0.5
    %v1014 = vadd.f32 %v1011, 0.5
    %v1015 = vadd.f32 %v1012, 0.5
    %v1016 = vadd.f32 %v1013, 0.5
    %v1017 = vtanh.pop %v1004
    %v1018 = vmul.f32 %v1015, %v902
    %v1019 = vmul.f32 %v1014, %v1017
    %v1020 = vadd.f32 %v1018, %v1019
    %v1021 = vtanh.pop %v1020
    %v1022 = vmul.f32 %v1016, %v1021
    %1023 = vst.msk [vmem:[%s907] sm:$0xff] %vm532, %v1022
    %1024 = vst.msk [vmem:[%s905] sm:$0xff] %vm535, %v1022
    %v1025 = vld [vmem:[%s670] sm:$0xff]
    %v1026 = vld [vmem:[%s670 + $0x8] sm:$0xff]
    %v1027 = vld [vmem:[%s670 + $0x10] sm:$0xff]
    %v1028 = vld [vmem:[%s670 + $0x18] sm:$0xff]
    %v1029 = vld [vmem:[%s663] sm:$0xff]
    %v1030 = vld [vmem:[%s663 + $0x8] sm:$0xff]
    %v1031 = vld [vmem:[%s663 + $0x10] sm:$0xff]
    %v1032 = vld [vmem:[%s663 + $0x18] sm:$0xff]
    %v1033 = vsel %vm172, %v1025, %v1029
    %v1034 = vsel %vm173, %v1026, %v1030
    %v1035 = vsel %vm174, %v1027, %v1031
    %v1036 = vsel %vm175, %v1028, %v1032
    %1037 = vmatpush.msra.mxu0 %v492
    %1038 = vmatpush.msra.mxu0 %v488
    %1039 = vmatpush.msra.mxu0 %v484
    %1040 = vmatpush.msra.mxu0 %v480
    %1041 = vmatpush.msra.mxu0 %v476
    %1042 = vmatpush.msra.mxu0 %v472
    %1043 = vmatpush.msra.mxu0 %v468
    %1044 = vmatpush.msra.mxu0 %v464
    %1045 = vmatpush.msra.mxu0 %v460
    %1046 = vmatpush.msra.mxu0 %v456
    %1047 = vmatpush.msra.mxu0 %v452
    %1048 = vmatpush.msra.mxu0 %v448
    %1049 = vmatpush.msra.mxu0 %v444
    %1050 = vmatpush.msra.mxu0 %v440
    %1051 = vmatpush.msra.mxu0 %v436
    %1052 = vmatpush.msra.mxu0 %v432
    %1053 = vmatmul.f32.gmra.mxu0 %v1022
    %v1054 = vpop.f32.mrf.mxu0
    %v1055 = vadd.f32 0.0, %v1054
    %1056 = vdwg.mxu0
    %1057 = vmatpush.msra.mxu0 %v493
    %1058 = vmatpush.msra.mxu0 %v489
    %1059 = vmatpush.msra.mxu0 %v485
    %1060 = vmatpush.msra.mxu0 %v481
    %1061 = vmatpush.msra.mxu0 %v477
    %1062 = vmatpush.msra.mxu0 %v473
    %1063 = vmatpush.msra.mxu0 %v469
    %1064 = vmatpush.msra.mxu0 %v465
    %1065 = vmatpush.msra.mxu0 %v461
    %1066 = vmatpush.msra.mxu0 %v457
    %1067 = vmatpush.msra.mxu0 %v453
    %1068 = vmatpush.msra.mxu0 %v449
    %1069 = vmatpush.msra.mxu0 %v445
    %1070 = vmatpush.msra.mxu0 %v441
    %1071 = vmatpush.msra.mxu0 %v437
    %1072 = vmatpush.msra.mxu0 %v433
    %1073 = vmatmul.f32.gmra.mxu0 %v1022
    %v1074 = vpop.f32.mrf.mxu0
    %v1075 = vadd.f32 0.0, %v1074
    %1076 = vdwg.mxu0
    %1077 = vmatpush.msra.mxu0 %v494
    %1078 = vmatpush.msra.mxu0 %v490
    %1079 = vmatpush.msra.mxu0 %v486
    %1080 = vmatpush.msra.mxu0 %v482
    %1081 = vmatpush.msra.mxu0 %v478
    %1082 = vmatpush.msra.mxu0 %v474
    %1083 = vmatpush.msra.mxu0 %v470
    %1084 = vmatpush.msra.mxu0 %v466
    %1085 = vmatpush.msra.mxu0 %v462
    %1086 = vmatpush.msra.mxu0 %v458
    %1087 = vmatpush.msra.mxu0 %v454
    %1088 = vmatpush.msra.mxu0 %v450
    %1089 = vmatpush.msra.mxu0 %v446
    %1090 = vmatpush.msra.mxu0 %v442
    %1091 = vmatpush.msra.mxu0 %v438
    %1092 = vmatpush.msra.mxu0 %v434
    %1093 = vmatmul.f32.gmra.mxu0 %v1022
    %v1094 = vpop.f32.mrf.mxu0
    %v1095 = vadd.f32 0.0, %v1094
    %1096 = vdwg.mxu0
    %1097 = vmatpush.msra.mxu0 %v495
    %1098 = vmatpush.msra.mxu0 %v491
    %1099 = vmatpush.msra.mxu0 %v487
    %1100 = vmatpush.msra.mxu0 %v483
    %1101 = vmatpush.msra.mxu0 %v479
    %1102 = vmatpush.msra.mxu0 %v475
    %1103 = vmatpush.msra.mxu0 %v471
    %1104 = vmatpush.msra.mxu0 %v467
    %1105 = vmatpush.msra.mxu0 %v463
    %1106 = vmatpush.msra.mxu0 %v459
    %1107 = vmatpush.msra.mxu0 %v455
    %1108 = vmatpush.msra.mxu0 %v451
    %1109 = vmatpush.msra.mxu0 %v447
    %1110 = vmatpush.msra.mxu0 %v443
    %1111 = vmatpush.msra.mxu0 %v439
    %1112 = vmatpush.msra.mxu0 %v435
    %1113 = vmatmul.f32.gmra.mxu0 %v1022
    %v1114 = vpop.f32.mrf.mxu0
    %v1115 = vadd.f32 0.0, %v1114
    %1116 = vdwg.mxu0
    %v1117 = vadd.f32 %v1033, %v1055
    %v1118 = vadd.f32 %v1034, %v1075
    %v1119 = vadd.f32 %v1035, %v1095
    %v1120 = vadd.f32 %v1036, %v1115
    %v1121 = vmul.f32 %v1117, 0.5
    %v1122 = vmul.f32 %v1118, 0.5
    %v1123 = vmul.f32 %v1119, 0.5
    %v1124 = vtanh.pop %v1121
    %v1125 = vtanh.pop %v1122
    %v1126 = vtanh.pop %v1123
    %v1127 = vmul.f32 %v1124, 0.5
    %v1128 = vmul.f32 %v1125, 0.5
    %v1129 = vmul.f32 %v1126, 0.5
    %v1130 = vadd.f32 %v1127, 0.5
    %v1131 = vadd.f32 %v1128, 0.5
    %v1132 = vadd.f32 %v1129, 0.5
    %v1133 = vtanh.pop %v1120
    %v1134 = vmul.f32 %v1131, %v1020
    %v1135 = vmul.f32 %v1130, %v1133
    %v1136 = vadd.f32 %v1134, %v1135
    %v1137 = vtanh.pop %v1136
    %v1138 = vmul.f32 %v1132, %v1137
    %1139 = vst.msk [vmem:[%s783] sm:$0xff] %vm532, %v1138
    %1140 = vst.msk [vmem:[%s781] sm:$0xff] %vm535, %v1138
    %v1141 = vld [vmem:[%s546] sm:$0xff]
    %v1142 = vld [vmem:[%s546 + $0x8] sm:$0xff]
    %v1143 = vld [vmem:[%s546 + $0x10] sm:$0xff]
    %v1144 = vld [vmem:[%s546 + $0x18] sm:$0xff]
    %v1145 = vld [vmem:[%s539] sm:$0xff]
    %v1146 = vld [vmem:[%s539 + $0x8] sm:$0xff]
    %v1147 = vld [vmem:[%s539 + $0x10] sm:$0xff]
    %v1148 = vld [vmem:[%s539 + $0x18] sm:$0xff]
    %v1149 = vsel %vm172, %v1141, %v1145
    %v1150 = vsel %vm173, %v1142, %v1146
    %v1151 = vsel %vm174, %v1143, %v1147
    %v1152 = vsel %vm175, %v1144, %v1148
    %1153 = vmatpush.msra.mxu0 %v492
    %1154 = vmatpush.msra.mxu0 %v488
    %1155 = vmatpush.msra.mxu0 %v484
    %1156 = vmatpush.msra.mxu0 %v480
    %1157 = vmatpush.msra.mxu0 %v476
    %1158 = vmatpush.msra.mxu0 %v472
    %1159 = vmatpush.msra.mxu0 %v468
    %1160 = vmatpush.msra.mxu0 %v464
    %1161 = vmatpush.msra.mxu0 %v460
    %1162 = vmatpush.msra.mxu0 %v456
    %1163 = vmatpush.msra.mxu0 %v452
    %1164 = vmatpush.msra.mxu0 %v448
    %1165 = vmatpush.msra.mxu0 %v444
    %1166 = vmatpush.msra.mxu0 %v440
    %1167 = vmatpush.msra.mxu0 %v436
    %1168 = vmatpush.msra.mxu0 %v432
    %1169 = vmatmul.f32.gmra.mxu0 %v1138
    %v1170 = vpop.f32.mrf.mxu0
    %v1171 = vadd.f32 0.0, %v1170
    %1172 = vdwg.mxu0
    %1173 = vmatpush.msra.mxu0 %v493
    %1174 = vmatpush.msra.mxu0 %v489
    %1175 = vmatpush.msra.mxu0 %v485
    %1176 = vmatpush.msra.mxu0 %v481
    %1177 = vmatpush.msra.mxu0 %v477
    %1178 = vmatpush.msra.mxu0 %v473
    %1179 = vmatpush.msra.mxu0 %v469
    %1180 = vmatpush.msra.mxu0 %v465
    %1181 = vmatpush.msra.mxu0 %v461
    %1182 = vmatpush.msra.mxu0 %v457
    %1183 = vmatpush.msra.mxu0 %v453
    %1184 = vmatpush.msra.mxu0 %v449
    %1185 = vmatpush.msra.mxu0 %v445
    %1186 = vmatpush.msra.mxu0 %v441
    %1187 = vmatpush.msra.mxu0 %v437
    %1188 = vmatpush.msra.mxu0 %v433
    %1189 = vmatmul.f32.gmra.mxu0 %v1138
    %v1190 = vpop.f32.mrf.mxu0
    %v1191 = vadd.f32 0.0, %v1190
    %1192 = vdwg.mxu0
    %1193 = vmatpush.msra.mxu0 %v494
    %1194 = vmatpush.msra.mxu0 %v490
    %1195 = vmatpush.msra.mxu0 %v486
    %1196 = vmatpush.msra.mxu0 %v482
    %1197 = vmatpush.msra.mxu0 %v478
    %1198 = vmatpush.msra.mxu0 %v474
    %1199 = vmatpush.msra.mxu0 %v470
    %1200 = vmatpush.msra.mxu0 %v466
    %1201 = vmatpush.msra.mxu0 %v462
    %1202 = vmatpush.msra.mxu0 %v458
    %1203 = vmatpush.msra.mxu0 %v454
    %1204 = vmatpush.msra.mxu0 %v450
    %1205 = vmatpush.msra.mxu0 %v446
    %1206 = vmatpush.msra.mxu0 %v442
    %1207 = vmatpush.msra.mxu0 %v438
    %1208 = vmatpush.msra.mxu0 %v434
    %1209 = vmatmul.f32.gmra.mxu0 %v1138
    %v1210 = vpop.f32.mrf.mxu0
    %v1211 = vadd.f32 0.0, %v1210
    %1212 = vdwg.mxu0
    %1213 = vmatpush.msra.mxu0 %v495
    %1214 = vmatpush.msra.mxu0 %v491
    %1215 = vmatpush.msra.mxu0 %v487
    %1216 = vmatpush.msra.mxu0 %v483
    %1217 = vmatpush.msra.mxu0 %v479
    %1218 = vmatpush.msra.mxu0 %v475
    %1219 = vmatpush.msra.mxu0 %v471
    %1220 = vmatpush.msra.mxu0 %v467
    %1221 = vmatpush.msra.mxu0 %v463
    %1222 = vmatpush.msra.mxu0 %v459
    %1223 = vmatpush.msra.mxu0 %v455
    %1224 = vmatpush.msra.mxu0 %v451
    %1225 = vmatpush.msra.mxu0 %v447
    %1226 = vmatpush.msra.mxu0 %v443
    %1227 = vmatpush.msra.mxu0 %v439
    %1228 = vmatpush.msra.mxu0 %v435
    %1229 = vmatmul.f32.gmra.mxu0 %v1138
    %v1230 = vpop.f32.mrf.mxu0
    %v1231 = vadd.f32 0.0, %v1230
    %1232 = vdwg.mxu0
    %v1233 = vadd.f32 %v1149, %v1171
    %v1234 = vadd.f32 %v1150, %v1191
    %v1235 = vadd.f32 %v1151, %v1211
    %v1236 = vadd.f32 %v1152, %v1231
    %v1237 = vmul.f32 %v1233, 0.5
    %v1238 = vmul.f32 %v1234, 0.5
    %v1239 = vmul.f32 %v1235, 0.5
    %v1240 = vtanh.pop %v1237
    %v1241 = vtanh.pop %v1238
    %v1242 = vtanh.pop %v1239
    %v1243 = vmul.f32 %v1240, 0.5
    %v1244 = vmul.f32 %v1241, 0.5
    %v1245 = vmul.f32 %v1242, 0.5
    %v1246 = vadd.f32 %v1243, 0.5
    %v1247 = vadd.f32 %v1244, 0.5
    %v1248 = vadd.f32 %v1245, 0.5
    %v1249 = vtanh.pop %v1236
    %v1250 = vmul.f32 %v1247, %v1136
    %v1251 = vmul.f32 %v1246, %v1249
    %v1252 = vadd.f32 %v1250, %v1251
    %v1253 = vtanh.pop %v1252
    %v1254 = vmul.f32 %v1248, %v1253
    %1255 = vst.msk [vmem:[%s659] sm:$0xff] %vm532, %v1254
    %1256 = vst.msk [vmem:[%s657] sm:$0xff] %vm535, %v1254
    %v1257 = vld [vmem:[%s505] sm:$0xff]
    %v1258 = vld [vmem:[%s505 + $0x8] sm:$0xff]
    %v1259 = vld [vmem:[%s505 + $0x10] sm:$0xff]
    %v1260 = vld [vmem:[%s505 + $0x18] sm:$0xff]
    %v1261 = vld [vmem:[%s498] sm:$0xff]
    %v1262 = vld [vmem:[%s498 + $0x8] sm:$0xff]
    %v1263 = vld [vmem:[%s498 + $0x10] sm:$0xff]
    %v1264 = vld [vmem:[%s498 + $0x18] sm:$0xff]
    %v1265 = vsel %vm172, %v1257, %v1261
    %v1266 = vsel %vm173, %v1258, %v1262
    %v1267 = vsel %vm174, %v1259, %v1263
    %v1268 = vsel %vm175, %v1260, %v1264
    %1269 = vmatpush.msra.mxu0 %v492
    %1270 = vmatpush.msra.mxu0 %v488
    %1271 = vmatpush.msra.mxu0 %v484
    %1272 = vmatpush.msra.mxu0 %v480
    %1273 = vmatpush.msra.mxu0 %v476
    %1274 = vmatpush.msra.mxu0 %v472
    %1275 = vmatpush.msra.mxu0 %v468
    %1276 = vmatpush.msra.mxu0 %v464
    %1277 = vmatpush.msra.mxu0 %v460
    %1278 = vmatpush.msra.mxu0 %v456
    %1279 = vmatpush.msra.mxu0 %v452
    %1280 = vmatpush.msra.mxu0 %v448
    %1281 = vmatpush.msra.mxu0 %v444
    %1282 = vmatpush.msra.mxu0 %v440
    %1283 = vmatpush.msra.mxu0 %v436
    %1284 = vmatpush.msra.mxu0 %v432
    %1285 = vmatmul.f32.gmra.mxu0 %v1254
    %v1286 = vpop.f32.mrf.mxu0
    %v1287 = vadd.f32 0.0, %v1286
    %1288 = vdwg.mxu0
    %1289 = vmatpush.msra.mxu0 %v493
    %1290 = vmatpush.msra.mxu0 %v489
    %1291 = vmatpush.msra.mxu0 %v485
    %1292 = vmatpush.msra.mxu0 %v481
    %1293 = vmatpush.msra.mxu0 %v477
    %1294 = vmatpush.msra.mxu0 %v473
    %1295 = vmatpush.msra.mxu0 %v469
    %1296 = vmatpush.msra.mxu0 %v465
    %1297 = vmatpush.msra.mxu0 %v461
    %1298 = vmatpush.msra.mxu0 %v457
    %1299 = vmatpush.msra.mxu0 %v453
    %1300 = vmatpush.msra.mxu0 %v449
    %1301 = vmatpush.msra.mxu0 %v445
    %1302 = vmatpush.msra.mxu0 %v441
    %1303 = vmatpush.msra.mxu0 %v437
    %1304 = vmatpush.msra.mxu0 %v433
    %1305 = vmatmul.f32.gmra.mxu0 %v1254
    %v1306 = vpop.f32.mrf.mxu0
    %v1307 = vadd.f32 0.0, %v1306
    %1308 = vdwg.mxu0
    %1309 = vmatpush.msra.mxu0 %v494
    %1310 = vmatpush.msra.mxu0 %v490
    %1311 = vmatpush.msra.mxu0 %v486
    %1312 = vmatpush.msra.mxu0 %v482
    %1313 = vmatpush.msra.mxu0 %v478
    %1314 = vmatpush.msra.mxu0 %v474
    %1315 = vmatpush.msra.mxu0 %v470
    %1316 = vmatpush.msra.mxu0 %v466
    %1317 = vmatpush.msra.mxu0 %v462
    %1318 = vmatpush.msra.mxu0 %v458
    %1319 = vmatpush.msra.mxu0 %v454
    %1320 = vmatpush.msra.mxu0 %v450
    %1321 = vmatpush.msra.mxu0 %v446
    %1322 = vmatpush.msra.mxu0 %v442
    %1323 = vmatpush.msra.mxu0 %v438
    %1324 = vmatpush.msra.mxu0 %v434
    %1325 = vmatmul.f32.gmra.mxu0 %v1254
    %v1326 = vpop.f32.mrf.mxu0
    %v1327 = vadd.f32 0.0, %v1326
    %1328 = vdwg.mxu0
    %1329 = vmatpush.msra.mxu0 %v495
    %1330 = vmatpush.msra.mxu0 %v491
    %1331 = vmatpush.msra.mxu0 %v487
    %1332 = vmatpush.msra.mxu0 %v483
    %1333 = vmatpush.msra.mxu0 %v479
    %1334 = vmatpush.msra.mxu0 %v475
    %1335 = vmatpush.msra.mxu0 %v471
    %1336 = vmatpush.msra.mxu0 %v467
    %1337 = vmatpush.msra.mxu0 %v463
    %1338 = vmatpush.msra.mxu0 %v459
    %1339 = vmatpush.msra.mxu0 %v455
    %1340 = vmatpush.msra.mxu0 %v451
    %1341 = vmatpush.msra.mxu0 %v447
    %1342 = vmatpush.msra.mxu0 %v443
    %1343 = vmatpush.msra.mxu0 %v439
    %1344 = vmatpush.msra.mxu0 %v435
    %1345 = vmatmul.f32.gmra.mxu0 %v1254
    %v1346 = vpop.f32.mrf.mxu0
    %v1347 = vadd.f32 0.0, %v1346
    %1348 = vdwg.mxu0
    %v1349 = vadd.f32 %v1265, %v1287
    %v1350 = vadd.f32 %v1266, %v1307
    %v1351 = vadd.f32 %v1267, %v1327
    %v1352 = vadd.f32 %v1268, %v1347
    %v1353 = vmul.f32 %v1349, 0.5
    %v1354 = vmul.f32 %v1350, 0.5
    %v1355 = vmul.f32 %v1351, 0.5
    %v1356 = vtanh.pop %v1353
    %v1357 = vtanh.pop %v1354
    %v1358 = vtanh.pop %v1355
    %v1359 = vmul.f32 %v1356, 0.5
    %v1360 = vmul.f32 %v1357, 0.5
    %v1361 = vmul.f32 %v1358, 0.5
    %v1362 = vadd.f32 %v1359, 0.5
    %v1363 = vadd.f32 %v1360, 0.5
    %v1364 = vadd.f32 %v1361, 0.5
    %v1365 = vtanh.pop %v1352
    %v1366 = vmul.f32 %v1363, %v1252
    %v1367 = vmul.f32 %v1362, %v1365
    %v1368 = vadd.f32 %v1366, %v1367
    %v1369 = vtanh.pop %v1368
    %v1370 = vmul.f32 %v1364, %v1369
    %1371 = vst.msk [vmem:[%s534] sm:$0xff] %vm532, %v1370
    %1372 = vst.msk [vmem:[#allocation3] sm:$0xff] %vm535, %v1370
    %v1373 = vld [vmem:[#allocation3] sm:$0xff]
    %v1374 = vld [vmem:[#allocation3 + $0x8] sm:$0xff]
    %v1375 = vld [vmem:[#allocation3 + $0x10] sm:$0xff]
    %v1376 = vld [vmem:[#allocation3 + $0x18] sm:$0xff]
    %v1377 = vld [vmem:[#allocation3 + $0x20] sm:$0xff]
    %v1378 = vld [vmem:[#allocation3 + $0x28] sm:$0xff]
    %v1379 = vld [vmem:[#allocation3 + $0x30] sm:$0xff]
    %v1380 = vld [vmem:[#allocation3 + $0x38] sm:$0xff]
    %v1381 = vld [vmem:[#allocation6] sm:$0xff]
    %v1382 = vld [vmem:[#allocation6 + $0x8] sm:$0xff]
    %v1383 = vld [vmem:[#allocation6 + $0x10] sm:$0xff]
    %v1384 = vld [vmem:[#allocation6 + $0x18] sm:$0xff]
    %v1385 = vld [vmem:[#allocation6 + $0x20] sm:$0xff]
    %v1386 = vld [vmem:[#allocation6 + $0x28] sm:$0xff]
    %v1387 = vld [vmem:[#allocation6 + $0x30] sm:$0xff]
    %v1388 = vld [vmem:[#allocation6 + $0x38] sm:$0xff]
    %v1389 = vld [vmem:[#allocation6 + $0x40] sm:$0xff]
    %v1390 = vld [vmem:[#allocation6 + $0x48] sm:$0xff]
    %v1391 = vld [vmem:[#allocation6 + $0x50] sm:$0xff]
    %v1392 = vld [vmem:[#allocation6 + $0x58] sm:$0xff]
    %v1393 = vld [vmem:[#allocation6 + $0x60] sm:$0xff]
    %v1394 = vld [vmem:[#allocation6 + $0x68] sm:$0xff]
    %v1395 = vld [vmem:[#allocation6 + $0x70] sm:$0xff]
    %v1396 = vld [vmem:[#allocation6 + $0x78] sm:$0xff]
    %v1397 = vld [vmem:[#allocation6 + $0x80] sm:$0xff]
    %v1398 = vld [vmem:[#allocation6 + $0x88] sm:$0xff]
    %v1399 = vld [vmem:[#allocation6 + $0x90] sm:$0xff]
    %v1400 = vld [vmem:[#allocation6 + $0x98] sm:$0xff]
    %v1401 = vld [vmem:[#allocation6 + $0xa0] sm:$0xff]
    %v1402 = vld [vmem:[#allocation6 + $0xa8] sm:$0xff]
    %v1403 = vld [vmem:[#allocation6 + $0xb0] sm:$0xff]
    %v1404 = vld [vmem:[#allocation6 + $0xb8] sm:$0xff]
    %v1405 = vld [vmem:[#allocation6 + $0xc0] sm:$0xff]
    %v1406 = vld [vmem:[#allocation6 + $0xc8] sm:$0xff]
    %v1407 = vld [vmem:[#allocation6 + $0xd0] sm:$0xff]
    %v1408 = vld [vmem:[#allocation6 + $0xd8] sm:$0xff]
    %v1409 = vld [vmem:[#allocation6 + $0xe0] sm:$0xff]
    %v1410 = vld [vmem:[#allocation6 + $0xe8] sm:$0xff]
    %v1411 = vld [vmem:[#allocation6 + $0xf0] sm:$0xff]
    %v1412 = vld [vmem:[#allocation6 + $0xf8] sm:$0xff]
    %v1413 = vld [vmem:[#allocation6 + $0x100] sm:$0xff]
    %v1414 = vld [vmem:[#allocation6 + $0x108] sm:$0xff]
    %v1415 = vld [vmem:[#allocation6 + $0x110] sm:$0xff]
    %v1416 = vld [vmem:[#allocation6 + $0x118] sm:$0xff]
    %v1417 = vld [vmem:[#allocation6 + $0x120] sm:$0xff]
    %v1418 = vld [vmem:[#allocation6 + $0x128] sm:$0xff]
    %v1419 = vld [vmem:[#allocation6 + $0x130] sm:$0xff]
    %v1420 = vld [vmem:[#allocation6 + $0x138] sm:$0xff]
    %v1421 = vld [vmem:[#allocation6 + $0x140] sm:$0xff]
    %v1422 = vld [vmem:[#allocation6 + $0x148] sm:$0xff]
    %v1423 = vld [vmem:[#allocation6 + $0x150] sm:$0xff]
    %v1424 = vld [vmem:[#allocation6 + $0x158] sm:$0xff]
    %v1425 = vld [vmem:[#allocation6 + $0x160] sm:$0xff]
    %v1426 = vld [vmem:[#allocation6 + $0x168] sm:$0xff]
    %v1427 = vld [vmem:[#allocation6 + $0x170] sm:$0xff]
    %v1428 = vld [vmem:[#allocation6 + $0x178] sm:$0xff]
    %v1429 = vld [vmem:[#allocation6 + $0x180] sm:$0xff]
    %v1430 = vld [vmem:[#allocation6 + $0x188] sm:$0xff]
    %v1431 = vld [vmem:[#allocation6 + $0x190] sm:$0xff]
    %v1432 = vld [vmem:[#allocation6 + $0x198] sm:$0xff]
    %v1433 = vld [vmem:[#allocation6 + $0x1a0] sm:$0xff]
    %v1434 = vld [vmem:[#allocation6 + $0x1a8] sm:$0xff]
    %v1435 = vld [vmem:[#allocation6 + $0x1b0] sm:$0xff]
    %v1436 = vld [vmem:[#allocation6 + $0x1b8] sm:$0xff]
    %v1437 = vld [vmem:[#allocation6 + $0x1c0] sm:$0xff]
    %v1438 = vld [vmem:[#allocation6 + $0x1c8] sm:$0xff]
    %v1439 = vld [vmem:[#allocation6 + $0x1d0] sm:$0xff]
    %v1440 = vld [vmem:[#allocation6 + $0x1d8] sm:$0xff]
    %v1441 = vld [vmem:[#allocation6 + $0x1e0] sm:$0xff]
    %v1442 = vld [vmem:[#allocation6 + $0x1e8] sm:$0xff]
    %v1443 = vld [vmem:[#allocation6 + $0x1f0] sm:$0xff]
    %v1444 = vld [vmem:[#allocation6 + $0x1f8] sm:$0xff]
    %v1445 = vld [vmem:[%s6] sm:$0xf]
    %v1447 = vperm.slane %v1445, 0
    %v1448 = vperm.slane %v1445, 1
    %v1449 = vperm.slane %v1445, 2
    %v1450 = vperm.slane %v1445, 3
    %1455 = vmatpush.msra.mxu0 %v1441
    %1456 = vmatpush.msra.mxu0 %v1437
    %1457 = vmatpush.msra.mxu0 %v1433
    %1458 = vmatpush.msra.mxu0 %v1429
    %1459 = vmatpush.msra.mxu0 %v1425
    %1460 = vmatpush.msra.mxu0 %v1421
    %1461 = vmatpush.msra.mxu0 %v1417
    %1462 = vmatpush.msra.mxu0 %v1413
    %1463 = vmatpush.msra.mxu0 %v1409
    %1464 = vmatpush.msra.mxu0 %v1405
    %1465 = vmatpush.msra.mxu0 %v1401
    %1466 = vmatpush.msra.mxu0 %v1397
    %1467 = vmatpush.msra.mxu0 %v1393
    %1468 = vmatpush.msra.mxu0 %v1389
    %1469 = vmatpush.msra.mxu0 %v1385
    %1470 = vmatpush.msra.mxu0 %v1381
    %1471 = vmatmul.f32.gmra.mxu0 %v1373
    %v1472 = vpop.f32.mrf.mxu0
    %v1473 = vadd.f32 %v1447, %v1472
    %1474 = vmatmul.f32.gmra.mxu0 %v1374
    %v1475 = vpop.f32.mrf.mxu0
    %v1476 = vadd.f32 %v1447, %v1475
    %1477 = vmatmul.f32.gmra.mxu0 %v1375
    %v1478 = vpop.f32.mrf.mxu0
    %v1479 = vadd.f32 %v1447, %v1478
    %1480 = vmatmul.f32.gmra.mxu0 %v1376
    %v1481 = vpop.f32.mrf.mxu0
    %v1482 = vadd.f32 %v1447, %v1481
    %1483 = vmatmul.f32.gmra.mxu0 %v1377
    %v1484 = vpop.f32.mrf.mxu0
    %v1485 = vadd.f32 %v1447, %v1484
    %1486 = vmatmul.f32.gmra.mxu0 %v1378
    %v1487 = vpop.f32.mrf.mxu0
    %v1488 = vadd.f32 %v1447, %v1487
    %1489 = vmatmul.f32.gmra.mxu0 %v1379
    %v1490 = vpop.f32.mrf.mxu0
    %v1491 = vadd.f32 %v1447, %v1490
    %1492 = vmatmul.f32.gmra.mxu0 %v1380
    %v1493 = vpop.f32.mrf.mxu0
    %v1494 = vadd.f32 %v1447, %v1493
    %1495 = vdwg.mxu0
    %1496 = vmatpush.msra.mxu0 %v1442
    %1497 = vmatpush.msra.mxu0 %v1438
    %1498 = vmatpush.msra.mxu0 %v1434
    %1499 = vmatpush.msra.mxu0 %v1430
    %1500 = vmatpush.msra.mxu0 %v1426
    %1501 = vmatpush.msra.mxu0 %v1422
    %1502 = vmatpush.msra.mxu0 %v1418
    %1503 = vmatpush.msra.mxu0 %v1414
    %1504 = vmatpush.msra.mxu0 %v1410
    %1505 = vmatpush.msra.mxu0 %v1406
    %1506 = vmatpush.msra.mxu0 %v1402
    %1507 = vmatpush.msra.mxu0 %v1398
    %1508 = vmatpush.msra.mxu0 %v1394
    %1509 = vmatpush.msra.mxu0 %v1390
    %1510 = vmatpush.msra.mxu0 %v1386
    %1511 = vmatpush.msra.mxu0 %v1382
    %1512 = vmatmul.f32.gmra.mxu0 %v1373
    %v1513 = vpop.f32.mrf.mxu0
    %v1514 = vadd.f32 %v1448, %v1513
    %1515 = vmatmul.f32.gmra.mxu0 %v1374
    %v1516 = vpop.f32.mrf.mxu0
    %v1517 = vadd.f32 %v1448, %v1516
    %1518 = vmatmul.f32.gmra.mxu0 %v1375
    %v1519 = vpop.f32.mrf.mxu0
    %v1520 = vadd.f32 %v1448, %v1519
    %1521 = vmatmul.f32.gmra.mxu0 %v1376
    %v1522 = vpop.f32.mrf.mxu0
    %v1523 = vadd.f32 %v1448, %v1522
    %1524 = vmatmul.f32.gmra.mxu0 %v1377
    %v1525 = vpop.f32.mrf.mxu0
    %v1526 = vadd.f32 %v1448, %v1525
    %1527 = vmatmul.f32.gmra.mxu0 %v1378
    %v1528 = vpop.f32.mrf.mxu0
    %v1529 = vadd.f32 %v1448, %v1528
    %1530 = vmatmul.f32.gmra.mxu0 %v1379
    %v1531 = vpop.f32.mrf.mxu0
    %v1532 = vadd.f32 %v1448, %v1531
    %1533 = vmatmul.f32.gmra.mxu0 %v1380
    %v1534 = vpop.f32.mrf.mxu0
    %v1535 = vadd.f32 %v1448, %v1534
    %1536 = vdwg.mxu0
    %1537 = vmatpush.msra.mxu0 %v1443
    %1538 = vmatpush.msra.mxu0 %v1439
    %1539 = vmatpush.msra.mxu0 %v1435
    %1540 = vmatpush.msra.mxu0 %v1431
    %1541 = vmatpush.msra.mxu0 %v1427
    %1542 = vmatpush.msra.mxu0 %v1423
    %1543 = vmatpush.msra.mxu0 %v1419
    %1544 = vmatpush.msra.mxu0 %v1415
    %1545 = vmatpush.msra.mxu0 %v1411
    %1546 = vmatpush.msra.mxu0 %v1407
    %1547 = vmatpush.msra.mxu0 %v1403
    %1548 = vmatpush.msra.mxu0 %v1399
    %1549 = vmatpush.msra.mxu0 %v1395
    %1550 = vmatpush.msra.mxu0 %v1391
    %1551 = vmatpush.msra.mxu0 %v1387
    %1552 = vmatpush.msra.mxu0 %v1383
    %1553 = vmatmul.f32.gmra.mxu0 %v1373
    %v1554 = vpop.f32.mrf.mxu0
    %v1555 = vadd.f32 %v1449, %v1554
    %1556 = vmatmul.f32.gmra.mxu0 %v1374
    %v1557 = vpop.f32.mrf.mxu0
    %v1558 = vadd.f32 %v1449, %v1557
    %1559 = vmatmul.f32.gmra.mxu0 %v1375
    %v1560 = vpop.f32.mrf.mxu0
    %v1561 = vadd.f32 %v1449, %v1560
    %1562 = vmatmul.f32.gmra.mxu0 %v1376
    %v1563 = vpop.f32.mrf.mxu0
    %v1564 = vadd.f32 %v1449, %v1563
    %1565 = vmatmul.f32.gmra.mxu0 %v1377
    %v1566 = vpop.f32.mrf.mxu0
    %v1567 = vadd.f32 %v1449, %v1566
    %1568 = vmatmul.f32.gmra.mxu0 %v1378
    %v1569 = vpop.f32.mrf.mxu0
    %v1570 = vadd.f32 %v1449, %v1569
    %1571 = vmatmul.f32.gmra.mxu0 %v1379
    %v1572 = vpop.f32.mrf.mxu0
    %v1573 = vadd.f32 %v1449, %v1572
    %1574 = vmatmul.f32.gmra.mxu0 %v1380
    %v1575 = vpop.f32.mrf.mxu0
    %v1576 = vadd.f32 %v1449, %v1575
    %1577 = vdwg.mxu0
    %1578 = vmatpush.msra.mxu0 %v1444
    %1579 = vmatpush.msra.mxu0 %v1440
    %1580 = vmatpush.msra.mxu0 %v1436
    %1581 = vmatpush.msra.mxu0 %v1432
    %1582 = vmatpush.msra.mxu0 %v1428
    %1583 = vmatpush.msra.mxu0 %v1424
    %1584 = vmatpush.msra.mxu0 %v1420
    %1585 = vmatpush.msra.mxu0 %v1416
    %1586 = vmatpush.msra.mxu0 %v1412
    %1587 = vmatpush.msra.mxu0 %v1408
    %1588 = vmatpush.msra.mxu0 %v1404
    %1589 = vmatpush.msra.mxu0 %v1400
    %1590 = vmatpush.msra.mxu0 %v1396
    %1591 = vmatpush.msra.mxu0 %v1392
    %1592 = vmatpush.msra.mxu0 %v1388
    %1593 = vmatpush.msra.mxu0 %v1384
    %1594 = vmatmul.f32.gmra.mxu0 %v1373
    %v1595 = vpop.f32.mrf.mxu0
    %v1596 = vadd.f32 %v1450, %v1595
    %1597 = vmatmul.f32.gmra.mxu0 %v1374
    %v1598 = vpop.f32.mrf.mxu0
    %v1599 = vadd.f32 %v1450, %v1598
    %1600 = vmatmul.f32.gmra.mxu0 %v1375
    %v1601 = vpop.f32.mrf.mxu0
    %v1602 = vadd.f32 %v1450, %v1601
    %1603 = vmatmul.f32.gmra.mxu0 %v1376
    %v1604 = vpop.f32.mrf.mxu0
    %v1605 = vadd.f32 %v1450, %v1604
    %1606 = vmatmul.f32.gmra.mxu0 %v1377
    %v1607 = vpop.f32.mrf.mxu0
    %v1608 = vadd.f32 %v1450, %v1607
    %1609 = vmatmul.f32.gmra.mxu0 %v1378
    %v1610 = vpop.f32.mrf.mxu0
    %v1611 = vadd.f32 %v1450, %v1610
    %1612 = vmatmul.f32.gmra.mxu0 %v1379
    %v1613 = vpop.f32.mrf.mxu0
    %v1614 = vadd.f32 %v1450, %v1613
    %1615 = vmatmul.f32.gmra.mxu0 %v1380
    %v1616 = vpop.f32.mrf.mxu0
    %v1617 = vadd.f32 %v1450, %v1616
    %1618 = vdwg.mxu0
    %1619 = vst [vmem:[#allocation2] sm:$0xff] %v1473
    %1620 = vst [vmem:[#allocation2 + $0x8] sm:$0xff] %v1514
    %1621 = vst [vmem:[#allocation2 + $0x10] sm:$0xff] %v1555
    %1622 = vst [vmem:[#allocation2 + $0x18] sm:$0xff] %v1596
    %1623 = vst [vmem:[#allocation2 + $0x20] sm:$0xff] %v1476
    %1624 = vst [vmem:[#allocation2 + $0x28] sm:$0xff] %v1517
    %1625 = vst [vmem:[#allocation2 + $0x30] sm:$0xff] %v1558
    %1626 = vst [vmem:[#allocation2 + $0x38] sm:$0xff] %v1599
    %1627 = vst [vmem:[#allocation2 + $0x40] sm:$0xff] %v1479
    %1628 = vst [vmem:[#allocation2 + $0x48] sm:$0xff] %v1520
    %1629 = vst [vmem:[#allocation2 + $0x50] sm:$0xff] %v1561
    %1630 = vst [vmem:[#allocation2 + $0x58] sm:$0xff] %v1602
    %1631 = vst [vmem:[#allocation2 + $0x60] sm:$0xff] %v1482
    %1632 = vst [vmem:[#allocation2 + $0x68] sm:$0xff] %v1523
    %1633 = vst [vmem:[#allocation2 + $0x70] sm:$0xff] %v1564
    %1634 = vst [vmem:[#allocation2 + $0x78] sm:$0xff] %v1605
    %1635 = vst [vmem:[#allocation2 + $0x80] sm:$0xff] %v1485
    %1636 = vst [vmem:[#allocation2 + $0x88] sm:$0xff] %v1526
    %1637 = vst [vmem:[#allocation2 + $0x90] sm:$0xff] %v1567
    %1638 = vst [vmem:[#allocation2 + $0x98] sm:$0xff] %v1608
    %1639 = vst [vmem:[#allocation2 + $0xa0] sm:$0xff] %v1488
    %1640 = vst [vmem:[#allocation2 + $0xa8] sm:$0xff] %v1529
    %1641 = vst [vmem:[#allocation2 + $0xb0] sm:$0xff] %v1570
    %1642 = vst [vmem:[#allocation2 + $0xb8] sm:$0xff] %v1611
    %1643 = vst [vmem:[#allocation2 + $0xc0] sm:$0xff] %v1491
    %1644 = vst [vmem:[#allocation2 + $0xc8] sm:$0xff] %v1532
    %1645 = vst [vmem:[#allocation2 + $0xd0] sm:$0xff] %v1573
    %1646 = vst [vmem:[#allocation2 + $0xd8] sm:$0xff] %v1614
    %1647 = vst [vmem:[#allocation2 + $0xe0] sm:$0xff] %v1494
    %1648 = vst [vmem:[#allocation2 + $0xe8] sm:$0xff] %v1535
    %1649 = vst [vmem:[#allocation2 + $0xf0] sm:$0xff] %v1576
    %1650 = vst [vmem:[#allocation2 + $0xf8] sm:$0xff] %v1617
    %v1651 = vld [vmem:[#allocation8] sm:$0xff]
    %v1652 = vld [vmem:[#allocation8 + $0x8] sm:$0xff]
    %v1653 = vld [vmem:[#allocation8 + $0x10] sm:$0xff]
    %v1654 = vld [vmem:[#allocation8 + $0x18] sm:$0xff]
    %v1655 = vld [vmem:[#allocation8 + $0x20] sm:$0xff]
    %v1656 = vld [vmem:[#allocation8 + $0x28] sm:$0xff]
    %v1657 = vld [vmem:[#allocation8 + $0x30] sm:$0xff]
    %v1658 = vld [vmem:[#allocation8 + $0x38] sm:$0xff]
    %v1659 = vld [vmem:[#allocation8 + $0x40] sm:$0xff]
    %v1660 = vld [vmem:[#allocation8 + $0x48] sm:$0xff]
    %v1661 = vld [vmem:[#allocation8 + $0x50] sm:$0xff]
    %v1662 = vld [vmem:[#allocation8 + $0x58] sm:$0xff]
    %v1663 = vld [vmem:[#allocation8 + $0x60] sm:$0xff]
    %v1664 = vld [vmem:[#allocation8 + $0x68] sm:$0xff]
    %v1665 = vld [vmem:[#allocation8 + $0x70] sm:$0xff]
    %v1666 = vld [vmem:[#allocation8 + $0x78] sm:$0xff]
    %v1667 = vld [vmem:[#allocation8 + $0x80] sm:$0xff]
    %v1668 = vld [vmem:[#allocation8 + $0x88] sm:$0xff]
    %v1669 = vld [vmem:[#allocation8 + $0x90] sm:$0xff]
    %v1670 = vld [vmem:[#allocation8 + $0x98] sm:$0xff]
    %v1671 = vld [vmem:[#allocation8 + $0xa0] sm:$0xff]
    %v1672 = vld [vmem:[#allocation8 + $0xa8] sm:$0xff]
    %v1673 = vld [vmem:[#allocation8 + $0xb0] sm:$0xff]
    %v1674 = vld [vmem:[#allocation8 + $0xb8] sm:$0xff]
    %v1675 = vld [vmem:[#allocation8 + $0xc0] sm:$0xff]
    %v1676 = vld [vmem:[#allocation8 + $0xc8] sm:$0xff]
    %v1677 = vld [vmem:[#allocation8 + $0xd0] sm:$0xff]
    %v1678 = vld [vmem:[#allocation8 + $0xd8] sm:$0xff]
    %v1679 = vld [vmem:[#allocation8 + $0xe0] sm:$0xff]
    %v1680 = vld [vmem:[#allocation8 + $0xe8] sm:$0xff]
    %v1681 = vld [vmem:[#allocation8 + $0xf0] sm:$0xff]
    %v1682 = vld [vmem:[#allocation8 + $0xf8] sm:$0xff]
    %v1683 = vld [vmem:[#allocation8 + $0x100] sm:$0xff]
    %v1684 = vld [vmem:[#allocation8 + $0x108] sm:$0xff]
    %v1685 = vld [vmem:[#allocation8 + $0x110] sm:$0xff]
    %v1686 = vld [vmem:[#allocation8 + $0x118] sm:$0xff]
    %v1687 = vld [vmem:[#allocation8 + $0x120] sm:$0xff]
    %v1688 = vld [vmem:[#allocation8 + $0x128] sm:$0xff]
    %v1689 = vld [vmem:[#allocation8 + $0x130] sm:$0xff]
    %v1690 = vld [vmem:[#allocation8 + $0x138] sm:$0xff]
    %v1691 = vld [vmem:[#allocation8 + $0x140] sm:$0xff]
    %v1692 = vld [vmem:[#allocation8 + $0x148] sm:$0xff]
    %v1693 = vld [vmem:[#allocation8 + $0x150] sm:$0xff]
    %v1694 = vld [vmem:[#allocation8 + $0x158] sm:$0xff]
    %v1695 = vld [vmem:[#allocation8 + $0x160] sm:$0xff]
    %v1696 = vld [vmem:[#allocation8 + $0x168] sm:$0xff]
    %v1697 = vld [vmem:[#allocation8 + $0x170] sm:$0xff]
    %v1698 = vld [vmem:[#allocation8 + $0x178] sm:$0xff]
    %v1699 = vld [vmem:[#allocation8 + $0x180] sm:$0xff]
    %v1700 = vld [vmem:[#allocation8 + $0x188] sm:$0xff]
    %v1701 = vld [vmem:[#allocation8 + $0x190] sm:$0xff]
    %v1702 = vld [vmem:[#allocation8 + $0x198] sm:$0xff]
    %v1703 = vld [vmem:[#allocation8 + $0x1a0] sm:$0xff]
    %v1704 = vld [vmem:[#allocation8 + $0x1a8] sm:$0xff]
    %v1705 = vld [vmem:[#allocation8 + $0x1b0] sm:$0xff]
    %v1706 = vld [vmem:[#allocation8 + $0x1b8] sm:$0xff]
    %v1707 = vld [vmem:[#allocation8 + $0x1c0] sm:$0xff]
    %v1708 = vld [vmem:[#allocation8 + $0x1c8] sm:$0xff]
    %v1709 = vld [vmem:[#allocation8 + $0x1d0] sm:$0xff]
    %v1710 = vld [vmem:[#allocation8 + $0x1d8] sm:$0xff]
    %v1711 = vld [vmem:[#allocation8 + $0x1e0] sm:$0xff]
    %v1712 = vld [vmem:[#allocation8 + $0x1e8] sm:$0xff]
    %v1713 = vld [vmem:[#allocation8 + $0x1f0] sm:$0xff]
    %v1714 = vld [vmem:[#allocation8 + $0x1f8] sm:$0xff]
    %v1715 = vld [vmem:[%s498] sm:$0xff]
    %v1716 = vld [vmem:[%s498 + $0x8] sm:$0xff]
    %v1717 = vld [vmem:[%s498 + $0x10] sm:$0xff]
    %v1718 = vld [vmem:[%s498 + $0x18] sm:$0xff]
    %v1719 = vld [vmem:[%s505] sm:$0xff]
    %v1720 = vld [vmem:[%s505 + $0x8] sm:$0xff]
    %v1721 = vld [vmem:[%s505 + $0x10] sm:$0xff]
    %v1722 = vld [vmem:[%s505 + $0x18] sm:$0xff]
    %v1723 = vsel %vm172, %v1715, %v1719
    %v1724 = vsel %vm173, %v1716, %v1720
    %v1725 = vsel %vm174, %v1717, %v1721
    %v1726 = vsel %vm175, %v1718, %v1722
    %v1727 = vmul.f32 %v1723, 0.5
    %v1728 = vmul.f32 %v1724, 0.5
    %v1729 = vmul.f32 %v1725, 0.5
    %v1730 = vtanh.pop %v1727
    %v1731 = vtanh.pop %v1728
    %v1732 = vtanh.pop %v1729
    %v1733 = vmul.f32 %v1730, 0.5
    %v1734 = vmul.f32 %v1731, 0.5
    %v1735 = vmul.f32 %v1732, 0.5
    %v1736 = vadd.f32 %v1733, 0.5
    %v1737 = vadd.f32 %v1734, 0.5
    %v1738 = vadd.f32 %v1735, 0.5
    %v1739 = vtanh.pop %v1726
    %v1740 = vmul.f32 %v1737, 0.0
    %v1741 = vmul.f32 %v1736, %v1739
    %v1742 = vadd.f32 %v1740, %v1741
    %v1743 = vtanh.pop %v1742
    %v1744 = vmul.f32 %v1738, %v1743
    %1745 = vst.msk [vmem:[#allocation3] sm:$0xff] %vm532, %v1744
    %1746 = vst.msk [vmem:[%s534] sm:$0xff] %vm535, %v1744
    %v1747 = vld [vmem:[%s539] sm:$0xff]
    %v1748 = vld [vmem:[%s539 + $0x8] sm:$0xff]
    %v1749 = vld [vmem:[%s539 + $0x10] sm:$0xff]
    %v1750 = vld [vmem:[%s539 + $0x18] sm:$0xff]
    %v1751 = vld [vmem:[%s546] sm:$0xff]
    %v1752 = vld [vmem:[%s546 + $0x8] sm:$0xff]
    %v1753 = vld [vmem:[%s546 + $0x10] sm:$0xff]
    %v1754 = vld [vmem:[%s546 + $0x18] sm:$0xff]
    %v1755 = vsel %vm172, %v1747, %v1751
    %v1756 = vsel %vm173, %v1748, %v1752
    %v1757 = vsel %vm174, %v1749, %v1753
    %v1758 = vsel %vm175, %v1750, %v1754
    %1759 = vmatpush.msra.mxu0 %v1711
    %1760 = vmatpush.msra.mxu0 %v1707
    %1761 = vmatpush.msra.mxu0 %v1703
    %1762 = vmatpush.msra.mxu0 %v1699
    %1763 = vmatpush.msra.mxu0 %v1695
    %1764 = vmatpush.msra.mxu0 %v1691
    %1765 = vmatpush.msra.mxu0 %v1687
    %1766 = vmatpush.msra.mxu0 %v1683
    %1767 = vmatpush.msra.mxu0 %v1679
    %1768 = vmatpush.msra.mxu0 %v1675
    %1769 = vmatpush.msra.mxu0 %v1671
    %1770 = vmatpush.msra.mxu0 %v1667
    %1771 = vmatpush.msra.mxu0 %v1663
    %1772 = vmatpush.msra.mxu0 %v1659
    %1773 = vmatpush.msra.mxu0 %v1655
    %1774 = vmatpush.msra.mxu0 %v1651
    %1775 = vmatmul.f32.gmra.mxu0 %v1744
    %v1776 = vpop.f32.mrf.mxu0
    %v1777 = vadd.f32 0.0, %v1776
    %1778 = vdwg.mxu0
    %1779 = vmatpush.msra.mxu0 %v1712
    %1780 = vmatpush.msra.mxu0 %v1708
    %1781 = vmatpush.msra.mxu0 %v1704
    %1782 = vmatpush.msra.mxu0 %v1700
    %1783 = vmatpush.msra.mxu0 %v1696
    %1784 = vmatpush.msra.mxu0 %v1692
    %1785 = vmatpush.msra.mxu0 %v1688
    %1786 = vmatpush.msra.mxu0 %v1684
    %1787 = vmatpush.msra.mxu0 %v1680
    %1788 = vmatpush.msra.mxu0 %v1676
    %1789 = vmatpush.msra.mxu0 %v1672
    %1790 = vmatpush.msra.mxu0 %v1668
    %1791 = vmatpush.msra.mxu0 %v1664
    %1792 = vmatpush.msra.mxu0 %v1660
    %1793 = vmatpush.msra.mxu0 %v1656
    %1794 = vmatpush.msra.mxu0 %v1652
    %1795 = vmatmul.f32.gmra.mxu0 %v1744
    %v1796 = vpop.f32.mrf.mxu0
    %v1797 = vadd.f32 0.0, %v1796
    %1798 = vdwg.mxu0
    %1799 = vmatpush.msra.mxu0 %v1713
    %1800 = vmatpush.msra.mxu0 %v1709
    %1801 = vmatpush.msra.mxu0 %v1705
    %1802 = vmatpush.msra.mxu0 %v1701
    %1803 = vmatpush.msra.mxu0 %v1697
    %1804 = vmatpush.msra.mxu0 %v1693
    %1805 = vmatpush.msra.mxu0 %v1689
    %1806 = vmatpush.msra.mxu0 %v1685
    %1807 = vmatpush.msra.mxu0 %v1681
    %1808 = vmatpush.msra.mxu0 %v1677
    %1809 = vmatpush.msra.mxu0 %v1673
    %1810 = vmatpush.msra.mxu0 %v1669
    %1811 = vmatpush.msra.mxu0 %v1665
    %1812 = vmatpush.msra.mxu0 %v1661
    %1813 = vmatpush.msra.mxu0 %v1657
    %1814 = vmatpush.msra.mxu0 %v1653
    %1815 = vmatmul.f32.gmra.mxu0 %v1744
    %v1816 = vpop.f32.mrf.mxu0
    %v1817 = vadd.f32 0.0, %v1816
    %1818 = vdwg.mxu0
    %1819 = vmatpush.msra.mxu0 %v1714
    %1820 = vmatpush.msra.mxu0 %v1710
    %1821 = vmatpush.msra.mxu0 %v1706
    %1822 = vmatpush.msra.mxu0 %v1702
    %1823 = vmatpush.msra.mxu0 %v1698
    %1824 = vmatpush.msra.mxu0 %v1694
    %1825 = vmatpush.msra.mxu0 %v1690
    %1826 = vmatpush.msra.mxu0 %v1686
    %1827 = vmatpush.msra.mxu0 %v1682
    %1828 = vmatpush.msra.mxu0 %v1678
    %1829 = vmatpush.msra.mxu0 %v1674
    %1830 = vmatpush.msra.mxu0 %v1670
    %1831 = vmatpush.msra.mxu0 %v1666
    %1832 = vmatpush.msra.mxu0 %v1662
    %1833 = vmatpush.msra.mxu0 %v1658
    %1834 = vmatpush.msra.mxu0 %v1654
    %1835 = vmatmul.f32.gmra.mxu0 %v1744
    %v1836 = vpop.f32.mrf.mxu0
    %v1837 = vadd.f32 0.0, %v1836
    %1838 = vdwg.mxu0
    %v1839 = vadd.f32 %v1755, %v1777
    %v1840 = vadd.f32 %v1756, %v1797
    %v1841 = vadd.f32 %v1757, %v1817
    %v1842 = vadd.f32 %v1758, %v1837
    %v1843 = vmul.f32 %v1839, 0.5
    %v1844 = vmul.f32 %v1840, 0.5
    %v1845 = vmul.f32 %v1841, 0.5
    %v1846 = vtanh.pop %v1843
    %v1847 = vtanh.pop %v1844
    %v1848 = vtanh.pop %v1845
    %v1849 = vmul.f32 %v1846, 0.5
    %v1850 = vmul.f32 %v1847, 0.5
    %v1851 = vmul.f32 %v1848, 0.5
    %v1852 = vadd.f32 %v1849, 0.5
    %v1853 = vadd.f32 %v1850, 0.5
    %v1854 = vadd.f32 %v1851, 0.5
    %v1855 = vtanh.pop %v1842
    %v1856 = vmul.f32 %v1853, %v1742
    %v1857 = vmul.f32 %v1852, %v1855
    %v1858 = vadd.f32 %v1856, %v1857
    %v1859 = vtanh.pop %v1858
    %v1860 = vmul.f32 %v1854, %v1859
    %1861 = vst.msk [vmem:[%s657] sm:$0xff] %vm532, %v1860
    %1862 = vst.msk [vmem:[%s659] sm:$0xff] %vm535, %v1860
    %v1863 = vld [vmem:[%s663] sm:$0xff]
    %v1864 = vld [vmem:[%s663 + $0x8] sm:$0xff]
    %v1865 = vld [vmem:[%s663 + $0x10] sm:$0xff]
    %v1866 = vld [vmem:[%s663 + $0x18] sm:$0xff]
    %v1867 = vld [vmem:[%s670] sm:$0xff]
    %v1868 = vld [vmem:[%s670 + $0x8] sm:$0xff]
    %v1869 = vld [vmem:[%s670 + $0x10] sm:$0xff]
    %v1870 = vld [vmem:[%s670 + $0x18] sm:$0xff]
    %v1871 = vsel %vm172, %v1863, %v1867
    %v1872 = vsel %vm173, %v1864, %v1868
    %v1873 = vsel %vm174, %v1865, %v1869
    %v1874 = vsel %vm175, %v1866, %v1870
    %1875 = vmatpush.msra.mxu0 %v1711
    %1876 = vmatpush.msra.mxu0 %v1707
    %1877 = vmatpush.msra.mxu0 %v1703
    %1878 = vmatpush.msra.mxu0 %v1699
    %1879 = vmatpush.msra.mxu0 %v1695
    %1880 = vmatpush.msra.mxu0 %v1691
    %1881 = vmatpush.msra.mxu0 %v1687
    %1882 = vmatpush.msra.mxu0 %v1683
    %1883 = vmatpush.msra.mxu0 %v1679
    %1884 = vmatpush.msra.mxu0 %v1675
    %1885 = vmatpush.msra.mxu0 %v1671
    %1886 = vmatpush.msra.mxu0 %v1667
    %1887 = vmatpush.msra.mxu0 %v1663
    %1888 = vmatpush.msra.mxu0 %v1659
    %1889 = vmatpush.msra.mxu0 %v1655
    %1890 = vmatpush.msra.mxu0 %v1651
    %1891 = vmatmul.f32.gmra.mxu0 %v1860
    %v1892 = vpop.f32.mrf.mxu0
    %v1893 = vadd.f32 0.0, %v1892
    %1894 = vdwg.mxu0
    %1895 = vmatpush.msra.mxu0 %v1712
    %1896 = vmatpush.msra.mxu0 %v1708
    %1897 = vmatpush.msra.mxu0 %v1704
    %1898 = vmatpush.msra.mxu0 %v1700
    %1899 = vmatpush.msra.mxu0 %v1696
    %1900 = vmatpush.msra.mxu0 %v1692
    %1901 = vmatpush.msra.mxu0 %v1688
    %1902 = vmatpush.msra.mxu0 %v1684
    %1903 = vmatpush.msra.mxu0 %v1680
    %1904 = vmatpush.msra.mxu0 %v1676
    %1905 = vmatpush.msra.mxu0 %v1672
    %1906 = vmatpush.msra.mxu0 %v1668
    %1907 = vmatpush.msra.mxu0 %v1664
    %1908 = vmatpush.msra.mxu0 %v1660
    %1909 = vmatpush.msra.mxu0 %v1656
    %1910 = vmatpush.msra.mxu0 %v1652
    %1911 = vmatmul.f32.gmra.mxu0 %v1860
    %v1912 = vpop.f32.mrf.mxu0
    %v1913 = vadd.f32 0.0, %v1912
    %1914 = vdwg.mxu0
    %1915 = vmatpush.msra.mxu0 %v1713
    %1916 = vmatpush.msra.mxu0 %v1709
    %1917 = vmatpush.msra.mxu0 %v1705
    %1918 = vmatpush.msra.mxu0 %v1701
    %1919 = vmatpush.msra.mxu0 %v1697
    %1920 = vmatpush.msra.mxu0 %v1693
    %1921 = vmatpush.msra.mxu0 %v1689
    %1922 = vmatpush.msra.mxu0 %v1685
    %1923 = vmatpush.msra.mxu0 %v1681
    %1924 = vmatpush.msra.mxu0 %v1677
    %1925 = vmatpush.msra.mxu0 %v1673
    %1926 = vmatpush.msra.mxu0 %v1669
    %1927 = vmatpush.msra.mxu0 %v1665
    %1928 = vmatpush.msra.mxu0 %v1661
    %1929 = vmatpush.msra.mxu0 %v1657
    %1930 = vmatpush.msra.mxu0 %v1653
    %1931 = vmatmul.f32.gmra.mxu0 %v1860
    %v1932 = vpop.f32.mrf.mxu0
    %v1933 = vadd.f32 0.0, %v1932
    %1934 = vdwg.mxu0
    %1935 = vmatpush.msra.mxu0 %v1714
    %1936 = vmatpush.msra.mxu0 %v1710
    %1937 = vmatpush.msra.mxu0 %v1706
    %1938 = vmatpush.msra.mxu0 %v1702
    %1939 = vmatpush.msra.mxu0 %v1698
    %1940 = vmatpush.msra.mxu0 %v1694
    %1941 = vmatpush.msra.mxu0 %v1690
    %1942 = vmatpush.msra.mxu0 %v1686
    %1943 = vmatpush.msra.mxu0 %v1682
    %1944 = vmatpush.msra.mxu0 %v1678
    %1945 = vmatpush.msra.mxu0 %v1674
    %1946 = vmatpush.msra.mxu0 %v1670
    %1947 = vmatpush.msra.mxu0 %v1666
    %1948 = vmatpush.msra.mxu0 %v1662
    %1949 = vmatpush.msra.mxu0 %v1658
    %1950 = vmatpush.msra.mxu0 %v1654
    %1951 = vmatmul.f32.gmra.mxu0 %v1860
    %v1952 = vpop.f32.mrf.mxu0
    %v1953 = vadd.f32 0.0, %v1952
    %1954 = vdwg.mxu0
    %v1955 = vadd.f32 %v1871, %v1893
    %v1956 = vadd.f32 %v1872, %v1913
    %v1957 = vadd.f32 %v1873, %v1933
    %v1958 = vadd.f32 %v1874, %v1953
    %v1959 = vmul.f32 %v1955, 0.5
    %v1960 = vmul.f32 %v1956, 0.5
    %v1961 = vmul.f32 %v1957, 0.5
    %v1962 = vtanh.pop %v1959
    %v1963 = vtanh.pop %v1960
    %v1964 = vtanh.pop %v1961
    %v1965 = vmul.f32 %v1962, 0.5
    %v1966 = vmul.f32 %v1963, 0.5
    %v1967 = vmul.f32 %v1964, 0.5
    %v1968 = vadd.f32 %v1965, 0.5
    %v1969 = vadd.f32 %v1966, 0.5
    %v1970 = vadd.f32 %v1967, 0.5
    %v1971 = vtanh.pop %v1958
    %v1972 = vmul.f32 %v1969, %v1858
    %v1973 = vmul.f32 %v1968, %v1971
    %v1974 = vadd.f32 %v1972, %v1973
    %v1975 = vtanh.pop %v1974
    %v1976 = vmul.f32 %v1970, %v1975
    %1977 = vst.msk [vmem:[%s781] sm:$0xff] %vm532, %v1976
    %1978 = vst.msk [vmem:[%s783] sm:$0xff] %vm535, %v1976
    %v1979 = vld [vmem:[%s787] sm:$0xff]
    %v1980 = vld [vmem:[%s787 + $0x8] sm:$0xff]
    %v1981 = vld [vmem:[%s787 + $0x10] sm:$0xff]
    %v1982 = vld [vmem:[%s787 + $0x18] sm:$0xff]
    %v1983 = vld [vmem:[%s794] sm:$0xff]
    %v1984 = vld [vmem:[%s794 + $0x8] sm:$0xff]
    %v1985 = vld [vmem:[%s794 + $0x10] sm:$0xff]
    %v1986 = vld [vmem:[%s794 + $0x18] sm:$0xff]
    %v1987 = vsel %vm172, %v1979, %v1983
    %v1988 = vsel %vm173, %v1980, %v1984
    %v1989 = vsel %vm174, %v1981, %v1985
    %v1990 = vsel %vm175, %v1982, %v1986
    %1991 = vmatpush.msra.mxu0 %v1711
    %1992 = vmatpush.msra.mxu0 %v1707
    %1993 = vmatpush.msra.mxu0 %v1703
    %1994 = vmatpush.msra.mxu0 %v1699
    %1995 = vmatpush.msra.mxu0 %v1695
    %1996 = vmatpush.msra.mxu0 %v1691
    %1997 = vmatpush.msra.mxu0 %v1687
    %1998 = vmatpush.msra.mxu0 %v1683
    %1999 = vmatpush.msra.mxu0 %v1679
    %2000 = vmatpush.msra.mxu0 %v1675
    %2001 = vmatpush.msra.mxu0 %v1671
    %2002 = vmatpush.msra.mxu0 %v1667
    %2003 = vmatpush.msra.mxu0 %v1663
    %2004 = vmatpush.msra.mxu0 %v1659
    %2005 = vmatpush.msra.mxu0 %v1655
    %2006 = vmatpush.msra.mxu0 %v1651
    %2007 = vmatmul.f32.gmra.mxu0 %v1976
    %v2008 = vpop.f32.mrf.mxu0
    %v2009 = vadd.f32 0.0, %v2008
    %2010 = vdwg.mxu0
    %2011 = vmatpush.msra.mxu0 %v1712
    %2012 = vmatpush.msra.mxu0 %v1708
    %2013 = vmatpush.msra.mxu0 %v1704
    %2014 = vmatpush.msra.mxu0 %v1700
    %2015 = vmatpush.msra.mxu0 %v1696
    %2016 = vmatpush.msra.mxu0 %v1692
    %2017 = vmatpush.msra.mxu0 %v1688
    %2018 = vmatpush.msra.mxu0 %v1684
    %2019 = vmatpush.msra.mxu0 %v1680
    %2020 = vmatpush.msra.mxu0 %v1676
    %2021 = vmatpush.msra.mxu0 %v1672
    %2022 = vmatpush.msra.mxu0 %v1668
    %2023 = vmatpush.msra.mxu0 %v1664
    %2024 = vmatpush.msra.mxu0 %v1660
    %2025 = vmatpush.msra.mxu0 %v1656
    %2026 = vmatpush.msra.mxu0 %v1652
    %2027 = vmatmul.f32.gmra.mxu0 %v1976
    %v2028 = vpop.f32.mrf.mxu0
    %v2029 = vadd.f32 0.0, %v2028
    %2030 = vdwg.mxu0
    %2031 = vmatpush.msra.mxu0 %v1713
    %2032 = vmatpush.msra.mxu0 %v1709
    %2033 = vmatpush.msra.mxu0 %v1705
    %2034 = vmatpush.msra.mxu0 %v1701
    %2035 = vmatpush.msra.mxu0 %v1697
    %2036 = vmatpush.msra.mxu0 %v1693
    %2037 = vmatpush.msra.mxu0 %v1689
    %2038 = vmatpush.msra.mxu0 %v1685
    %2039 = vmatpush.msra.mxu0 %v1681
    %2040 = vmatpush.msra.mxu0 %v1677
    %2041 = vmatpush.msra.mxu0 %v1673
    %2042 = vmatpush.msra.mxu0 %v1669
    %2043 = vmatpush.msra.mxu0 %v1665
    %2044 = vmatpush.msra.mxu0 %v1661
    %2045 = vmatpush.msra.mxu0 %v1657
    %2046 = vmatpush.msra.mxu0 %v1653
    %2047 = vmatmul.f32.gmra.mxu0 %v1976
    %v2048 = vpop.f32.mrf.mxu0
    %v2049 = vadd.f32 0.0, %v2048
    %2050 = vdwg.mxu0
    %2051 = vmatpush.msra.mxu0 %v1714
    %2052 = vmatpush.msra.mxu0 %v1710
    %2053 = vmatpush.msra.mxu0 %v1706
    %2054 = vmatpush.msra.mxu0 %v1702
    %2055 = vmatpush.msra.mxu0 %v1698
    %2056 = vmatpush.msra.mxu0 %v1694
    %2057 = vmatpush.msra.mxu0 %v1690
    %2058 = vmatpush.msra.mxu0 %v1686
    %2059 = vmatpush.msra.mxu0 %v1682
    %2060 = vmatpush.msra.mxu0 %v1678
    %2061 = vmatpush.msra.mxu0 %v1674
    %2062 = vmatpush.msra.mxu0 %v1670
    %2063 = vmatpush.msra.mxu0 %v1666
    %2064 = vmatpush.msra.mxu0 %v1662
    %2065 = vmatpush.msra.mxu0 %v1658
    %2066 = vmatpush.msra.mxu0 %v1654
    %2067 = vmatmul.f32.gmra.mxu0 %v1976
    %v2068 = vpop.f32.mrf.mxu0
    %v2069 = vadd.f32 0.0, %v2068
    %2070 = vdwg.mxu0
    %v2071 = vadd.f32 %v1987, %v2009
    %v2072 = vadd.f32 %v1988, %v2029
    %v2073 = vadd.f32 %v1989, %v2049
    %v2074 = vadd.f32 %v1990, %v2069
    %v2075 = vmul.f32 %v2071, 0.5
    %v2076 = vmul.f32 %v2072, 0.5
    %v2077 = vmul.f32 %v2073, 0.5
    %v2078 = vtanh.pop %v2075
    %v2079 = vtanh.pop %v2076
    %v2080 = vtanh.pop %v2077
    %v2081 = vmul.f32 %v2078, 0.5
    %v2082 = vmul.f32 %v2079, 0.5
    %v2083 = vmul.f32 %v2080, 0.5
    %v2084 = vadd.f32 %v2081, 0.5
    %v2085 = vadd.f32 %v2082, 0.5
    %v2086 = vadd.f32 %v2083, 0.5
    %v2087 = vtanh.pop %v2074
    %v2088 = vmul.f32 %v2085, %v1974
    %v2089 = vmul.f32 %v2084, %v2087
    %v2090 = vadd.f32 %v2088, %v2089
    %v2091 = vtanh.pop %v2090
    %v2092 = vmul.f32 %v2086, %v2091
    %2093 = vst.msk [vmem:[%s905] sm:$0xff] %vm532, %v2092
    %2094 = vst.msk [vmem:[%s907] sm:$0xff] %vm535, %v2092
    %v2095 = vld [vmem:[%s794] sm:$0xff]
    %v2096 = vld [vmem:[%s794 + $0x8] sm:$0xff]
    %v2097 = vld [vmem:[%s794 + $0x10] sm:$0xff]
    %v2098 = vld [vmem:[%s794 + $0x18] sm:$0xff]
    %v2099 = vld [vmem:[%s787] sm:$0xff]
    %v2100 = vld [vmem:[%s787 + $0x8] sm:$0xff]
    %v2101 = vld [vmem:[%s787 + $0x10] sm:$0xff]
    %v2102 = vld [vmem:[%s787 + $0x18] sm:$0xff]
    %v2103 = vsel %vm172, %v2095, %v2099
    %v2104 = vsel %vm173, %v2096, %v2100
    %v2105 = vsel %vm174, %v2097, %v2101
    %v2106 = vsel %vm175, %v2098, %v2102
    %2107 = vmatpush.msra.mxu0 %v1711
    %2108 = vmatpush.msra.mxu0 %v1707
    %2109 = vmatpush.msra.mxu0 %v1703
    %2110 = vmatpush.msra.mxu0 %v1699
    %2111 = vmatpush.msra.mxu0 %v1695
    %2112 = vmatpush.msra.mxu0 %v1691
    %2113 = vmatpush.msra.mxu0 %v1687
    %2114 = vmatpush.msra.mxu0 %v1683
    %2115 = vmatpush.msra.mxu0 %v1679
    %2116 = vmatpush.msra.mxu0 %v1675
    %2117 = vmatpush.msra.mxu0 %v1671
    %2118 = vmatpush.msra.mxu0 %v1667
    %2119 = vmatpush.msra.mxu0 %v1663
    %2120 = vmatpush.msra.mxu0 %v1659
    %2121 = vmatpush.msra.mxu0 %v1655
    %2122 = vmatpush.msra.mxu0 %v1651
    %2123 = vmatmul.f32.gmra.mxu0 %v2092
    %v2124 = vpop.f32.mrf.mxu0
    %v2125 = vadd.f32 0.0, %v2124
    %2126 = vdwg.mxu0
    %2127 = vmatpush.msra.mxu0 %v1712
    %2128 = vmatpush.msra.mxu0 %v1708
    %2129 = vmatpush.msra.mxu0 %v1704
    %2130 = vmatpush.msra.mxu0 %v1700
    %2131 = vmatpush.msra.mxu0 %v1696
    %2132 = vmatpush.msra.mxu0 %v1692
    %2133 = vmatpush.msra.mxu0 %v1688
    %2134 = vmatpush.msra.mxu0 %v1684
    %2135 = vmatpush.msra.mxu0 %v1680
    %2136 = vmatpush.msra.mxu0 %v1676
    %2137 = vmatpush.msra.mxu0 %v1672
    %2138 = vmatpush.msra.mxu0 %v1668
    %2139 = vmatpush.msra.mxu0 %v1664
    %2140 = vmatpush.msra.mxu0 %v1660
    %2141 = vmatpush.msra.mxu0 %v1656
    %2142 = vmatpush.msra.mxu0 %v1652
    %2143 = vmatmul.f32.gmra.mxu0 %v2092
    %v2144 = vpop.f32.mrf.mxu0
    %v2145 = vadd.f32 0.0, %v2144
    %2146 = vdwg.mxu0
    %2147 = vmatpush.msra.mxu0 %v1713
    %2148 = vmatpush.msra.mxu0 %v1709
    %2149 = vmatpush.msra.mxu0 %v1705
    %2150 = vmatpush.msra.mxu0 %v1701
    %2151 = vmatpush.msra.mxu0 %v1697
    %2152 = vmatpush.msra.mxu0 %v1693
    %2153 = vmatpush.msra.mxu0 %v1689
    %2154 = vmatpush.msra.mxu0 %v1685
    %2155 = vmatpush.msra.mxu0 %v1681
    %2156 = vmatpush.msra.mxu0 %v1677
    %2157 = vmatpush.msra.mxu0 %v1673
    %2158 = vmatpush.msra.mxu0 %v1669
    %2159 = vmatpush.msra.mxu0 %v1665
    %2160 = vmatpush.msra.mxu0 %v1661
    %2161 = vmatpush.msra.mxu0 %v1657
    %2162 = vmatpush.msra.mxu0 %v1653
    %2163 = vmatmul.f32.gmra.mxu0 %v2092
    %v2164 = vpop.f32.mrf.mxu0
    %v2165 = vadd.f32 0.0, %v2164
    %2166 = vdwg.mxu0
    %2167 = vmatpush.msra.mxu0 %v1714
    %2168 = vmatpush.msra.mxu0 %v1710
    %2169 = vmatpush.msra.mxu0 %v1706
    %2170 = vmatpush.msra.mxu0 %v1702
    %2171 = vmatpush.msra.mxu0 %v1698
    %2172 = vmatpush.msra.mxu0 %v1694
    %2173 = vmatpush.msra.mxu0 %v1690
    %2174 = vmatpush.msra.mxu0 %v1686
    %2175 = vmatpush.msra.mxu0 %v1682
    %2176 = vmatpush.msra.mxu0 %v1678
    %2177 = vmatpush.msra.mxu0 %v1674
    %2178 = vmatpush.msra.mxu0 %v1670
    %2179 = vmatpush.msra.mxu0 %v1666
    %2180 = vmatpush.msra.mxu0 %v1662
    %2181 = vmatpush.msra.mxu0 %v1658
    %2182 = vmatpush.msra.mxu0 %v1654
    %2183 = vmatmul.f32.gmra.mxu0 %v2092
    %v2184 = vpop.f32.mrf.mxu0
    %v2185 = vadd.f32 0.0, %v2184
    %2186 = vdwg.mxu0
    %v2187 = vadd.f32 %v2103, %v2125
    %v2188 = vadd.f32 %v2104, %v2145
    %v2189 = vadd.f32 %v2105, %v2165
    %v2190 = vadd.f32 %v2106, %v2185
    %v2191 = vmul.f32 %v2187, 0.5
    %v2192 = vmul.f32 %v2188, 0.5
    %v2193 = vmul.f32 %v2189, 0.5
    %v2194 = vtanh.pop %v2191
    %v2195 = vtanh.pop %v2192
    %v2196 = vtanh.pop %v2193
    %v2197 = vmul.f32 %v2194, 0.5
    %v2198 = vmul.f32 %v2195, 0.5
    %v2199 = vmul.f32 %v2196, 0.5
    %v2200 = vadd.f32 %v2197, 0.5
    %v2201 = vadd.f32 %v2198, 0.5
    %v2202 = vadd.f32 %v2199, 0.5
    %v2203 = vtanh.pop %v2190
    %v2204 = vmul.f32 %v2201, %v2090
    %v2205 = vmul.f32 %v2200, %v2203
    %v2206 = vadd.f32 %v2204, %v2205
    %v2207 = vtanh.pop %v2206
    %v2208 = vmul.f32 %v2202, %v2207
    %2209 = vst.msk [vmem:[%s907] sm:$0xff] %vm532, %v2208
    %2210 = vst.msk [vmem:[%s905] sm:$0xff] %vm535, %v2208
    %v2211 = vld [vmem:[%s670] sm:$0xff]
    %v2212 = vld [vmem:[%s670 + $0x8] sm:$0xff]
    %v2213 = vld [vmem:[%s670 + $0x10] sm:$0xff]
    %v2214 = vld [vmem:[%s670 + $0x18] sm:$0xff]
    %v2215 = vld [vmem:[%s663] sm:$0xff]
    %v2216 = vld [vmem:[%s663 + $0x8] sm:$0xff]
    %v2217 = vld [vmem:[%s663 + $0x10] sm:$0xff]
    %v2218 = vld [vmem:[%s663 + $0x18] sm:$0xff]
    %v2219 = vsel %vm172, %v2211, %v2215
    %v2220 = vsel %vm173, %v2212, %v2216
    %v2221 = vsel %vm174, %v2213, %v2217
    %v2222 = vsel %vm175, %v2214, %v2218
    %2223 = vmatpush.msra.mxu0 %v1711
    %2224 = vmatpush.msra.mxu0 %v1707
    %2225 = vmatpush.msra.mxu0 %v1703
    %2226 = vmatpush.msra.mxu0 %v1699
    %2227 = vmatpush.msra.mxu0 %v1695
    %2228 = vmatpush.msra.mxu0 %v1691
    %2229 = vmatpush.msra.mxu0 %v1687
    %2230 = vmatpush.msra.mxu0 %v1683
    %2231 = vmatpush.msra.mxu0 %v1679
    %2232 = vmatpush.msra.mxu0 %v1675
    %2233 = vmatpush.msra.mxu0 %v1671
    %2234 = vmatpush.msra.mxu0 %v1667
    %2235 = vmatpush.msra.mxu0 %v1663
    %2236 = vmatpush.msra.mxu0 %v1659
    %2237 = vmatpush.msra.mxu0 %v1655
    %2238 = vmatpush.msra.mxu0 %v1651
    %2239 = vmatmul.f32.gmra.mxu0 %v2208
    %v2240 = vpop.f32.mrf.mxu0
    %v2241 = vadd.f32 0.0, %v2240
    %2242 = vdwg.mxu0
    %2243 = vmatpush.msra.mxu0 %v1712
    %2244 = vmatpush.msra.mxu0 %v1708
    %2245 = vmatpush.msra.mxu0 %v1704
    %2246 = vmatpush.msra.mxu0 %v1700
    %2247 = vmatpush.msra.mxu0 %v1696
    %2248 = vmatpush.msra.mxu0 %v1692
    %2249 = vmatpush.msra.mxu0 %v1688
    %2250 = vmatpush.msra.mxu0 %v1684
    %2251 = vmatpush.msra.mxu0 %v1680
    %2252 = vmatpush.msra.mxu0 %v1676
    %2253 = vmatpush.msra.mxu0 %v1672
    %2254 = vmatpush.msra.mxu0 %v1668
    %2255 = vmatpush.msra.mxu0 %v1664
    %2256 = vmatpush.msra.mxu0 %v1660
    %2257 = vmatpush.msra.mxu0 %v1656
    %2258 = vmatpush.msra.mxu0 %v1652
    %2259 = vmatmul.f32.gmra.mxu0 %v2208
    %v2260 = vpop.f32.mrf.mxu0
    %v2261 = vadd.f32 0.0, %v2260
    %2262 = vdwg.mxu0
    %2263 = vmatpush.msra.mxu0 %v1713
    %2264 = vmatpush.msra.mxu0 %v1709
    %2265 = vmatpush.msra.mxu0 %v1705
    %2266 = vmatpush.msra.mxu0 %v1701
    %2267 = vmatpush.msra.mxu0 %v1697
    %2268 = vmatpush.msra.mxu0 %v1693
    %2269 = vmatpush.msra.mxu0 %v1689
    %2270 = vmatpush.msra.mxu0 %v1685
    %2271 = vmatpush.msra.mxu0 %v1681
    %2272 = vmatpush.msra.mxu0 %v1677
    %2273 = vmatpush.msra.mxu0 %v1673
    %2274 = vmatpush.msra.mxu0 %v1669
    %2275 = vmatpush.msra.mxu0 %v1665
    %2276 = vmatpush.msra.mxu0 %v1661
    %2277 = vmatpush.msra.mxu0 %v1657
    %2278 = vmatpush.msra.mxu0 %v1653
    %2279 = vmatmul.f32.gmra.mxu0 %v2208
    %v2280 = vpop.f32.mrf.mxu0
    %v2281 = vadd.f32 0.0, %v2280
    %2282 = vdwg.mxu0
    %2283 = vmatpush.msra.mxu0 %v1714
    %2284 = vmatpush.msra.mxu0 %v1710
    %2285 = vmatpush.msra.mxu0 %v1706
    %2286 = vmatpush.msra.mxu0 %v1702
    %2287 = vmatpush.msra.mxu0 %v1698
    %2288 = vmatpush.msra.mxu0 %v1694
    %2289 = vmatpush.msra.mxu0 %v1690
    %2290 = vmatpush.msra.mxu0 %v1686
    %2291 = vmatpush.msra.mxu0 %v1682
    %2292 = vmatpush.msra.mxu0 %v1678
    %2293 = vmatpush.msra.mxu0 %v1674
    %2294 = vmatpush.msra.mxu0 %v1670
    %2295 = vmatpush.msra.mxu0 %v1666
    %2296 = vmatpush.msra.mxu0 %v1662
    %2297 = vmatpush.msra.mxu0 %v1658
    %2298 = vmatpush.msra.mxu0 %v1654
    %2299 = vmatmul.f32.gmra.mxu0 %v2208
    %v2300 = vpop.f32.mrf.mxu0
    %v2301 = vadd.f32 0.0, %v2300
    %2302 = vdwg.mxu0
    %v2303 = vadd.f32 %v2219, %v2241
    %v2304 = vadd.f32 %v2220, %v2261
    %v2305 = vadd.f32 %v2221, %v2281
    %v2306 = vadd.f32 %v2222, %v2301
    %v2307 = vmul.f32 %v2303, 0.5
    %v2308 = vmul.f32 %v2304, 0.5
    %v2309 = vmul.f32 %v2305, 0.5
    %v2310 = vtanh.pop %v2307
    %v2311 = vtanh.pop %v2308
    %v2312 = vtanh.pop %v2309
    %v2313 = vmul.f32 %v2310, 0.5
    %v2314 = vmul.f32 %v2311, 0.5
    %v2315 = vmul.f32 %v2312, 0.5
    %v2316 = vadd.f32 %v2313, 0.5
    %v2317 = vadd.f32 %v2314, 0.5
    %v2318 = vadd.f32 %v2315, 0.5
    %v2319 = vtanh.pop %v2306
    %v2320 = vmul.f32 %v2317, %v2206
    %v2321 = vmul.f32 %v2316, %v2319
    %v2322 = vadd.f32 %v2320, %v2321
    %v2323 = vtanh.pop %v2322
    %v2324 = vmul.f32 %v2318, %v2323
    %2325 = vst.msk [vmem:[%s783] sm:$0xff] %vm532, %v2324
    %2326 = vst.msk [vmem:[%s781] sm:$0xff] %vm535, %v2324
    %v2327 = vld [vmem:[%s546] sm:$0xff]
    %v2328 = vld [vmem:[%s546 + $0x8] sm:$0xff]
    %v2329 = vld [vmem:[%s546 + $0x10] sm:$0xff]
    %v2330 = vld [vmem:[%s546 + $0x18] sm:$0xff]
    %v2331 = vld [vmem:[%s539] sm:$0xff]
    %v2332 = vld [vmem:[%s539 + $0x8] sm:$0xff]
    %v2333 = vld [vmem:[%s539 + $0x10] sm:$0xff]
    %v2334 = vld [vmem:[%s539 + $0x18] sm:$0xff]
    %v2335 = vsel %vm172, %v2327, %v2331
    %v2336 = vsel %vm173, %v2328, %v2332
    %v2337 = vsel %vm174, %v2329, %v2333
    %v2338 = vsel %vm175, %v2330, %v2334
    %2339 = vmatpush.msra.mxu0 %v1711
    %2340 = vmatpush.msra.mxu0 %v1707
    %2341 = vmatpush.msra.mxu0 %v1703
    %2342 = vmatpush.msra.mxu0 %v1699
    %2343 = vmatpush.msra.mxu0 %v1695
    %2344 = vmatpush.msra.mxu0 %v1691
    %2345 = vmatpush.msra.mxu0 %v1687
    %2346 = vmatpush.msra.mxu0 %v1683
    %2347 = vmatpush.msra.mxu0 %v1679
    %2348 = vmatpush.msra.mxu0 %v1675
    %2349 = vmatpush.msra.mxu0 %v1671
    %2350 = vmatpush.msra.mxu0 %v1667
    %2351 = vmatpush.msra.mxu0 %v1663
    %2352 = vmatpush.msra.mxu0 %v1659
    %2353 = vmatpush.msra.mxu0 %v1655
    %2354 = vmatpush.msra.mxu0 %v1651
    %2355 = vmatmul.f32.gmra.mxu0 %v2324
    %v2356 = vpop.f32.mrf.mxu0
    %v2357 = vadd.f32 0.0, %v2356
    %2358 = vdwg.mxu0
    %2359 = vmatpush.msra.mxu0 %v1712
    %2360 = vmatpush.msra.mxu0 %v1708
    %2361 = vmatpush.msra.mxu0 %v1704
    %2362 = vmatpush.msra.mxu0 %v1700
    %2363 = vmatpush.msra.mxu0 %v1696
    %2364 = vmatpush.msra.mxu0 %v1692
    %2365 = vmatpush.msra.mxu0 %v1688
    %2366 = vmatpush.msra.mxu0 %v1684
    %2367 = vmatpush.msra.mxu0 %v1680
    %2368 = vmatpush.msra.mxu0 %v1676
    %2369 = vmatpush.msra.mxu0 %v1672
    %2370 = vmatpush.msra.mxu0 %v1668
    %2371 = vmatpush.msra.mxu0 %v1664
    %2372 = vmatpush.msra.mxu0 %v1660
    %2373 = vmatpush.msra.mxu0 %v1656
    %2374 = vmatpush.msra.mxu0 %v1652
    %2375 = vmatmul.f32.gmra.mxu0 %v2324
    %v2376 = vpop.f32.mrf.mxu0
    %v2377 = vadd.f32 0.0, %v2376
    %2378 = vdwg.mxu0
    %2379 = vmatpush.msra.mxu0 %v1713
    %2380 = vmatpush.msra.mxu0 %v1709
    %2381 = vmatpush.msra.mxu0 %v1705
    %2382 = vmatpush.msra.mxu0 %v1701
    %2383 = vmatpush.msra.mxu0 %v1697
    %2384 = vmatpush.msra.mxu0 %v1693
    %2385 = vmatpush.msra.mxu0 %v1689
    %2386 = vmatpush.msra.mxu0 %v1685
    %2387 = vmatpush.msra.mxu0 %v1681
    %2388 = vmatpush.msra.mxu0 %v1677
    %2389 = vmatpush.msra.mxu0 %v1673
    %2390 = vmatpush.msra.mxu0 %v1669
    %2391 = vmatpush.msra.mxu0 %v1665
    %2392 = vmatpush.msra.mxu0 %v1661
    %2393 = vmatpush.msra.mxu0 %v1657
    %2394 = vmatpush.msra.mxu0 %v1653
    %2395 = vmatmul.f32.gmra.mxu0 %v2324
    %v2396 = vpop.f32.mrf.mxu0
    %v2397 = vadd.f32 0.0, %v2396
    %2398 = vdwg.mxu0
    %2399 = vmatpush.msra.mxu0 %v1714
    %2400 = vmatpush.msra.mxu0 %v1710
    %2401 = vmatpush.msra.mxu0 %v1706
    %2402 = vmatpush.msra.mxu0 %v1702
    %2403 = vmatpush.msra.mxu0 %v1698
    %2404 = vmatpush.msra.mxu0 %v1694
    %2405 = vmatpush.msra.mxu0 %v1690
    %2406 = vmatpush.msra.mxu0 %v1686
    %2407 = vmatpush.msra.mxu0 %v1682
    %2408 = vmatpush.msra.mxu0 %v1678
    %2409 = vmatpush.msra.mxu0 %v1674
    %2410 = vmatpush.msra.mxu0 %v1670
    %2411 = vmatpush.msra.mxu0 %v1666
    %2412 = vmatpush.msra.mxu0 %v1662
    %2413 = vmatpush.msra.mxu0 %v1658
    %2414 = vmatpush.msra.mxu0 %v1654
    %2415 = vmatmul.f32.gmra.mxu0 %v2324
    %v2416 = vpop.f32.mrf.mxu0
    %v2417 = vadd.f32 0.0, %v2416
    %2418 = vdwg.mxu0
    %v2419 = vadd.f32 %v2335, %v2357
    %v2420 = vadd.f32 %v2336, %v2377
    %v2421 = vadd.f32 %v2337, %v2397
    %v2422 = vadd.f32 %v2338, %v2417
    %v2423 = vmul.f32 %v2419, 0.5
    %v2424 = vmul.f32 %v2420, 0.5
    %v2425 = vmul.f32 %v2421, 0.5
    %v2426 = vtanh.pop %v2423
    %v2427 = vtanh.pop %v2424
    %v2428 = vtanh.pop %v2425
    %v2429 = vmul.f32 %v2426, 0.5
    %v2430 = vmul.f32 %v2427, 0.5
    %v2431 = vmul.f32 %v2428, 0.5
    %v2432 = vadd.f32 %v2429, 0.5
    %v2433 = vadd.f32 %v2430, 0.5
    %v2434 = vadd.f32 %v2431, 0.5
    %v2435 = vtanh.pop %v2422
    %v2436 = vmul.f32 %v2433, %v2322
    %v2437 = vmul.f32 %v2432, %v2435
    %v2438 = vadd.f32 %v2436, %v2437
    %v2439 = vtanh.pop %v2438
    %v2440 = vmul.f32 %v2434, %v2439
    %2441 = vst.msk [vmem:[%s659] sm:$0xff] %vm532, %v2440
    %2442 = vst.msk [vmem:[%s657] sm:$0xff] %vm535, %v2440
    %v2443 = vld [vmem:[%s505] sm:$0xff]
    %v2444 = vld [vmem:[%s505 + $0x8] sm:$0xff]
    %v2445 = vld [vmem:[%s505 + $0x10] sm:$0xff]
    %v2446 = vld [vmem:[%s505 + $0x18] sm:$0xff]
    %v2447 = vld [vmem:[%s498] sm:$0xff]
    %v2448 = vld [vmem:[%s498 + $0x8] sm:$0xff]
    %v2449 = vld [vmem:[%s498 + $0x10] sm:$0xff]
    %v2450 = vld [vmem:[%s498 + $0x18] sm:$0xff]
    %v2451 = vsel %vm172, %v2443, %v2447
    %v2452 = vsel %vm173, %v2444, %v2448
    %v2453 = vsel %vm174, %v2445, %v2449
    %v2454 = vsel %vm175, %v2446, %v2450
    %2455 = vmatpush.msra.mxu0 %v1711
    %2456 = vmatpush.msra.mxu0 %v1707
    %2457 = vmatpush.msra.mxu0 %v1703
    %2458 = vmatpush.msra.mxu0 %v1699
    %2459 = vmatpush.msra.mxu0 %v1695
    %2460 = vmatpush.msra.mxu0 %v1691
    %2461 = vmatpush.msra.mxu0 %v1687
    %2462 = vmatpush.msra.mxu0 %v1683
    %2463 = vmatpush.msra.mxu0 %v1679
    %2464 = vmatpush.msra.mxu0 %v1675
    %2465 = vmatpush.msra.mxu0 %v1671
    %2466 = vmatpush.msra.mxu0 %v1667
    %2467 = vmatpush.msra.mxu0 %v1663
    %2468 = vmatpush.msra.mxu0 %v1659
    %2469 = vmatpush.msra.mxu0 %v1655
    %2470 = vmatpush.msra.mxu0 %v1651
    %2471 = vmatmul.f32.gmra.mxu0 %v2440
    %v2472 = vpop.f32.mrf.mxu0
    %v2473 = vadd.f32 0.0, %v2472
    %2474 = vdwg.mxu0
    %2475 = vmatpush.msra.mxu0 %v1712
    %2476 = vmatpush.msra.mxu0 %v1708
    %2477 = vmatpush.msra.mxu0 %v1704
    %2478 = vmatpush.msra.mxu0 %v1700
    %2479 = vmatpush.msra.mxu0 %v1696
    %2480 = vmatpush.msra.mxu0 %v1692
    %2481 = vmatpush.msra.mxu0 %v1688
    %2482 = vmatpush.msra.mxu0 %v1684
    %2483 = vmatpush.msra.mxu0 %v1680
    %2484 = vmatpush.msra.mxu0 %v1676
    %2485 = vmatpush.msra.mxu0 %v1672
    %2486 = vmatpush.msra.mxu0 %v1668
    %2487 = vmatpush.msra.mxu0 %v1664
    %2488 = vmatpush.msra.mxu0 %v1660
    %2489 = vmatpush.msra.mxu0 %v1656
    %2490 = vmatpush.msra.mxu0 %v1652
    %2491 = vmatmul.f32.gmra.mxu0 %v2440
    %v2492 = vpop.f32.mrf.mxu0
    %v2493 = vadd.f32 0.0, %v2492
    %2494 = vdwg.mxu0
    %2495 = vmatpush.msra.mxu0 %v1713
    %2496 = vmatpush.msra.mxu0 %v1709
    %2497 = vmatpush.msra.mxu0 %v1705
    %2498 = vmatpush.msra.mxu0 %v1701
    %2499 = vmatpush.msra.mxu0 %v1697
    %2500 = vmatpush.msra.mxu0 %v1693
    %2501 = vmatpush.msra.mxu0 %v1689
    %2502 = vmatpush.msra.mxu0 %v1685
    %2503 = vmatpush.msra.mxu0 %v1681
    %2504 = vmatpush.msra.mxu0 %v1677
    %2505 = vmatpush.msra.mxu0 %v1673
    %2506 = vmatpush.msra.mxu0 %v1669
    %2507 = vmatpush.msra.mxu0 %v1665
    %2508 = vmatpush.msra.mxu0 %v1661
    %2509 = vmatpush.msra.mxu0 %v1657
    %2510 = vmatpush.msra.mxu0 %v1653
    %2511 = vmatmul.f32.gmra.mxu0 %v2440
    %v2512 = vpop.f32.mrf.mxu0
    %v2513 = vadd.f32 0.0, %v2512
    %2514 = vdwg.mxu0
    %2515 = vmatpush.msra.mxu0 %v1714
    %2516 = vmatpush.msra.mxu0 %v1710
    %2517 = vmatpush.msra.mxu0 %v1706
    %2518 = vmatpush.msra.mxu0 %v1702
    %2519 = vmatpush.msra.mxu0 %v1698
    %2520 = vmatpush.msra.mxu0 %v1694
    %2521 = vmatpush.msra.mxu0 %v1690
    %2522 = vmatpush.msra.mxu0 %v1686
    %2523 = vmatpush.msra.mxu0 %v1682
    %2524 = vmatpush.msra.mxu0 %v1678
    %2525 = vmatpush.msra.mxu0 %v1674
    %2526 = vmatpush.msra.mxu0 %v1670
    %2527 = vmatpush.msra.mxu0 %v1666
    %2528 = vmatpush.msra.mxu0 %v1662
    %2529 = vmatpush.msra.mxu0 %v1658
    %2530 = vmatpush.msra.mxu0 %v1654
    %2531 = vmatmul.f32.gmra.mxu0 %v2440
    %v2532 = vpop.f32.mrf.mxu0
    %v2533 = vadd.f32 0.0, %v2532
    %2534 = vdwg.mxu0
    %v2535 = vadd.f32 %v2451, %v2473
    %v2536 = vadd.f32 %v2452, %v2493
    %v2537 = vadd.f32 %v2453, %v2513
    %v2538 = vadd.f32 %v2454, %v2533
    %v2539 = vmul.f32 %v2535, 0.5
    %v2540 = vmul.f32 %v2536, 0.5
    %v2541 = vmul.f32 %v2537, 0.5
    %v2542 = vtanh.pop %v2539
    %v2543 = vtanh.pop %v2540
    %v2544 = vtanh.pop %v2541
    %v2545 = vmul.f32 %v2542, 0.5
    %v2546 = vmul.f32 %v2543, 0.5
    %v2547 = vmul.f32 %v2544, 0.5
    %v2548 = vadd.f32 %v2545, 0.5
    %v2549 = vadd.f32 %v2546, 0.5
    %v2550 = vadd.f32 %v2547, 0.5
    %v2551 = vtanh.pop %v2538
    %v2552 = vmul.f32 %v2549, %v2438
    %v2553 = vmul.f32 %v2548, %v2551
    %v2554 = vadd.f32 %v2552, %v2553
    %v2555 = vtanh.pop %v2554
    %v2556 = vmul.f32 %v2550, %v2555
    %2557 = vst.msk [vmem:[%s534] sm:$0xff] %vm532, %v2556
    %2558 = vst.msk [vmem:[#allocation3] sm:$0xff] %vm535, %v2556
    %v2559 = vld [vmem:[#allocation3] sm:$0xff]
    %v2560 = vld [vmem:[#allocation3 + $0x8] sm:$0xff]
    %v2561 = vld [vmem:[#allocation3 + $0x10] sm:$0xff]
    %v2562 = vld [vmem:[#allocation3 + $0x18] sm:$0xff]
    %v2563 = vld [vmem:[#allocation3 + $0x20] sm:$0xff]
    %v2564 = vld [vmem:[#allocation3 + $0x28] sm:$0xff]
    %v2565 = vld [vmem:[#allocation3 + $0x30] sm:$0xff]
    %v2566 = vld [vmem:[#allocation3 + $0x38] sm:$0xff]
    %v2567 = vld [vmem:[#allocation9] sm:$0xff]
    %v2568 = vld [vmem:[#allocation9 + $0x8] sm:$0xff]
    %v2569 = vld [vmem:[#allocation9 + $0x10] sm:$0xff]
    %v2570 = vld [vmem:[#allocation9 + $0x18] sm:$0xff]
    %v2571 = vld [vmem:[#allocation9 + $0x20] sm:$0xff]
    %v2572 = vld [vmem:[#allocation9 + $0x28] sm:$0xff]
    %v2573 = vld [vmem:[#allocation9 + $0x30] sm:$0xff]
    %v2574 = vld [vmem:[#allocation9 + $0x38] sm:$0xff]
    %v2575 = vld [vmem:[#allocation9 + $0x40] sm:$0xff]
    %v2576 = vld [vmem:[#allocation9 + $0x48] sm:$0xff]
    %v2577 = vld [vmem:[#allocation9 + $0x50] sm:$0xff]
    %v2578 = vld [vmem:[#allocation9 + $0x58] sm:$0xff]
    %v2579 = vld [vmem:[#allocation9 + $0x60] sm:$0xff]
    %v2580 = vld [vmem:[#allocation9 + $0x68] sm:$0xff]
    %v2581 = vld [vmem:[#allocation9 + $0x70] sm:$0xff]
    %v2582 = vld [vmem:[#allocation9 + $0x78] sm:$0xff]
    %v2583 = vld [vmem:[#allocation9 + $0x80] sm:$0xff]
    %v2584 = vld [vmem:[#allocation9 + $0x88] sm:$0xff]
    %v2585 = vld [vmem:[#allocation9 + $0x90] sm:$0xff]
    %v2586 = vld [vmem:[#allocation9 + $0x98] sm:$0xff]
    %v2587 = vld [vmem:[#allocation9 + $0xa0] sm:$0xff]
    %v2588 = vld [vmem:[#allocation9 + $0xa8] sm:$0xff]
    %v2589 = vld [vmem:[#allocation9 + $0xb0] sm:$0xff]
    %v2590 = vld [vmem:[#allocation9 + $0xb8] sm:$0xff]
    %v2591 = vld [vmem:[#allocation9 + $0xc0] sm:$0xff]
    %v2592 = vld [vmem:[#allocation9 + $0xc8] sm:$0xff]
    %v2593 = vld [vmem:[#allocation9 + $0xd0] sm:$0xff]
    %v2594 = vld [vmem:[#allocation9 + $0xd8] sm:$0xff]
    %v2595 = vld [vmem:[#allocation9 + $0xe0] sm:$0xff]
    %v2596 = vld [vmem:[#allocation9 + $0xe8] sm:$0xff]
    %v2597 = vld [vmem:[#allocation9 + $0xf0] sm:$0xff]
    %v2598 = vld [vmem:[#allocation9 + $0xf8] sm:$0xff]
    %v2599 = vld [vmem:[#allocation9 + $0x100] sm:$0xff]
    %v2600 = vld [vmem:[#allocation9 + $0x108] sm:$0xff]
    %v2601 = vld [vmem:[#allocation9 + $0x110] sm:$0xff]
    %v2602 = vld [vmem:[#allocation9 + $0x118] sm:$0xff]
    %v2603 = vld [vmem:[#allocation9 + $0x120] sm:$0xff]
    %v2604 = vld [vmem:[#allocation9 + $0x128] sm:$0xff]
    %v2605 = vld [vmem:[#allocation9 + $0x130] sm:$0xff]
    %v2606 = vld [vmem:[#allocation9 + $0x138] sm:$0xff]
    %v2607 = vld [vmem:[#allocation9 + $0x140] sm:$0xff]
    %v2608 = vld [vmem:[#allocation9 + $0x148] sm:$0xff]
    %v2609 = vld [vmem:[#allocation9 + $0x150] sm:$0xff]
    %v2610 = vld [vmem:[#allocation9 + $0x158] sm:$0xff]
    %v2611 = vld [vmem:[#allocation9 + $0x160] sm:$0xff]
    %v2612 = vld [vmem:[#allocation9 + $0x168] sm:$0xff]
    %v2613 = vld [vmem:[#allocation9 + $0x170] sm:$0xff]
    %v2614 = vld [vmem:[#allocation9 + $0x178] sm:$0xff]
    %v2615 = vld [vmem:[#allocation9 + $0x180] sm:$0xff]
    %v2616 = vld [vmem:[#allocation9 + $0x188] sm:$0xff]
    %v2617 = vld [vmem:[#allocation9 + $0x190] sm:$0xff]
    %v2618 = vld [vmem:[#allocation9 + $0x198] sm:$0xff]
    %v2619 = vld [vmem:[#allocation9 + $0x1a0] sm:$0xff]
    %v2620 = vld [vmem:[#allocation9 + $0x1a8] sm:$0xff]
    %v2621 = vld [vmem:[#allocation9 + $0x1b0] sm:$0xff]
    %v2622 = vld [vmem:[#allocation9 + $0x1b8] sm:$0xff]
    %v2623 = vld [vmem:[#allocation9 + $0x1c0] sm:$0xff]
    %v2624 = vld [vmem:[#allocation9 + $0x1c8] sm:$0xff]
    %v2625 = vld [vmem:[#allocation9 + $0x1d0] sm:$0xff]
    %v2626 = vld [vmem:[#allocation9 + $0x1d8] sm:$0xff]
    %v2627 = vld [vmem:[#allocation9 + $0x1e0] sm:$0xff]
    %v2628 = vld [vmem:[#allocation9 + $0x1e8] sm:$0xff]
    %v2629 = vld [vmem:[#allocation9 + $0x1f0] sm:$0xff]
    %v2630 = vld [vmem:[#allocation9 + $0x1f8] sm:$0xff]
    %v2631 = vld [vmem:[%s9] sm:$0xf]
    %v2633 = vperm.slane %v2631, 0
    %v2634 = vperm.slane %v2631, 1
    %v2635 = vperm.slane %v2631, 2
    %v2636 = vperm.slane %v2631, 3
    %2641 = vmatpush.msra.mxu0 %v2627
    %2642 = vmatpush.msra.mxu0 %v2623
    %2643 = vmatpush.msra.mxu0 %v2619
    %2644 = vmatpush.msra.mxu0 %v2615
    %2645 = vmatpush.msra.mxu0 %v2611
    %2646 = vmatpush.msra.mxu0 %v2607
    %2647 = vmatpush.msra.mxu0 %v2603
    %2648 = vmatpush.msra.mxu0 %v2599
    %2649 = vmatpush.msra.mxu0 %v2595
    %2650 = vmatpush.msra.mxu0 %v2591
    %2651 = vmatpush.msra.mxu0 %v2587
    %2652 = vmatpush.msra.mxu0 %v2583
    %2653 = vmatpush.msra.mxu0 %v2579
    %2654 = vmatpush.msra.mxu0 %v2575
    %2655 = vmatpush.msra.mxu0 %v2571
    %2656 = vmatpush.msra.mxu0 %v2567
    %2657 = vmatmul.f32.gmra.mxu0 %v2559
    %v2658 = vpop.f32.mrf.mxu0
    %v2659 = vadd.f32 %v2633, %v2658
    %2660 = vmatmul.f32.gmra.mxu0 %v2560
    %v2661 = vpop.f32.mrf.mxu0
    %v2662 = vadd.f32 %v2633, %v2661
    %2663 = vmatmul.f32.gmra.mxu0 %v2561
    %v2664 = vpop.f32.mrf.mxu0
    %v2665 = vadd.f32 %v2633, %v2664
    %2666 = vmatmul.f32.gmra.mxu0 %v2562
    %v2667 = vpop.f32.mrf.mxu0
    %v2668 = vadd.f32 %v2633, %v2667
    %2669 = vmatmul.f32.gmra.mxu0 %v2563
    %v2670 = vpop.f32.mrf.mxu0
    %v2671 = vadd.f32 %v2633, %v2670
    %2672 = vmatmul.f32.gmra.mxu0 %v2564
    %v2673 = vpop.f32.mrf.mxu0
    %v2674 = vadd.f32 %v2633, %v2673
    %2675 = vmatmul.f32.gmra.mxu0 %v2565
    %v2676 = vpop.f32.mrf.mxu0
    %v2677 = vadd.f32 %v2633, %v2676
    %2678 = vmatmul.f32.gmra.mxu0 %v2566
    %v2679 = vpop.f32.mrf.mxu0
    %v2680 = vadd.f32 %v2633, %v2679
    %2681 = vdwg.mxu0
    %2682 = vmatpush.msra.mxu0 %v2628
    %2683 = vmatpush.msra.mxu0 %v2624
    %2684 = vmatpush.msra.mxu0 %v2620
    %2685 = vmatpush.msra.mxu0 %v2616
    %2686 = vmatpush.msra.mxu0 %v2612
    %2687 = vmatpush.msra.mxu0 %v2608
    %2688 = vmatpush.msra.mxu0 %v2604
    %2689 = vmatpush.msra.mxu0 %v2600
    %2690 = vmatpush.msra.mxu0 %v2596
    %2691 = vmatpush.msra.mxu0 %v2592
    %2692 = vmatpush.msra.mxu0 %v2588
    %2693 = vmatpush.msra.mxu0 %v2584
    %2694 = vmatpush.msra.mxu0 %v2580
    %2695 = vmatpush.msra.mxu0 %v2576
    %2696 = vmatpush.msra.mxu0 %v2572
    %2697 = vmatpush.msra.mxu0 %v2568
    %2698 = vmatmul.f32.gmra.mxu0 %v2559
    %v2699 = vpop.f32.mrf.mxu0
    %v2700 = vadd.f32 %v2634, %v2699
    %2701 = vmatmul.f32.gmra.mxu0 %v2560
    %v2702 = vpop.f32.mrf.mxu0
    %v2703 = vadd.f32 %v2634, %v2702
    %2704 = vmatmul.f32.gmra.mxu0 %v2561
    %v2705 = vpop.f32.mrf.mxu0
    %v2706 = vadd.f32 %v2634, %v2705
    %2707 = vmatmul.f32.gmra.mxu0 %v2562
    %v2708 = vpop.f32.mrf.mxu0
    %v2709 = vadd.f32 %v2634, %v2708
    %2710 = vmatmul.f32.gmra.mxu0 %v2563
    %v2711 = vpop.f32.mrf.mxu0
    %v2712 = vadd.f32 %v2634, %v2711
    %2713 = vmatmul.f32.gmra.mxu0 %v2564
    %v2714 = vpop.f32.mrf.mxu0
    %v2715 = vadd.f32 %v2634, %v2714
    %2716 = vmatmul.f32.gmra.mxu0 %v2565
    %v2717 = vpop.f32.mrf.mxu0
    %v2718 = vadd.f32 %v2634, %v2717
    %2719 = vmatmul.f32.gmra.mxu0 %v2566
    %v2720 = vpop.f32.mrf.mxu0
    %v2721 = vadd.f32 %v2634, %v2720
    %2722 = vdwg.mxu0
    %2723 = vmatpush.msra.mxu0 %v2629
    %2724 = vmatpush.msra.mxu0 %v2625
    %2725 = vmatpush.msra.mxu0 %v2621
    %2726 = vmatpush.msra.mxu0 %v2617
    %2727 = vmatpush.msra.mxu0 %v2613
    %2728 = vmatpush.msra.mxu0 %v2609
    %2729 = vmatpush.msra.mxu0 %v2605
    %2730 = vmatpush.msra.mxu0 %v2601
    %2731 = vmatpush.msra.mxu0 %v2597
    %2732 = vmatpush.msra.mxu0 %v2593
    %2733 = vmatpush.msra.mxu0 %v2589
    %2734 = vmatpush.msra.mxu0 %v2585
    %2735 = vmatpush.msra.mxu0 %v2581
    %2736 = vmatpush.msra.mxu0 %v2577
    %2737 = vmatpush.msra.mxu0 %v2573
    %2738 = vmatpush.msra.mxu0 %v2569
    %2739 = vmatmul.f32.gmra.mxu0 %v2559
    %v2740 = vpop.f32.mrf.mxu0
    %v2741 = vadd.f32 %v2635, %v2740
    %2742 = vmatmul.f32.gmra.mxu0 %v2560
    %v2743 = vpop.f32.mrf.mxu0
    %v2744 = vadd.f32 %v2635, %v2743
    %2745 = vmatmul.f32.gmra.mxu0 %v2561
    %v2746 = vpop.f32.mrf.mxu0
    %v2747 = vadd.f32 %v2635, %v2746
    %2748 = vmatmul.f32.gmra.mxu0 %v2562
    %v2749 = vpop.f32.mrf.mxu0
    %v2750 = vadd.f32 %v2635, %v2749
    %2751 = vmatmul.f32.gmra.mxu0 %v2563
    %v2752 = vpop.f32.mrf.mxu0
    %v2753 = vadd.f32 %v2635, %v2752
    %2754 = vmatmul.f32.gmra.mxu0 %v2564
    %v2755 = vpop.f32.mrf.mxu0
    %v2756 = vadd.f32 %v2635, %v2755
    %2757 = vmatmul.f32.gmra.mxu0 %v2565
    %v2758 = vpop.f32.mrf.mxu0
    %v2759 = vadd.f32 %v2635, %v2758
    %2760 = vmatmul.f32.gmra.mxu0 %v2566
    %v2761 = vpop.f32.mrf.mxu0
    %v2762 = vadd.f32 %v2635, %v2761
    %2763 = vdwg.mxu0
    %2764 = vmatpush.msra.mxu0 %v2630
    %2765 = vmatpush.msra.mxu0 %v2626
    %2766 = vmatpush.msra.mxu0 %v2622
    %2767 = vmatpush.msra.mxu0 %v2618
    %2768 = vmatpush.msra.mxu0 %v2614
    %2769 = vmatpush.msra.mxu0 %v2610
    %2770 = vmatpush.msra.mxu0 %v2606
    %2771 = vmatpush.msra.mxu0 %v2602
    %2772 = vmatpush.msra.mxu0 %v2598
    %2773 = vmatpush.msra.mxu0 %v2594
    %2774 = vmatpush.msra.mxu0 %v2590
    %2775 = vmatpush.msra.mxu0 %v2586
    %2776 = vmatpush.msra.mxu0 %v2582
    %2777 = vmatpush.msra.mxu0 %v2578
    %2778 = vmatpush.msra.mxu0 %v2574
    %2779 = vmatpush.msra.mxu0 %v2570
    %2780 = vmatmul.f32.gmra.mxu0 %v2559
    %v2781 = vpop.f32.mrf.mxu0
    %v2782 = vadd.f32 %v2636, %v2781
    %2783 = vmatmul.f32.gmra.mxu0 %v2560
    %v2784 = vpop.f32.mrf.mxu0
    %v2785 = vadd.f32 %v2636, %v2784
    %2786 = vmatmul.f32.gmra.mxu0 %v2561
    %v2787 = vpop.f32.mrf.mxu0
    %v2788 = vadd.f32 %v2636, %v2787
    %2789 = vmatmul.f32.gmra.mxu0 %v2562
    %v2790 = vpop.f32.mrf.mxu0
    %v2791 = vadd.f32 %v2636, %v2790
    %2792 = vmatmul.f32.gmra.mxu0 %v2563
    %v2793 = vpop.f32.mrf.mxu0
    %v2794 = vadd.f32 %v2636, %v2793
    %2795 = vmatmul.f32.gmra.mxu0 %v2564
    %v2796 = vpop.f32.mrf.mxu0
    %v2797 = vadd.f32 %v2636, %v2796
    %2798 = vmatmul.f32.gmra.mxu0 %v2565
    %v2799 = vpop.f32.mrf.mxu0
    %v2800 = vadd.f32 %v2636, %v2799
    %2801 = vmatmul.f32.gmra.mxu0 %v2566
    %v2802 = vpop.f32.mrf.mxu0
    %v2803 = vadd.f32 %v2636, %v2802
    %2804 = vdwg.mxu0
    %2805 = vst [vmem:[#allocation2] sm:$0xff] %v2659
    %2806 = vst [vmem:[#allocation2 + $0x8] sm:$0xff] %v2700
    %2807 = vst [vmem:[#allocation2 + $0x10] sm:$0xff] %v2741
    %2808 = vst [vmem:[#allocation2 + $0x18] sm:$0xff] %v2782
    %2809 = vst [vmem:[#allocation2 + $0x20] sm:$0xff] %v2662
    %2810 = vst [vmem:[#allocation2 + $0x28] sm:$0xff] %v2703
    %2811 = vst [vmem:[#allocation2 + $0x30] sm:$0xff] %v2744
    %2812 = vst [vmem:[#allocation2 + $0x38] sm:$0xff] %v2785
    %2813 = vst [vmem:[#allocation2 + $0x40] sm:$0xff] %v2665
    %2814 = vst [vmem:[#allocation2 + $0x48] sm:$0xff] %v2706
    %2815 = vst [vmem:[#allocation2 + $0x50] sm:$0xff] %v2747
    %2816 = vst [vmem:[#allocation2 + $0x58] sm:$0xff] %v2788
    %2817 = vst [vmem:[#allocation2 + $0x60] sm:$0xff] %v2668
    %2818 = vst [vmem:[#allocation2 + $0x68] sm:$0xff] %v2709
    %2819 = vst [vmem:[#allocation2 + $0x70] sm:$0xff] %v2750
    %2820 = vst [vmem:[#allocation2 + $0x78] sm:$0xff] %v2791
    %2821 = vst [vmem:[#allocation2 + $0x80] sm:$0xff] %v2671
    %2822 = vst [vmem:[#allocation2 + $0x88] sm:$0xff] %v2712
    %2823 = vst [vmem:[#allocation2 + $0x90] sm:$0xff] %v2753
    %2824 = vst [vmem:[#allocation2 + $0x98] sm:$0xff] %v2794
    %2825 = vst [vmem:[#allocation2 + $0xa0] sm:$0xff] %v2674
    %2826 = vst [vmem:[#allocation2 + $0xa8] sm:$0xff] %v2715
    %2827 = vst [vmem:[#allocation2 + $0xb0] sm:$0xff] %v2756
    %2828 = vst [vmem:[#allocation2 + $0xb8] sm:$0xff] %v2797
    %2829 = vst [vmem:[#allocation2 + $0xc0] sm:$0xff] %v2677
    %2830 = vst [vmem:[#allocation2 + $0xc8] sm:$0xff] %v2718
    %2831 = vst [vmem:[#allocation2 + $0xd0] sm:$0xff] %v2759
    %2832 = vst [vmem:[#allocation2 + $0xd8] sm:$0xff] %v2800
    %2833 = vst [vmem:[#allocation2 + $0xe0] sm:$0xff] %v2680
    %2834 = vst [vmem:[#allocation2 + $0xe8] sm:$0xff] %v2721
    %2835 = vst [vmem:[#allocation2 + $0xf0] sm:$0xff] %v2762
    %2836 = vst [vmem:[#allocation2 + $0xf8] sm:$0xff] %v2803
    %v2837 = vld [vmem:[#allocation11] sm:$0xff]
    %v2838 = vld [vmem:[#allocation11 + $0x8] sm:$0xff]
    %v2839 = vld [vmem:[#allocation11 + $0x10] sm:$0xff]
    %v2840 = vld [vmem:[#allocation11 + $0x18] sm:$0xff]
    %v2841 = vld [vmem:[#allocation11 + $0x20] sm:$0xff]
    %v2842 = vld [vmem:[#allocation11 + $0x28] sm:$0xff]
    %v2843 = vld [vmem:[#allocation11 + $0x30] sm:$0xff]
    %v2844 = vld [vmem:[#allocation11 + $0x38] sm:$0xff]
    %v2845 = vld [vmem:[#allocation11 + $0x40] sm:$0xff]
    %v2846 = vld [vmem:[#allocation11 + $0x48] sm:$0xff]
    %v2847 = vld [vmem:[#allocation11 + $0x50] sm:$0xff]
    %v2848 = vld [vmem:[#allocation11 + $0x58] sm:$0xff]
    %v2849 = vld [vmem:[#allocation11 + $0x60] sm:$0xff]
    %v2850 = vld [vmem:[#allocation11 + $0x68] sm:$0xff]
    %v2851 = vld [vmem:[#allocation11 + $0x70] sm:$0xff]
    %v2852 = vld [vmem:[#allocation11 + $0x78] sm:$0xff]
    %v2853 = vld [vmem:[#allocation11 + $0x80] sm:$0xff]
    %v2854 = vld [vmem:[#allocation11 + $0x88] sm:$0xff]
    %v2855 = vld [vmem:[#allocation11 + $0x90] sm:$0xff]
    %v2856 = vld [vmem:[#allocation11 + $0x98] sm:$0xff]
    %v2857 = vld [vmem:[#allocation11 + $0xa0] sm:$0xff]
    %v2858 = vld [vmem:[#allocation11 + $0xa8] sm:$0xff]
    %v2859 = vld [vmem:[#allocation11 + $0xb0] sm:$0xff]
    %v2860 = vld [vmem:[#allocation11 + $0xb8] sm:$0xff]
    %v2861 = vld [vmem:[#allocation11 + $0xc0] sm:$0xff]
    %v2862 = vld [vmem:[#allocation11 + $0xc8] sm:$0xff]
    %v2863 = vld [vmem:[#allocation11 + $0xd0] sm:$0xff]
    %v2864 = vld [vmem:[#allocation11 + $0xd8] sm:$0xff]
    %v2865 = vld [vmem:[#allocation11 + $0xe0] sm:$0xff]
    %v2866 = vld [vmem:[#allocation11 + $0xe8] sm:$0xff]
    %v2867 = vld [vmem:[#allocation11 + $0xf0] sm:$0xff]
    %v2868 = vld [vmem:[#allocation11 + $0xf8] sm:$0xff]
    %v2869 = vld [vmem:[#allocation11 + $0x100] sm:$0xff]
    %v2870 = vld [vmem:[#allocation11 + $0x108] sm:$0xff]
    %v2871 = vld [vmem:[#allocation11 + $0x110] sm:$0xff]
    %v2872 = vld [vmem:[#allocation11 + $0x118] sm:$0xff]
    %v2873 = vld [vmem:[#allocation11 + $0x120] sm:$0xff]
    %v2874 = vld [vmem:[#allocation11 + $0x128] sm:$0xff]
    %v2875 = vld [vmem:[#allocation11 + $0x130] sm:$0xff]
    %v2876 = vld [vmem:[#allocation11 + $0x138] sm:$0xff]
    %v2877 = vld [vmem:[#allocation11 + $0x140] sm:$0xff]
    %v2878 = vld [vmem:[#allocation11 + $0x148] sm:$0xff]
    %v2879 = vld [vmem:[#allocation11 + $0x150] sm:$0xff]
    %v2880 = vld [vmem:[#allocation11 + $0x158] sm:$0xff]
    %v2881 = vld [vmem:[#allocation11 + $0x160] sm:$0xff]
    %v2882 = vld [vmem:[#allocation11 + $0x168] sm:$0xff]
    %v2883 = vld [vmem:[#allocation11 + $0x170] sm:$0xff]
    %v2884 = vld [vmem:[#allocation11 + $0x178] sm:$0xff]
    %v2885 = vld [vmem:[#allocation11 + $0x180] sm:$0xff]
    %v2886 = vld [vmem:[#allocation11 + $0x188] sm:$0xff]
    %v2887 = vld [vmem:[#allocation11 + $0x190] sm:$0xff]
    %v2888 = vld [vmem:[#allocation11 + $0x198] sm:$0xff]
    %v2889 = vld [vmem:[#allocation11 + $0x1a0] sm:$0xff]
    %v2890 = vld [vmem:[#allocation11 + $0x1a8] sm:$0xff]
    %v2891 = vld [vmem:[#allocation11 + $0x1b0] sm:$0xff]
    %v2892 = vld [vmem:[#allocation11 + $0x1b8] sm:$0xff]
    %v2893 = vld [vmem:[#allocation11 + $0x1c0] sm:$0xff]
    %v2894 = vld [vmem:[#allocation11 + $0x1c8] sm:$0xff]
    %v2895 = vld [vmem:[#allocation11 + $0x1d0] sm:$0xff]
    %v2896 = vld [vmem:[#allocation11 + $0x1d8] sm:$0xff]
    %v2897 = vld [vmem:[#allocation11 + $0x1e0] sm:$0xff]
    %v2898 = vld [vmem:[#allocation11 + $0x1e8] sm:$0xff]
    %v2899 = vld [vmem:[#allocation11 + $0x1f0] sm:$0xff]
    %v2900 = vld [vmem:[#allocation11 + $0x1f8] sm:$0xff]
    %v2901 = vld [vmem:[%s498] sm:$0xff]
    %v2902 = vld [vmem:[%s498 + $0x8] sm:$0xff]
    %v2903 = vld [vmem:[%s498 + $0x10] sm:$0xff]
    %v2904 = vld [vmem:[%s498 + $0x18] sm:$0xff]
    %v2905 = vld [vmem:[%s505] sm:$0xff]
    %v2906 = vld [vmem:[%s505 + $0x8] sm:$0xff]
    %v2907 = vld [vmem:[%s505 + $0x10] sm:$0xff]
    %v2908 = vld [vmem:[%s505 + $0x18] sm:$0xff]
    %v2909 = vsel %vm172, %v2901, %v2905
    %v2910 = vsel %vm173, %v2902, %v2906
    %v2911 = vsel %vm174, %v2903, %v2907
    %v2912 = vsel %vm175, %v2904, %v2908
    %v2913 = vmul.f32 %v2909, 0.5
    %v2914 = vmul.f32 %v2910, 0.5
    %v2915 = vmul.f32 %v2911, 0.5
    %v2916 = vtanh.pop %v2913
    %v2917 = vtanh.pop %v2914
    %v2918 = vtanh.pop %v2915
    %v2919 = vmul.f32 %v2916, 0.5
    %v2920 = vmul.f32 %v2917, 0.5
    %v2921 = vmul.f32 %v2918, 0.5
    %v2922 = vadd.f32 %v2919, 0.5
    %v2923 = vadd.f32 %v2920, 0.5
    %v2924 = vadd.f32 %v2921, 0.5
    %v2925 = vtanh.pop %v2912
    %v2926 = vmul.f32 %v2923, 0.0
    %v2927 = vmul.f32 %v2922, %v2925
    %v2928 = vadd.f32 %v2926, %v2927
    %v2929 = vtanh.pop %v2928
    %v2930 = vmul.f32 %v2924, %v2929
    %v2931 = vld [vmem:[%s539] sm:$0xff]
    %v2932 = vld [vmem:[%s539 + $0x8] sm:$0xff]
    %v2933 = vld [vmem:[%s539 + $0x10] sm:$0xff]
    %v2934 = vld [vmem:[%s539 + $0x18] sm:$0xff]
    %v2935 = vld [vmem:[%s546] sm:$0xff]
    %v2936 = vld [vmem:[%s546 + $0x8] sm:$0xff]
    %v2937 = vld [vmem:[%s546 + $0x10] sm:$0xff]
    %v2938 = vld [vmem:[%s546 + $0x18] sm:$0xff]
    %v2939 = vsel %vm172, %v2931, %v2935
    %v2940 = vsel %vm173, %v2932, %v2936
    %v2941 = vsel %vm174, %v2933, %v2937
    %v2942 = vsel %vm175, %v2934, %v2938
    %2943 = vmatpush.msra.mxu0 %v2897
    %2944 = vmatpush.msra.mxu0 %v2893
    %2945 = vmatpush.msra.mxu0 %v2889
    %2946 = vmatpush.msra.mxu0 %v2885
    %2947 = vmatpush.msra.mxu0 %v2881
    %2948 = vmatpush.msra.mxu0 %v2877
    %2949 = vmatpush.msra.mxu0 %v2873
    %2950 = vmatpush.msra.mxu0 %v2869
    %2951 = vmatpush.msra.mxu0 %v2865
    %2952 = vmatpush.msra.mxu0 %v2861
    %2953 = vmatpush.msra.mxu0 %v2857
    %2954 = vmatpush.msra.mxu0 %v2853
    %2955 = vmatpush.msra.mxu0 %v2849
    %2956 = vmatpush.msra.mxu0 %v2845
    %2957 = vmatpush.msra.mxu0 %v2841
    %2958 = vmatpush.msra.mxu0 %v2837
    %2959 = vmatmul.f32.gmra.mxu0 %v2930
    %v2960 = vpop.f32.mrf.mxu0
    %v2961 = vadd.f32 0.0, %v2960
    %2962 = vdwg.mxu0
    %2963 = vmatpush.msra.mxu0 %v2898
    %2964 = vmatpush.msra.mxu0 %v2894
    %2965 = vmatpush.msra.mxu0 %v2890
    %2966 = vmatpush.msra.mxu0 %v2886
    %2967 = vmatpush.msra.mxu0 %v2882
    %2968 = vmatpush.msra.mxu0 %v2878
    %2969 = vmatpush.msra.mxu0 %v2874
    %2970 = vmatpush.msra.mxu0 %v2870
    %2971 = vmatpush.msra.mxu0 %v2866
    %2972 = vmatpush.msra.mxu0 %v2862
    %2973 = vmatpush.msra.mxu0 %v2858
    %2974 = vmatpush.msra.mxu0 %v2854
    %2975 = vmatpush.msra.mxu0 %v2850
    %2976 = vmatpush.msra.mxu0 %v2846
    %2977 = vmatpush.msra.mxu0 %v2842
    %2978 = vmatpush.msra.mxu0 %v2838
    %2979 = vmatmul.f32.gmra.mxu0 %v2930
    %v2980 = vpop.f32.mrf.mxu0
    %v2981 = vadd.f32 0.0, %v2980
    %2982 = vdwg.mxu0
    %2983 = vmatpush.msra.mxu0 %v2899
    %2984 = vmatpush.msra.mxu0 %v2895
    %2985 = vmatpush.msra.mxu0 %v2891
    %2986 = vmatpush.msra.mxu0 %v2887
    %2987 = vmatpush.msra.mxu0 %v2883
    %2988 = vmatpush.msra.mxu0 %v2879
    %2989 = vmatpush.msra.mxu0 %v2875
    %2990 = vmatpush.msra.mxu0 %v2871
    %2991 = vmatpush.msra.mxu0 %v2867
    %2992 = vmatpush.msra.mxu0 %v2863
    %2993 = vmatpush.msra.mxu0 %v2859
    %2994 = vmatpush.msra.mxu0 %v2855
    %2995 = vmatpush.msra.mxu0 %v2851
    %2996 = vmatpush.msra.mxu0 %v2847
    %2997 = vmatpush.msra.mxu0 %v2843
    %2998 = vmatpush.msra.mxu0 %v2839
    %2999 = vmatmul.f32.gmra.mxu0 %v2930
    %v3000 = vpop.f32.mrf.mxu0
    %v3001 = vadd.f32 0.0, %v3000
    %3002 = vdwg.mxu0
    %3003 = vmatpush.msra.mxu0 %v2900
    %3004 = vmatpush.msra.mxu0 %v2896
    %3005 = vmatpush.msra.mxu0 %v2892
    %3006 = vmatpush.msra.mxu0 %v2888
    %3007 = vmatpush.msra.mxu0 %v2884
    %3008 = vmatpush.msra.mxu0 %v2880
    %3009 = vmatpush.msra.mxu0 %v2876
    %3010 = vmatpush.msra.mxu0 %v2872
    %3011 = vmatpush.msra.mxu0 %v2868
    %3012 = vmatpush.msra.mxu0 %v2864
    %3013 = vmatpush.msra.mxu0 %v2860
    %3014 = vmatpush.msra.mxu0 %v2856
    %3015 = vmatpush.msra.mxu0 %v2852
    %3016 = vmatpush.msra.mxu0 %v2848
    %3017 = vmatpush.msra.mxu0 %v2844
    %3018 = vmatpush.msra.mxu0 %v2840
    %3019 = vmatmul.f32.gmra.mxu0 %v2930
    %v3020 = vpop.f32.mrf.mxu0
    %v3021 = vadd.f32 0.0, %v3020
    %3022 = vdwg.mxu0
    %v3023 = vadd.f32 %v2939, %v2961
    %v3024 = vadd.f32 %v2940, %v2981
    %v3025 = vadd.f32 %v2941, %v3001
    %v3026 = vadd.f32 %v2942, %v3021
    %v3027 = vmul.f32 %v3023, 0.5
    %v3028 = vmul.f32 %v3024, 0.5
    %v3029 = vmul.f32 %v3025, 0.5
    %v3030 = vtanh.pop %v3027
    %v3031 = vtanh.pop %v3028
    %v3032 = vtanh.pop %v3029
    %v3033 = vmul.f32 %v3030, 0.5
    %v3034 = vmul.f32 %v3031, 0.5
    %v3035 = vmul.f32 %v3032, 0.5
    %v3036 = vadd.f32 %v3033, 0.5
    %v3037 = vadd.f32 %v3034, 0.5
    %v3038 = vadd.f32 %v3035, 0.5
    %v3039 = vtanh.pop %v3026
    %v3040 = vmul.f32 %v3037, %v2928
    %v3041 = vmul.f32 %v3036, %v3039
    %v3042 = vadd.f32 %v3040, %v3041
    %v3043 = vtanh.pop %v3042
    %v3044 = vmul.f32 %v3038, %v3043
    %v3045 = vld [vmem:[%s663] sm:$0xff]
    %v3046 = vld [vmem:[%s663 + $0x8] sm:$0xff]
    %v3047 = vld [vmem:[%s663 + $0x10] sm:$0xff]
    %v3048 = vld [vmem:[%s663 + $0x18] sm:$0xff]
    %v3049 = vld [vmem:[%s670] sm:$0xff]
    %v3050 = vld [vmem:[%s670 + $0x8] sm:$0xff]
    %v3051 = vld [vmem:[%s670 + $0x10] sm:$0xff]
    %v3052 = vld [vmem:[%s670 + $0x18] sm:$0xff]
    %v3053 = vsel %vm172, %v3045, %v3049
    %v3054 = vsel %vm173, %v3046, %v3050
    %v3055 = vsel %vm174, %v3047, %v3051
    %v3056 = vsel %vm175, %v3048, %v3052
    %3057 = vmatpush.msra.mxu0 %v2897
    %3058 = vmatpush.msra.mxu0 %v2893
    %3059 = vmatpush.msra.mxu0 %v2889
    %3060 = vmatpush.msra.mxu0 %v2885
    %3061 = vmatpush.msra.mxu0 %v2881
    %3062 = vmatpush.msra.mxu0 %v2877
    %3063 = vmatpush.msra.mxu0 %v2873
    %3064 = vmatpush.msra.mxu0 %v2869
    %3065 = vmatpush.msra.mxu0 %v2865
    %3066 = vmatpush.msra.mxu0 %v2861
    %3067 = vmatpush.msra.mxu0 %v2857
    %3068 = vmatpush.msra.mxu0 %v2853
    %3069 = vmatpush.msra.mxu0 %v2849
    %3070 = vmatpush.msra.mxu0 %v2845
    %3071 = vmatpush.msra.mxu0 %v2841
    %3072 = vmatpush.msra.mxu0 %v2837
    %3073 = vmatmul.f32.gmra.mxu0 %v3044
    %v3074 = vpop.f32.mrf.mxu0
    %v3075 = vadd.f32 0.0, %v3074
    %3076 = vdwg.mxu0
    %3077 = vmatpush.msra.mxu0 %v2898
    %3078 = vmatpush.msra.mxu0 %v2894
    %3079 = vmatpush.msra.mxu0 %v2890
    %3080 = vmatpush.msra.mxu0 %v2886
    %3081 = vmatpush.msra.mxu0 %v2882
    %3082 = vmatpush.msra.mxu0 %v2878
    %3083 = vmatpush.msra.mxu0 %v2874
    %3084 = vmatpush.msra.mxu0 %v2870
    %3085 = vmatpush.msra.mxu0 %v2866
    %3086 = vmatpush.msra.mxu0 %v2862
    %3087 = vmatpush.msra.mxu0 %v2858
    %3088 = vmatpush.msra.mxu0 %v2854
    %3089 = vmatpush.msra.mxu0 %v2850
    %3090 = vmatpush.msra.mxu0 %v2846
    %3091 = vmatpush.msra.mxu0 %v2842
    %3092 = vmatpush.msra.mxu0 %v2838
    %3093 = vmatmul.f32.gmra.mxu0 %v3044
    %v3094 = vpop.f32.mrf.mxu0
    %v3095 = vadd.f32 0.0, %v3094
    %3096 = vdwg.mxu0
    %3097 = vmatpush.msra.mxu0 %v2899
    %3098 = vmatpush.msra.mxu0 %v2895
    %3099 = vmatpush.msra.mxu0 %v2891
    %3100 = vmatpush.msra.mxu0 %v2887
    %3101 = vmatpush.msra.mxu0 %v2883
    %3102 = vmatpush.msra.mxu0 %v2879
    %3103 = vmatpush.msra.mxu0 %v2875
    %3104 = vmatpush.msra.mxu0 %v2871
    %3105 = vmatpush.msra.mxu0 %v2867
    %3106 = vmatpush.msra.mxu0 %v2863
    %3107 = vmatpush.msra.mxu0 %v2859
    %3108 = vmatpush.msra.mxu0 %v2855
    %3109 = vmatpush.msra.mxu0 %v2851
    %3110 = vmatpush.msra.mxu0 %v2847
    %3111 = vmatpush.msra.mxu0 %v2843
    %3112 = vmatpush.msra.mxu0 %v2839
    %3113 = vmatmul.f32.gmra.mxu0 %v3044
    %v3114 = vpop.f32.mrf.mxu0
    %v3115 = vadd.f32 0.0, %v3114
    %3116 = vdwg.mxu0
    %3117 = vmatpush.msra.mxu0 %v2900
    %3118 = vmatpush.msra.mxu0 %v2896
    %3119 = vmatpush.msra.mxu0 %v2892
    %3120 = vmatpush.msra.mxu0 %v2888
    %3121 = vmatpush.msra.mxu0 %v2884
    %3122 = vmatpush.msra.mxu0 %v2880
    %3123 = vmatpush.msra.mxu0 %v2876
    %3124 = vmatpush.msra.mxu0 %v2872
    %3125 = vmatpush.msra.mxu0 %v2868
    %3126 = vmatpush.msra.mxu0 %v2864
    %3127 = vmatpush.msra.mxu0 %v2860
    %3128 = vmatpush.msra.mxu0 %v2856
    %3129 = vmatpush.msra.mxu0 %v2852
    %3130 = vmatpush.msra.mxu0 %v2848
    %3131 = vmatpush.msra.mxu0 %v2844
    %3132 = vmatpush.msra.mxu0 %v2840
    %3133 = vmatmul.f32.gmra.mxu0 %v3044
    %v3134 = vpop.f32.mrf.mxu0
    %v3135 = vadd.f32 0.0, %v3134
    %3136 = vdwg.mxu0
    %v3137 = vadd.f32 %v3053, %v3075
    %v3138 = vadd.f32 %v3054, %v3095
    %v3139 = vadd.f32 %v3055, %v3115
    %v3140 = vadd.f32 %v3056, %v3135
    %v3141 = vmul.f32 %v3137, 0.5
    %v3142 = vmul.f32 %v3138, 0.5
    %v3143 = vmul.f32 %v3139, 0.5
    %v3144 = vtanh.pop %v3141
    %v3145 = vtanh.pop %v3142
    %v3146 = vtanh.pop %v3143
    %v3147 = vmul.f32 %v3144, 0.5
    %v3148 = vmul.f32 %v3145, 0.5
    %v3149 = vmul.f32 %v3146, 0.5
    %v3150 = vadd.f32 %v3147, 0.5
    %v3151 = vadd.f32 %v3148, 0.5
    %v3152 = vadd.f32 %v3149, 0.5
    %v3153 = vtanh.pop %v3140
    %v3154 = vmul.f32 %v3151, %v3042
    %v3155 = vmul.f32 %v3150, %v3153
    %v3156 = vadd.f32 %v3154, %v3155
    %v3157 = vtanh.pop %v3156
    %v3158 = vmul.f32 %v3152, %v3157
    %v3159 = vld [vmem:[%s787] sm:$0xff]
    %v3160 = vld [vmem:[%s787 + $0x8] sm:$0xff]
    %v3161 = vld [vmem:[%s787 + $0x10] sm:$0xff]
    %v3162 = vld [vmem:[%s787 + $0x18] sm:$0xff]
    %v3163 = vld [vmem:[%s794] sm:$0xff]
    %v3164 = vld [vmem:[%s794 + $0x8] sm:$0xff]
    %v3165 = vld [vmem:[%s794 + $0x10] sm:$0xff]
    %v3166 = vld [vmem:[%s794 + $0x18] sm:$0xff]
    %v3167 = vsel %vm172, %v3159, %v3163
    %v3168 = vsel %vm173, %v3160, %v3164
    %v3169 = vsel %vm174, %v3161, %v3165
    %v3170 = vsel %vm175, %v3162, %v3166
    %3171 = vmatpush.msra.mxu0 %v2897
    %3172 = vmatpush.msra.mxu0 %v2893
    %3173 = vmatpush.msra.mxu0 %v2889
    %3174 = vmatpush.msra.mxu0 %v2885
    %3175 = vmatpush.msra.mxu0 %v2881
    %3176 = vmatpush.msra.mxu0 %v2877
    %3177 = vmatpush.msra.mxu0 %v2873
    %3178 = vmatpush.msra.mxu0 %v2869
    %3179 = vmatpush.msra.mxu0 %v2865
    %3180 = vmatpush.msra.mxu0 %v2861
    %3181 = vmatpush.msra.mxu0 %v2857
    %3182 = vmatpush.msra.mxu0 %v2853
    %3183 = vmatpush.msra.mxu0 %v2849
    %3184 = vmatpush.msra.mxu0 %v2845
    %3185 = vmatpush.msra.mxu0 %v2841
    %3186 = vmatpush.msra.mxu0 %v2837
    %3187 = vmatmul.f32.gmra.mxu0 %v3158
    %v3188 = vpop.f32.mrf.mxu0
    %v3189 = vadd.f32 0.0, %v3188
    %3190 = vdwg.mxu0
    %3191 = vmatpush.msra.mxu0 %v2898
    %3192 = vmatpush.msra.mxu0 %v2894
    %3193 = vmatpush.msra.mxu0 %v2890
    %3194 = vmatpush.msra.mxu0 %v2886
    %3195 = vmatpush.msra.mxu0 %v2882
    %3196 = vmatpush.msra.mxu0 %v2878
    %3197 = vmatpush.msra.mxu0 %v2874
    %3198 = vmatpush.msra.mxu0 %v2870
    %3199 = vmatpush.msra.mxu0 %v2866
    %3200 = vmatpush.msra.mxu0 %v2862
    %3201 = vmatpush.msra.mxu0 %v2858
    %3202 = vmatpush.msra.mxu0 %v2854
    %3203 = vmatpush.msra.mxu0 %v2850
    %3204 = vmatpush.msra.mxu0 %v2846
    %3205 = vmatpush.msra.mxu0 %v2842
    %3206 = vmatpush.msra.mxu0 %v2838
    %3207 = vmatmul.f32.gmra.mxu0 %v3158
    %v3208 = vpop.f32.mrf.mxu0
    %v3209 = vadd.f32 0.0, %v3208
    %3210 = vdwg.mxu0
    %3211 = vmatpush.msra.mxu0 %v2899
    %3212 = vmatpush.msra.mxu0 %v2895
    %3213 = vmatpush.msra.mxu0 %v2891
    %3214 = vmatpush.msra.mxu0 %v2887
    %3215 = vmatpush.msra.mxu0 %v2883
    %3216 = vmatpush.msra.mxu0 %v2879
    %3217 = vmatpush.msra.mxu0 %v2875
    %3218 = vmatpush.msra.mxu0 %v2871
    %3219 = vmatpush.msra.mxu0 %v2867
    %3220 = vmatpush.msra.mxu0 %v2863
    %3221 = vmatpush.msra.mxu0 %v2859
    %3222 = vmatpush.msra.mxu0 %v2855
    %3223 = vmatpush.msra.mxu0 %v2851
    %3224 = vmatpush.msra.mxu0 %v2847
    %3225 = vmatpush.msra.mxu0 %v2843
    %3226 = vmatpush.msra.mxu0 %v2839
    %3227 = vmatmul.f32.gmra.mxu0 %v3158
    %v3228 = vpop.f32.mrf.mxu0
    %v3229 = vadd.f32 0.0, %v3228
    %3230 = vdwg.mxu0
    %3231 = vmatpush.msra.mxu0 %v2900
    %3232 = vmatpush.msra.mxu0 %v2896
    %3233 = vmatpush.msra.mxu0 %v2892
    %3234 = vmatpush.msra.mxu0 %v2888
    %3235 = vmatpush.msra.mxu0 %v2884
    %3236 = vmatpush.msra.mxu0 %v2880
    %3237 = vmatpush.msra.mxu0 %v2876
    %3238 = vmatpush.msra.mxu0 %v2872
    %3239 = vmatpush.msra.mxu0 %v2868
    %3240 = vmatpush.msra.mxu0 %v2864
    %3241 = vmatpush.msra.mxu0 %v2860
    %3242 = vmatpush.msra.mxu0 %v2856
    %3243 = vmatpush.msra.mxu0 %v2852
    %3244 = vmatpush.msra.mxu0 %v2848
    %3245 = vmatpush.msra.mxu0 %v2844
    %3246 = vmatpush.msra.mxu0 %v2840
    %3247 = vmatmul.f32.gmra.mxu0 %v3158
    %v3248 = vpop.f32.mrf.mxu0
    %v3249 = vadd.f32 0.0, %v3248
    %3250 = vdwg.mxu0
    %v3251 = vadd.f32 %v3167, %v3189
    %v3252 = vadd.f32 %v3168, %v3209
    %v3253 = vadd.f32 %v3169, %v3229
    %v3254 = vadd.f32 %v3170, %v3249
    %v3255 = vmul.f32 %v3251, 0.5
    %v3256 = vmul.f32 %v3252, 0.5
    %v3257 = vmul.f32 %v3253, 0.5
    %v3258 = vtanh.pop %v3255
    %v3259 = vtanh.pop %v3256
    %v3260 = vtanh.pop %v3257
    %v3261 = vmul.f32 %v3258, 0.5
    %v3262 = vmul.f32 %v3259, 0.5
    %v3263 = vmul.f32 %v3260, 0.5
    %v3264 = vadd.f32 %v3261, 0.5
    %v3265 = vadd.f32 %v3262, 0.5
    %v3266 = vadd.f32 %v3263, 0.5
    %v3267 = vtanh.pop %v3254
    %v3268 = vmul.f32 %v3265, %v3156
    %v3269 = vmul.f32 %v3264, %v3267
    %v3270 = vadd.f32 %v3268, %v3269
    %v3271 = vtanh.pop %v3270
    %v3272 = vmul.f32 %v3266, %v3271
    %v3273 = vsel %vm172, %v3163, %v3159
    %v3274 = vsel %vm173, %v3164, %v3160
    %v3275 = vsel %vm174, %v3165, %v3161
    %v3276 = vsel %vm175, %v3166, %v3162
    %3277 = vmatpush.msra.mxu0 %v2897
    %3278 = vmatpush.msra.mxu0 %v2893
    %3279 = vmatpush.msra.mxu0 %v2889
    %3280 = vmatpush.msra.mxu0 %v2885
    %3281 = vmatpush.msra.mxu0 %v2881
    %3282 = vmatpush.msra.mxu0 %v2877
    %3283 = vmatpush.msra.mxu0 %v2873
    %3284 = vmatpush.msra.mxu0 %v2869
    %3285 = vmatpush.msra.mxu0 %v2865
    %3286 = vmatpush.msra.mxu0 %v2861
    %3287 = vmatpush.msra.mxu0 %v2857
    %3288 = vmatpush.msra.mxu0 %v2853
    %3289 = vmatpush.msra.mxu0 %v2849
    %3290 = vmatpush.msra.mxu0 %v2845
    %3291 = vmatpush.msra.mxu0 %v2841
    %3292 = vmatpush.msra.mxu0 %v2837
    %3293 = vmatmul.f32.gmra.mxu0 %v3272
    %v3294 = vpop.f32.mrf.mxu0
    %v3295 = vadd.f32 0.0, %v3294
    %3296 = vdwg.mxu0
    %3297 = vmatpush.msra.mxu0 %v2898
    %3298 = vmatpush.msra.mxu0 %v2894
    %3299 = vmatpush.msra.mxu0 %v2890
    %3300 = vmatpush.msra.mxu0 %v2886
    %3301 = vmatpush.msra.mxu0 %v2882
    %3302 = vmatpush.msra.mxu0 %v2878
    %3303 = vmatpush.msra.mxu0 %v2874
    %3304 = vmatpush.msra.mxu0 %v2870
    %3305 = vmatpush.msra.mxu0 %v2866
    %3306 = vmatpush.msra.mxu0 %v2862
    %3307 = vmatpush.msra.mxu0 %v2858
    %3308 = vmatpush.msra.mxu0 %v2854
    %3309 = vmatpush.msra.mxu0 %v2850
    %3310 = vmatpush.msra.mxu0 %v2846
    %3311 = vmatpush.msra.mxu0 %v2842
    %3312 = vmatpush.msra.mxu0 %v2838
    %3313 = vmatmul.f32.gmra.mxu0 %v3272
    %v3314 = vpop.f32.mrf.mxu0
    %v3315 = vadd.f32 0.0, %v3314
    %3316 = vdwg.mxu0
    %3317 = vmatpush.msra.mxu0 %v2899
    %3318 = vmatpush.msra.mxu0 %v2895
    %3319 = vmatpush.msra.mxu0 %v2891
    %3320 = vmatpush.msra.mxu0 %v2887
    %3321 = vmatpush.msra.mxu0 %v2883
    %3322 = vmatpush.msra.mxu0 %v2879
    %3323 = vmatpush.msra.mxu0 %v2875
    %3324 = vmatpush.msra.mxu0 %v2871
    %3325 = vmatpush.msra.mxu0 %v2867
    %3326 = vmatpush.msra.mxu0 %v2863
    %3327 = vmatpush.msra.mxu0 %v2859
    %3328 = vmatpush.msra.mxu0 %v2855
    %3329 = vmatpush.msra.mxu0 %v2851
    %3330 = vmatpush.msra.mxu0 %v2847
    %3331 = vmatpush.msra.mxu0 %v2843
    %3332 = vmatpush.msra.mxu0 %v2839
    %3333 = vmatmul.f32.gmra.mxu0 %v3272
    %v3334 = vpop.f32.mrf.mxu0
    %v3335 = vadd.f32 0.0, %v3334
    %3336 = vdwg.mxu0
    %3337 = vmatpush.msra.mxu0 %v2900
    %3338 = vmatpush.msra.mxu0 %v2896
    %3339 = vmatpush.msra.mxu0 %v2892
    %3340 = vmatpush.msra.mxu0 %v2888
    %3341 = vmatpush.msra.mxu0 %v2884
    %3342 = vmatpush.msra.mxu0 %v2880
    %3343 = vmatpush.msra.mxu0 %v2876
    %3344 = vmatpush.msra.mxu0 %v2872
    %3345 = vmatpush.msra.mxu0 %v2868
    %3346 = vmatpush.msra.mxu0 %v2864
    %3347 = vmatpush.msra.mxu0 %v2860
    %3348 = vmatpush.msra.mxu0 %v2856
    %3349 = vmatpush.msra.mxu0 %v2852
    %3350 = vmatpush.msra.mxu0 %v2848
    %3351 = vmatpush.msra.mxu0 %v2844
    %3352 = vmatpush.msra.mxu0 %v2840
    %3353 = vmatmul.f32.gmra.mxu0 %v3272
    %v3354 = vpop.f32.mrf.mxu0
    %v3355 = vadd.f32 0.0, %v3354
    %3356 = vdwg.mxu0
    %v3357 = vadd.f32 %v3273, %v3295
    %v3358 = vadd.f32 %v3274, %v3315
    %v3359 = vadd.f32 %v3275, %v3335
    %v3360 = vadd.f32 %v3276, %v3355
    %v3361 = vmul.f32 %v3357, 0.5
    %v3362 = vmul.f32 %v3358, 0.5
    %v3363 = vmul.f32 %v3359, 0.5
    %v3364 = vtanh.pop %v3361
    %v3365 = vtanh.pop %v3362
    %v3366 = vtanh.pop %v3363
    %v3367 = vmul.f32 %v3364, 0.5
    %v3368 = vmul.f32 %v3365, 0.5
    %v3369 = vmul.f32 %v3366, 0.5
    %v3370 = vadd.f32 %v3367, 0.5
    %v3371 = vadd.f32 %v3368, 0.5
    %v3372 = vadd.f32 %v3369, 0.5
    %v3373 = vtanh.pop %v3360
    %v3374 = vmul.f32 %v3371, %v3270
    %v3375 = vmul.f32 %v3370, %v3373
    %v3376 = vadd.f32 %v3374, %v3375
    %v3377 = vtanh.pop %v3376
    %v3378 = vmul.f32 %v3372, %v3377
    %v3379 = vsel %vm172, %v3049, %v3045
    %v3380 = vsel %vm173, %v3050, %v3046
    %v3381 = vsel %vm174, %v3051, %v3047
    %v3382 = vsel %vm175, %v3052, %v3048
    %3383 = vmatpush.msra.mxu0 %v2897
    %3384 = vmatpush.msra.mxu0 %v2893
    %3385 = vmatpush.msra.mxu0 %v2889
    %3386 = vmatpush.msra.mxu0 %v2885
    %3387 = vmatpush.msra.mxu0 %v2881
    %3388 = vmatpush.msra.mxu0 %v2877
    %3389 = vmatpush.msra.mxu0 %v2873
    %3390 = vmatpush.msra.mxu0 %v2869
    %3391 = vmatpush.msra.mxu0 %v2865
    %3392 = vmatpush.msra.mxu0 %v2861
    %3393 = vmatpush.msra.mxu0 %v2857
    %3394 = vmatpush.msra.mxu0 %v2853
    %3395 = vmatpush.msra.mxu0 %v2849
    %3396 = vmatpush.msra.mxu0 %v2845
    %3397 = vmatpush.msra.mxu0 %v2841
    %3398 = vmatpush.msra.mxu0 %v2837
    %3399 = vmatmul.f32.gmra.mxu0 %v3378
    %v3400 = vpop.f32.mrf.mxu0
    %v3401 = vadd.f32 0.0, %v3400
    %3402 = vdwg.mxu0
    %3403 = vmatpush.msra.mxu0 %v2898
    %3404 = vmatpush.msra.mxu0 %v2894
    %3405 = vmatpush.msra.mxu0 %v2890
    %3406 = vmatpush.msra.mxu0 %v2886
    %3407 = vmatpush.msra.mxu0 %v2882
    %3408 = vmatpush.msra.mxu0 %v2878
    %3409 = vmatpush.msra.mxu0 %v2874
    %3410 = vmatpush.msra.mxu0 %v2870
    %3411 = vmatpush.msra.mxu0 %v2866
    %3412 = vmatpush.msra.mxu0 %v2862
    %3413 = vmatpush.msra.mxu0 %v2858
    %3414 = vmatpush.msra.mxu0 %v2854
    %3415 = vmatpush.msra.mxu0 %v2850
    %3416 = vmatpush.msra.mxu0 %v2846
    %3417 = vmatpush.msra.mxu0 %v2842
    %3418 = vmatpush.msra.mxu0 %v2838
    %3419 = vmatmul.f32.gmra.mxu0 %v3378
    %v3420 = vpop.f32.mrf.mxu0
    %v3421 = vadd.f32 0.0, %v3420
    %3422 = vdwg.mxu0
    %3423 = vmatpush.msra.mxu0 %v2899
    %3424 = vmatpush.msra.mxu0 %v2895
    %3425 = vmatpush.msra.mxu0 %v2891
    %3426 = vmatpush.msra.mxu0 %v2887
    %3427 = vmatpush.msra.mxu0 %v2883
    %3428 = vmatpush.msra.mxu0 %v2879
    %3429 = vmatpush.msra.mxu0 %v2875
    %3430 = vmatpush.msra.mxu0 %v2871
    %3431 = vmatpush.msra.mxu0 %v2867
    %3432 = vmatpush.msra.mxu0 %v2863
    %3433 = vmatpush.msra.mxu0 %v2859
    %3434 = vmatpush.msra.mxu0 %v2855
    %3435 = vmatpush.msra.mxu0 %v2851
    %3436 = vmatpush.msra.mxu0 %v2847
    %3437 = vmatpush.msra.mxu0 %v2843
    %3438 = vmatpush.msra.mxu0 %v2839
    %3439 = vmatmul.f32.gmra.mxu0 %v3378
    %v3440 = vpop.f32.mrf.mxu0
    %v3441 = vadd.f32 0.0, %v3440
    %3442 = vdwg.mxu0
    %3443 = vmatpush.msra.mxu0 %v2900
    %3444 = vmatpush.msra.mxu0 %v2896
    %3445 = vmatpush.msra.mxu0 %v2892
    %3446 = vmatpush.msra.mxu0 %v2888
    %3447 = vmatpush.msra.mxu0 %v2884
    %3448 = vmatpush.msra.mxu0 %v2880
    %3449 = vmatpush.msra.mxu0 %v2876
    %3450 = vmatpush.msra.mxu0 %v2872
    %3451 = vmatpush.msra.mxu0 %v2868
    %3452 = vmatpush.msra.mxu0 %v2864
    %3453 = vmatpush.msra.mxu0 %v2860
    %3454 = vmatpush.msra.mxu0 %v2856
    %3455 = vmatpush.msra.mxu0 %v2852
    %3456 = vmatpush.msra.mxu0 %v2848
    %3457 = vmatpush.msra.mxu0 %v2844
    %3458 = vmatpush.msra.mxu0 %v2840
    %3459 = vmatmul.f32.gmra.mxu0 %v3378
    %v3460 = vpop.f32.mrf.mxu0
    %v3461 = vadd.f32 0.0, %v3460
    %3462 = vdwg.mxu0
    %v3463 = vadd.f32 %v3379, %v3401
    %v3464 = vadd.f32 %v3380, %v3421
    %v3465 = vadd.f32 %v3381, %v3441
    %v3466 = vadd.f32 %v3382, %v3461
    %v3467 = vmul.f32 %v3463, 0.5
    %v3468 = vmul.f32 %v3464, 0.5
    %v3469 = vmul.f32 %v3465, 0.5
    %v3470 = vtanh.pop %v3467
    %v3471 = vtanh.pop %v3468
    %v3472 = vtanh.pop %v3469
    %v3473 = vmul.f32 %v3470, 0.5
    %v3474 = vmul.f32 %v3471, 0.5
    %v3475 = vmul.f32 %v3472, 0.5
    %v3476 = vadd.f32 %v3473, 0.5
    %v3477 = vadd.f32 %v3474, 0.5
    %v3478 = vadd.f32 %v3475, 0.5
    %v3479 = vtanh.pop %v3466
    %v3480 = vmul.f32 %v3477, %v3376
    %v3481 = vmul.f32 %v3476, %v3479
    %v3482 = vadd.f32 %v3480, %v3481
    %v3483 = vtanh.pop %v3482
    %v3484 = vmul.f32 %v3478, %v3483
    %v3485 = vsel %vm172, %v2935, %v2931
    %v3486 = vsel %vm173, %v2936, %v2932
    %v3487 = vsel %vm174, %v2937, %v2933
    %v3488 = vsel %vm175, %v2938, %v2934
    %3489 = vmatpush.msra.mxu0 %v2897
    %3490 = vmatpush.msra.mxu0 %v2893
    %3491 = vmatpush.msra.mxu0 %v2889
    %3492 = vmatpush.msra.mxu0 %v2885
    %3493 = vmatpush.msra.mxu0 %v2881
    %3494 = vmatpush.msra.mxu0 %v2877
    %3495 = vmatpush.msra.mxu0 %v2873
    %3496 = vmatpush.msra.mxu0 %v2869
    %3497 = vmatpush.msra.mxu0 %v2865
    %3498 = vmatpush.msra.mxu0 %v2861
    %3499 = vmatpush.msra.mxu0 %v2857
    %3500 = vmatpush.msra.mxu0 %v2853
    %3501 = vmatpush.msra.mxu0 %v2849
    %3502 = vmatpush.msra.mxu0 %v2845
    %3503 = vmatpush.msra.mxu0 %v2841
    %3504 = vmatpush.msra.mxu0 %v2837
    %3505 = vmatmul.f32.gmra.mxu0 %v3484
    %v3506 = vpop.f32.mrf.mxu0
    %v3507 = vadd.f32 0.0, %v3506
    %3508 = vdwg.mxu0
    %3509 = vmatpush.msra.mxu0 %v2898
    %3510 = vmatpush.msra.mxu0 %v2894
    %3511 = vmatpush.msra.mxu0 %v2890
    %3512 = vmatpush.msra.mxu0 %v2886
    %3513 = vmatpush.msra.mxu0 %v2882
    %3514 = vmatpush.msra.mxu0 %v2878
    %3515 = vmatpush.msra.mxu0 %v2874
    %3516 = vmatpush.msra.mxu0 %v2870
    %3517 = vmatpush.msra.mxu0 %v2866
    %3518 = vmatpush.msra.mxu0 %v2862
    %3519 = vmatpush.msra.mxu0 %v2858
    %3520 = vmatpush.msra.mxu0 %v2854
    %3521 = vmatpush.msra.mxu0 %v2850
    %3522 = vmatpush.msra.mxu0 %v2846
    %3523 = vmatpush.msra.mxu0 %v2842
    %3524 = vmatpush.msra.mxu0 %v2838
    %3525 = vmatmul.f32.gmra.mxu0 %v3484
    %v3526 = vpop.f32.mrf.mxu0
    %v3527 = vadd.f32 0.0, %v3526
    %3528 = vdwg.mxu0
    %3529 = vmatpush.msra.mxu0 %v2899
    %3530 = vmatpush.msra.mxu0 %v2895
    %3531 = vmatpush.msra.mxu0 %v2891
    %3532 = vmatpush.msra.mxu0 %v2887
    %3533 = vmatpush.msra.mxu0 %v2883
    %3534 = vmatpush.msra.mxu0 %v2879
    %3535 = vmatpush.msra.mxu0 %v2875
    %3536 = vmatpush.msra.mxu0 %v2871
    %3537 = vmatpush.msra.mxu0 %v2867
    %3538 = vmatpush.msra.mxu0 %v2863
    %3539 = vmatpush.msra.mxu0 %v2859
    %3540 = vmatpush.msra.mxu0 %v2855
    %3541 = vmatpush.msra.mxu0 %v2851
    %3542 = vmatpush.msra.mxu0 %v2847
    %3543 = vmatpush.msra.mxu0 %v2843
    %3544 = vmatpush.msra.mxu0 %v2839
    %3545 = vmatmul.f32.gmra.mxu0 %v3484
    %v3546 = vpop.f32.mrf.mxu0
    %v3547 = vadd.f32 0.0, %v3546
    %3548 = vdwg.mxu0
    %3549 = vmatpush.msra.mxu0 %v2900
    %3550 = vmatpush.msra.mxu0 %v2896
    %3551 = vmatpush.msra.mxu0 %v2892
    %3552 = vmatpush.msra.mxu0 %v2888
    %3553 = vmatpush.msra.mxu0 %v2884
    %3554 = vmatpush.msra.mxu0 %v2880
    %3555 = vmatpush.msra.mxu0 %v2876
    %3556 = vmatpush.msra.mxu0 %v2872
    %3557 = vmatpush.msra.mxu0 %v2868
    %3558 = vmatpush.msra.mxu0 %v2864
    %3559 = vmatpush.msra.mxu0 %v2860
    %3560 = vmatpush.msra.mxu0 %v2856
    %3561 = vmatpush.msra.mxu0 %v2852
    %3562 = vmatpush.msra.mxu0 %v2848
    %3563 = vmatpush.msra.mxu0 %v2844
    %3564 = vmatpush.msra.mxu0 %v2840
    %3565 = vmatmul.f32.gmra.mxu0 %v3484
    %v3566 = vpop.f32.mrf.mxu0
    %v3567 = vadd.f32 0.0, %v3566
    %3568 = vdwg.mxu0
    %v3569 = vadd.f32 %v3485, %v3507
    %v3570 = vadd.f32 %v3486, %v3527
    %v3571 = vadd.f32 %v3487, %v3547
    %v3572 = vadd.f32 %v3488, %v3567
    %v3573 = vmul.f32 %v3569, 0.5
    %v3574 = vmul.f32 %v3570, 0.5
    %v3575 = vmul.f32 %v3571, 0.5
    %v3576 = vtanh.pop %v3573
    %v3577 = vtanh.pop %v3574
    %v3578 = vtanh.pop %v3575
    %v3579 = vmul.f32 %v3576, 0.5
    %v3580 = vmul.f32 %v3577, 0.5
    %v3581 = vmul.f32 %v3578, 0.5
    %v3582 = vadd.f32 %v3579, 0.5
    %v3583 = vadd.f32 %v3580, 0.5
    %v3584 = vadd.f32 %v3581, 0.5
    %v3585 = vtanh.pop %v3572
    %v3586 = vmul.f32 %v3583, %v3482
    %v3587 = vmul.f32 %v3582, %v3585
    %v3588 = vadd.f32 %v3586, %v3587
    %v3589 = vtanh.pop %v3588
    %v3590 = vmul.f32 %v3584, %v3589
    %v3591 = vsel %vm172, %v2905, %v2901
    %v3592 = vsel %vm173, %v2906, %v2902
    %v3593 = vsel %vm174, %v2907, %v2903
    %v3594 = vsel %vm175, %v2908, %v2904
    %3595 = vmatpush.msra.mxu0 %v2897
    %3596 = vmatpush.msra.mxu0 %v2893
    %3597 = vmatpush.msra.mxu0 %v2889
    %3598 = vmatpush.msra.mxu0 %v2885
    %3599 = vmatpush.msra.mxu0 %v2881
    %3600 = vmatpush.msra.mxu0 %v2877
    %3601 = vmatpush.msra.mxu0 %v2873
    %3602 = vmatpush.msra.mxu0 %v2869
    %3603 = vmatpush.msra.mxu0 %v2865
    %3604 = vmatpush.msra.mxu0 %v2861
    %3605 = vmatpush.msra.mxu0 %v2857
    %3606 = vmatpush.msra.mxu0 %v2853
    %3607 = vmatpush.msra.mxu0 %v2849
    %3608 = vmatpush.msra.mxu0 %v2845
    %3609 = vmatpush.msra.mxu0 %v2841
    %3610 = vmatpush.msra.mxu0 %v2837
    %3611 = vmatmul.f32.gmra.mxu0 %v3590
    %v3612 = vpop.f32.mrf.mxu0
    %v3613 = vadd.f32 0.0, %v3612
    %3614 = vdwg.mxu0
    %3615 = vmatpush.msra.mxu0 %v2898
    %3616 = vmatpush.msra.mxu0 %v2894
    %3617 = vmatpush.msra.mxu0 %v2890
    %3618 = vmatpush.msra.mxu0 %v2886
    %3619 = vmatpush.msra.mxu0 %v2882
    %3620 = vmatpush.msra.mxu0 %v2878
    %3621 = vmatpush.msra.mxu0 %v2874
    %3622 = vmatpush.msra.mxu0 %v2870
    %3623 = vmatpush.msra.mxu0 %v2866
    %3624 = vmatpush.msra.mxu0 %v2862
    %3625 = vmatpush.msra.mxu0 %v2858
    %3626 = vmatpush.msra.mxu0 %v2854
    %3627 = vmatpush.msra.mxu0 %v2850
    %3628 = vmatpush.msra.mxu0 %v2846
    %3629 = vmatpush.msra.mxu0 %v2842
    %3630 = vmatpush.msra.mxu0 %v2838
    %3631 = vmatmul.f32.gmra.mxu0 %v3590
    %v3632 = vpop.f32.mrf.mxu0
    %v3633 = vadd.f32 0.0, %v3632
    %3634 = vdwg.mxu0
    %3635 = vmatpush.msra.mxu0 %v2899
    %3636 = vmatpush.msra.mxu0 %v2895
    %3637 = vmatpush.msra.mxu0 %v2891
    %3638 = vmatpush.msra.mxu0 %v2887
    %3639 = vmatpush.msra.mxu0 %v2883
    %3640 = vmatpush.msra.mxu0 %v2879
    %3641 = vmatpush.msra.mxu0 %v2875
    %3642 = vmatpush.msra.mxu0 %v2871
    %3643 = vmatpush.msra.mxu0 %v2867
    %3644 = vmatpush.msra.mxu0 %v2863
    %3645 = vmatpush.msra.mxu0 %v2859
    %3646 = vmatpush.msra.mxu0 %v2855
    %3647 = vmatpush.msra.mxu0 %v2851
    %3648 = vmatpush.msra.mxu0 %v2847
    %3649 = vmatpush.msra.mxu0 %v2843
    %3650 = vmatpush.msra.mxu0 %v2839
    %3651 = vmatmul.f32.gmra.mxu0 %v3590
    %v3652 = vpop.f32.mrf.mxu0
    %v3653 = vadd.f32 0.0, %v3652
    %3654 = vdwg.mxu0
    %3655 = vmatpush.msra.mxu0 %v2900
    %3656 = vmatpush.msra.mxu0 %v2896
    %3657 = vmatpush.msra.mxu0 %v2892
    %3658 = vmatpush.msra.mxu0 %v2888
    %3659 = vmatpush.msra.mxu0 %v2884
    %3660 = vmatpush.msra.mxu0 %v2880
    %3661 = vmatpush.msra.mxu0 %v2876
    %3662 = vmatpush.msra.mxu0 %v2872
    %3663 = vmatpush.msra.mxu0 %v2868
    %3664 = vmatpush.msra.mxu0 %v2864
    %3665 = vmatpush.msra.mxu0 %v2860
    %3666 = vmatpush.msra.mxu0 %v2856
    %3667 = vmatpush.msra.mxu0 %v2852
    %3668 = vmatpush.msra.mxu0 %v2848
    %3669 = vmatpush.msra.mxu0 %v2844
    %3670 = vmatpush.msra.mxu0 %v2840
    %3671 = vmatmul.f32.gmra.mxu0 %v3590
    %v3672 = vpop.f32.mrf.mxu0
    %v3673 = vadd.f32 0.0, %v3672
    %3674 = vdwg.mxu0
    %v3675 = vadd.f32 %v3591, %v3613
    %v3676 = vadd.f32 %v3592, %v3633
    %v3677 = vadd.f32 %v3593, %v3653
    %v3678 = vadd.f32 %v3594, %v3673
    %v3679 = vmul.f32 %v3675, 0.5
    %v3680 = vmul.f32 %v3676, 0.5
    %v3681 = vmul.f32 %v3677, 0.5
    %v3682 = vtanh.pop %v3679
    %v3683 = vtanh.pop %v3680
    %v3684 = vtanh.pop %v3681
    %v3685 = vmul.f32 %v3682, 0.5
    %v3686 = vmul.f32 %v3683, 0.5
    %v3687 = vmul.f32 %v3684, 0.5
    %v3688 = vadd.f32 %v3685, 0.5
    %v3689 = vadd.f32 %v3686, 0.5
    %v3690 = vadd.f32 %v3687, 0.5
    %v3691 = vtanh.pop %v3678
    %v3692 = vmul.f32 %v3689, %v3588
    %v3693 = vmul.f32 %v3688, %v3691
    %v3694 = vadd.f32 %v3692, %v3693
    %v3695 = vtanh.pop %v3694
    %v3696 = vmul.f32 %v3690, %v3695
    %v3697 = vsel %vm532, %v3696, %v2930
    %v3698 = vld [vmem:[%s10] sm:$0xff]
    %v3699 = vld [vmem:[%s10 + $0x8] sm:$0xff]
    %v3700 = vld [vmem:[%s10 + $0x10] sm:$0xff]
    %v3701 = vld [vmem:[%s10 + $0x18] sm:$0xff]
    %v3702 = vld [vmem:[%s10 + $0x20] sm:$0xff]
    %v3703 = vld [vmem:[%s10 + $0x28] sm:$0xff]
    %v3704 = vld [vmem:[%s10 + $0x30] sm:$0xff]
    %v3705 = vld [vmem:[%s10 + $0x38] sm:$0xff]
    %v3706 = vld [vmem:[%s10 + $0x40] sm:$0xff]
    %v3707 = vld [vmem:[%s10 + $0x48] sm:$0xff]
    %v3708 = vld [vmem:[%s10 + $0x50] sm:$0xff]
    %v3709 = vld [vmem:[%s10 + $0x58] sm:$0xff]
    %v3710 = vld [vmem:[%s10 + $0x60] sm:$0xff]
    %v3711 = vld [vmem:[%s10 + $0x68] sm:$0xff]
    %v3712 = vld [vmem:[%s10 + $0x70] sm:$0xff]
    %v3713 = vld [vmem:[%s10 + $0x78] sm:$0xff]
    %v3714 = vld [vmem:[%s11] sm:$0x1]
    %v3716 = vperm.slane %v3714, 0
    %3718 = vmatpush.msra.mxu0 %v3713
    %3719 = vmatpush.msra.mxu0 %v3712
    %3720 = vmatpush.msra.mxu0 %v3711
    %3721 = vmatpush.msra.mxu0 %v3710
    %3722 = vmatpush.msra.mxu0 %v3709
    %3723 = vmatpush.msra.mxu0 %v3708
    %3724 = vmatpush.msra.mxu0 %v3707
    %3725 = vmatpush.msra.mxu0 %v3706
    %3726 = vmatpush.msra.mxu0 %v3705
    %3727 = vmatpush.msra.mxu0 %v3704
    %3728 = vmatpush.msra.mxu0 %v3703
    %3729 = vmatpush.msra.mxu0 %v3702
    %3730 = vmatpush.msra.mxu0 %v3701
    %3731 = vmatpush.msra.mxu0 %v3700
    %3732 = vmatpush.msra.mxu0 %v3699
    %3733 = vmatpush.msra.mxu0 %v3698
    %3734 = vmatmul.f32.gmra.mxu0 %v3697
    %v3735 = vpop.f32.mrf.mxu0
    %v3736 = vadd.f32 %v3716, %v3735
    %3737 = vdwg.mxu0
    %vm3738 = vcmask 15360
    %3739 = vst.msk [vmem:[%s12] sm:$0xff] %vm3738, %v3736
    // Predicated region
    $region70: #{solace_lstm_forward.1} parent=1 // pred_check
      _
    $region71: #{solace_lstm_forward.1} parent=1 // pred_check_branch
      %3741 = sbr.rel (0) target = $region73
    $region72: #{solace_lstm_forward.1} parent=1 // pred_region
      _
    $region73: #{solace_lstm_forward.1} parent=1 // pred_fallthru
      _
    // Predicated region
    $region74: #{solace_lstm_forward.1} parent=1 // pred_check
      _
    $region75: #{solace_lstm_forward.1} parent=1 // pred_check_branch
      %3743 = sbr.rel (0) target = $region77
    $region76: #{solace_lstm_forward.1} parent=1 // pred_region
      _
    $region77: #{solace_lstm_forward.1} parent=1 // pred_fallthru
      _
    %3744 = vsyncpa [#allocation5], 1
    %3745 = vsyncpa [#allocation7], 1
    %3746 = vsyncpa [#allocation10], 1

</llo_original>
